<compile_context>
chip_gen: v7x
topology: tpu7x:2x2x1
jax: 0.10.0
libtpu: 0.0.40
codegen_flags: <defaults>
</compile_context>

<pallas_src>
import jax
import jax.numpy as jnp
from jax import lax
from jax.experimental import pallas as pl
from jax.experimental.pallas import tpu as pltpu


# ----------------------------- Pallas kernels ------------------------------

def _conv_stack_max_kernel(x_ref, w1_ref, s1_ref, w2_ref, s2_ref, w3_ref, s3_ref,
                           o_ref, acc_ref):
    """Fused conv1/2/3 (+ folded BN, ReLU) and max-over-points.

    x_ref:   (BB, K, TN)  point tile in the original Conv1d (channels-first)
                          layout; the K contraction below fuses the transpose.
    o_ref:   (BB, 1024)   output block, resident across the point-tile grid axis
    acc_ref: (BB, 1024)   f32 running-max scratch
    """
    j = pl.program_id(1)

    @pl.when(j == 0)
    def _():
        acc_ref[...] = jnp.full(acc_ref.shape, -jnp.inf, jnp.float32)

    w1 = w1_ref[...]        # bf16 folded weights
    w2 = w2_ref[...]
    w3 = w3_ref[...]
    s1 = s1_ref[...]        # f32 folded shifts
    s2 = s2_ref[...]
    s3 = s3_ref[...]

    # Static unroll over the (small) batch block.
    for b in range(x_ref.shape[0]):
        xb = x_ref[b].astype(jnp.bfloat16)                       # (K, TN)
        # conv1: contract K (lhs dim 0) -> (TN, 64).  This *is* the fused
        # (B,K,N)->(B,N,K) transpose: no HBM re-layout of the input.
        h = lax.dot_general(xb, w1, (((0,), (0,)), ((), ())),
                            preferred_element_type=jnp.float32)
        h = jnp.maximum(h + s1, 0.0)                             # f32 epilogue
        h = jnp.dot(h.astype(jnp.bfloat16), w2,
                    preferred_element_type=jnp.float32)
        h = jnp.maximum(h + s2, 0.0)
        h = jnp.dot(h.astype(jnp.bfloat16), w3,
                    preferred_element_type=jnp.float32)
        h = jnp.maximum(h + s3, 0.0)
        part = jnp.max(h, axis=0, keepdims=True)                 # (1, 1024) f32
        acc_ref[b:b + 1, :] = jnp.maximum(acc_ref[b:b + 1, :], part)

    @pl.when(j == pl.num_programs(1) - 1)
    def _():
        o_ref[...] = acc_ref[...]


def _fc_head_kernel(g_ref, w1_ref, s1_ref, w2_ref, s2_ref, w3_ref, s3_ref, o_ref):
    """Fused fc1/fc2 (+ folded BN, ReLU) and fc3 (+ folded bias + identity)."""
    h = jnp.maximum(
        jnp.dot(g_ref[...], w1_ref[...], preferred_element_type=jnp.float32)
        + s1_ref[...], 0.0)
    h = jnp.maximum(
        jnp.dot(h, w2_ref[...], preferred_element_type=jnp.float32) + s2_ref[...], 0.0)
    o_ref[...] = (
        jnp.dot(h, w3_ref[...], preferred_element_type=jnp.float32) + s3_ref[...])


# ------------------------------ kernel wrappers ------------------------------

def conv_stack_max(x_ckn, conv_params, *, tn=1024, bb=None):
    """x_ckn: (B, K, N) in Conv1d layout -> global feature (B, 1024).

    The channels-first -> channels-last transpose is fused into the kernel
    (blocks loaded as (BB, K, TN), K contracted directly on the MXU).
    """
    B, K, N = x_ckn.shape
    TN = min(N, tn)
    # TODO(synk): ragged N (padding) would need -inf masking of padded points
    #             before the max; only exact tiling is supported here.
    assert N % TN == 0 and (TN % 128 == 0 or TN == N), (N, TN)

    if bb is None:
        # Batch block: 8 rows -> unmasked 8-sublane output stores & 8x fewer grid
        # steps.  Prefer 2-4 on v7x (64 MiB VMEM) with large TN.
        bb = B if B <= 8 else next((d for d in (8, 4, 2) if B % d == 0), 1)
    assert B % bb == 0, (B, bb)

    (w1, s1), (w2, s2), (w3, s3) = conv_params
    C1, C2, C3 = w1.shape[1], w2.shape[1], w3.shape[1]

    return pl.pallas_call(
        _conv_stack_max_kernel,
        out_shape=jax.ShapeDtypeStruct((B, C3), jnp.float32),
        grid=(B // bb, N // TN),
        in_specs=[
            pl.BlockSpec((bb, K, TN), lambda b, j: (b, 0, j)),   # original layout
            pl.BlockSpec((K, C1), lambda b, j: (0, 0)),
            pl.BlockSpec((1, C1), lambda b, j: (0, 0)),
            pl.BlockSpec((C1, C2), lambda b, j: (0, 0)),
            pl.BlockSpec((1, C2), lambda b, j: (0, 0)),
            pl.BlockSpec((C2, C3), lambda b, j: (0, 0)),
            pl.BlockSpec((1, C3), lambda b, j: (0, 0)),
        ],
        out_specs=pl.BlockSpec((bb, C3), lambda b, j: (b, 0)),
        scratch_shapes=[pltpu.VMEM((bb, C3), jnp.float32)],
        compiler_params=pltpu.CompilerParams(
            dimension_semantics=("parallel", "arbitrary"),
            # 48 MiB fits v7x's 64 MiB part; raise toward 64 MiB on v5e/v6e
            # (128 MiB physical) when using TN=2048 / bb=8.
            vmem_limit_bytes=48 * 1024 * 1024,
        ),
    )(x_ckn, w1, s1, w2, s2, w3, s3)


def fc_head(g, fc_params):
    """g: (B, 1024) -> (B, k*k) with identity already folded into fc3's shift."""
    B, Cin = g.shape
    (w1, s1), (w2, s2), (w3, s3) = fc_params
    C1, C2, C3 = w1.shape[1], w2.shape[1], w3.shape[1]

    return pl.pallas_call(
        _fc_head_kernel,
        out_shape=jax.ShapeDtypeStruct((B, C3), jnp.float32),
        grid=(1,),
        in_specs=[
            pl.BlockSpec((B, Cin), lambda i: (0, 0)),
            pl.BlockSpec((Cin, C1), lambda i: (0, 0)),
            pl.BlockSpec((1, C1), lambda i: (0, 0)),
            pl.BlockSpec((C1, C2), lambda i: (0, 0)),
            pl.BlockSpec((1, C2), lambda i: (0, 0)),
            pl.BlockSpec((C2, C3), lambda i: (0, 0)),
            pl.BlockSpec((1, C3), lambda i: (0, 0)),
        ],
        out_specs=pl.BlockSpec((B, C3), lambda i: (0, 0)),
        compiler_params=pltpu.CompilerParams(
            dimension_semantics=("arbitrary",),
            # ~6.8 MiB of f32 weights, double-buffered -> comfortably under 24 MiB.
            vmem_limit_bytes=24 * 1024 * 1024,
        ),
    )(g, w1, s1, w2, s2, w3, s3)


# ------------------------- deterministic parameters -------------------------

def _lin_params(key, cin, cout):
    kw, kb = jax.random.split(key)
    w = jax.random.normal(kw, (cin, cout), jnp.float32) / jnp.sqrt(float(cin))
    b = 0.01 * jax.random.normal(kb, (cout,), jnp.float32)
    return w, b


def _bn_params(key, c, eps=1e-5):
    k1, k2, k3, k4 = jax.random.split(key, 4)
    gamma = 1.0 + 0.1 * jax.random.normal(k1, (c,), jnp.float32)
    beta = 0.1 * jax.random.normal(k2, (c,), jnp.float32)
    rmean = 0.1 * jax.random.normal(k3, (c,), jnp.float32)
    rvar = 1.0 + 0.1 * jax.random.uniform(k4, (c,), jnp.float32)
    scale = gamma / jnp.sqrt(rvar + eps)
    shift = beta - rmean * scale
    return scale, shift


def make_stnkd_params(key, k=64):
    """Raw parameters mirroring STNkd(k): convs 64,128,1024 + FCs 512,256,k^2."""
    keys = jax.random.split(key, 11)
    p = {"k": k}
    conv_dims = [(k, 64), (64, 128), (128, 1024)]
    for i, (a, b) in enumerate(conv_dims):
        p[f"conv{i + 1}"] = _lin_params(keys[i], a, b)
        p[f"bn{i + 1}"] = _bn_params(keys[3 + i], b)
    p["fc1"] = _lin_params(keys[6], 1024, 512)
    p["fc2"] = _lin_params(keys[7], 512, 256)
    p["fc3"] = _lin_params(keys[8], 256, k * k)
    p["bn4"] = _bn_params(keys[9], 512)
    p["bn5"] = _bn_params(keys[10], 256)
    return p


def fold_stnkd_params(p):
    """Fold eval-mode BN into weights (w*scale, b*scale+shift) and '+I' into fc3.

    Conv weights are stored in bf16 (MXU-native); shifts stay f32.
    """
    k = p["k"]

    def fold(lin, bn, w_dtype=jnp.float32):
        w, b = lin
        scale, shift = bn
        wf = (w * scale[None, :]).astype(w_dtype)
        sf = (b * scale + shift).reshape(1, -1).astype(jnp.float32)
        return wf, sf

    conv = (fold(p["conv1"], p["bn1"], jnp.bfloat16),
            fold(p["conv2"], p["bn2"], jnp.bfloat16),
            fold(p["conv3"], p["bn3"], jnp.bfloat16))
    w3, b3 = p["fc3"]
    iden = jnp.eye(k, dtype=jnp.float32).reshape(-1)
    fc = (fold(p["fc1"], p["bn4"]),
          fold(p["fc2"], p["bn5"]),
          (w3, (b3 + iden).reshape(1, -1)))
    return {"k": k, "conv": conv, "fc": fc}


# ------------------------------ forward passes ------------------------------

def stnkd_forward(folded, x_ckn, *, tn=1024):
    """STNkd forward.  x_ckn: (B, k, N) as in torch Conv1d layout -> (B, k, k).

    No host-level transpose: the layout change is fused into the conv kernel.
    """
    B = x_ckn.shape[0]
    g = conv_stack_max(x_ckn, folded["conv"], tn=tn)   # (B, 1024)
    t = fc_head(g, folded["fc"])                       # (B, k*k)
    return t.reshape(B, folded["k"], folded["k"])


def stnkd_reference(p, x_ckn):
    """Pure-JAX f32 reference using the un-folded (w, b, BN scale/shift) params."""
    k = p["k"]
    x = jnp.transpose(x_ckn, (0, 2, 1))               # (B, N, k)

    def lin_bn(h, lin, bn, relu=True):
        w, b = lin
        y = h @ w + b
        if bn is not None:
            s, t = bn
            y = y * s + t
        return jnp.maximum(y, 0.0) if relu else y

    h = lin_bn(x, p["conv1"], p["bn1"])
    h = lin_bn(h, p["conv2"], p["bn2"])
    h = lin_bn(h, p["conv3"], p["bn3"])
    g = jnp.max(h, axis=1)                            # torch.max(x, 2)[0]
    g = lin_bn(g, p["fc1"], p["bn4"])
    g = lin_bn(g, p["fc2"], p["bn5"])
    out = lin_bn(g, p["fc3"], None, relu=False)
    out = out + jnp.eye(k, dtype=jnp.float32).reshape(1, -1)
    return out.reshape(-1, k, k)


# ----------------------------------- main -----------------------------------

if __name__ == "__main__":
    key = jax.random.PRNGKey(0)
    kp, kx = jax.random.split(key)

    B, K, N = 2, 64, 256               # batch, k (STNkd default), points

    params = make_stnkd_params(kp, k=K)
    folded = fold_stnkd_params(params)
    x = jax.random.normal(kx, (B, K, N), jnp.float32)   # (B, k, N) Conv1d layout

    # Small tn here to exercise the multi-step point reduction (grid axis 1 > 1)
    # at test scale; the production default is tn=1024 (2048 on v5e/v6e).
    out = jax.block_until_ready(stnkd_forward(folded, x, tn=128))
    ref = jax.block_until_ready(stnkd_reference(params, x))

    assert out.shape == (B, K, K), out.shape
    assert bool(jnp.all(jnp.isfinite(out)))
    rel_err = float(jnp.max(jnp.abs(out - ref)) / (jnp.max(jnp.abs(ref)) + 1e-6))
    assert rel_err < 5e-2, rel_err     # bf16 matmuls vs f32 reference
    print("KERNEL_OK")
</pallas_src>

<mosaic_0001>
module attributes {stable_mosaic.version = 11 : i64} {
  func.func @_conv_stack_max_kernel(%arg0: i32, %arg1: i32, %arg2: memref<2x64x128xf32, #tpu.memory_space<vmem>>, %arg3: memref<64x64xbf16, #tpu.memory_space<vmem>>, %arg4: memref<1x64xf32, #tpu.memory_space<vmem>>, %arg5: memref<64x128xbf16, #tpu.memory_space<vmem>>, %arg6: memref<1x128xf32, #tpu.memory_space<vmem>>, %arg7: memref<128x1024xbf16, #tpu.memory_space<vmem>>, %arg8: memref<1x1024xf32, #tpu.memory_space<vmem>>, %arg9: memref<2x1024xf32, #tpu.memory_space<vmem>>, %arg10: memref<2x1024xf32, #tpu.memory_space<vmem>>) attributes {dimension_semantics = [#tpu.dimension_semantics<parallel>, #tpu.dimension_semantics<arbitrary>], iteration_bounds = array<i64: 1, 2>, scalar_prefetch = 0 : i64, scratch_operands = 1 : i64, tpu.core_type = #tpu.core_type<tc>, window_params = [{transform_indices = @transform_0, window_bounds = array<i64: 2, 64, 128>}, {pipeline_mode = #tpu.pipeline_mode<synchronous>, transform_indices = @transform_1, window_bounds = array<i64: 64, 64>}, {pipeline_mode = #tpu.pipeline_mode<synchronous>, transform_indices = @transform_2, window_bounds = array<i64: 1, 64>}, {pipeline_mode = #tpu.pipeline_mode<synchronous>, transform_indices = @transform_3, window_bounds = array<i64: 64, 128>}, {pipeline_mode = #tpu.pipeline_mode<synchronous>, transform_indices = @transform_4, window_bounds = array<i64: 1, 128>}, {pipeline_mode = #tpu.pipeline_mode<synchronous>, transform_indices = @transform_5, window_bounds = array<i64: 128, 1024>}, {pipeline_mode = #tpu.pipeline_mode<synchronous>, transform_indices = @transform_6, window_bounds = array<i64: 1, 1024>}, {transform_indices = @transform_7, window_bounds = array<i64: 2, 1024>}]} {
    %c0_i32 = arith.constant 0 : i32
    %0 = arith.cmpi eq, %arg1, %c0_i32 : i32
    %1 = arith.extui %0 : i1 to i32
    %c0_i32_0 = arith.constant 0 : i32
    %2 = arith.cmpi ne, %1, %c0_i32_0 : i32
    scf.if %2 {
      %cst_39 = arith.constant 0xFF800000 : f32
      %62 = vector.broadcast %cst_39 : f32 to vector<2x1024xf32>
      %c0_40 = arith.constant 0 : index
      %c0_41 = arith.constant 0 : index
      %63 = vector.load %arg10[%c0_40, %c0_41] : memref<2x1024xf32, #tpu.memory_space<vmem>>, vector<2x1024xf32>
      tpu.vector_store %arg10[%c0_40, %c0_41], %62 {strides = array<i32>} : memref<2x1024xf32, #tpu.memory_space<vmem>>, vector<2x1024xf32>,
    } else {
    }
    %c0 = arith.constant 0 : index
    %c0_1 = arith.constant 0 : index
    %3 = vector.load %arg3[%c0, %c0_1] : memref<64x64xbf16, #tpu.memory_space<vmem>>, vector<64x64xbf16>
    %c0_2 = arith.constant 0 : index
    %c0_3 = arith.constant 0 : index
    %4 = vector.load %arg5[%c0_2, %c0_3] : memref<64x128xbf16, #tpu.memory_space<vmem>>, vector<64x128xbf16>
    %c0_4 = arith.constant 0 : index
    %c0_5 = arith.constant 0 : index
    %5 = vector.load %arg7[%c0_4, %c0_5] : memref<128x1024xbf16, #tpu.memory_space<vmem>>, vector<128x1024xbf16>
    %c0_6 = arith.constant 0 : index
    %c0_7 = arith.constant 0 : index
    %6 = vector.load %arg4[%c0_6, %c0_7] : memref<1x64xf32, #tpu.memory_space<vmem>>, vector<1x64xf32>
    %c0_8 = arith.constant 0 : index
    %c0_9 = arith.constant 0 : index
    %7 = vector.load %arg6[%c0_8, %c0_9] : memref<1x128xf32, #tpu.memory_space<vmem>>, vector<1x128xf32>
    %c0_10 = arith.constant 0 : index
    %c0_11 = arith.constant 0 : index
    %8 = vector.load %arg8[%c0_10, %c0_11] : memref<1x1024xf32, #tpu.memory_space<vmem>>, vector<1x1024xf32>
    %c0_12 = arith.constant 0 : index
    %c0_13 = arith.constant 0 : index
    %c0_14 = arith.constant 0 : index
    %9 = vector.load %arg2[%c0_12, %c0_13, %c0_14] : memref<2x64x128xf32, #tpu.memory_space<vmem>>, vector<1x64x128xf32>
    %10 = vector.shape_cast %9 : vector<1x64x128xf32> to vector<64x128xf32>
    %11 = arith.truncf %10 : vector<64x128xf32> to vector<64x128xbf16>
    %cst = arith.constant dense<0.000000e+00> : vector<128x64xf32>
    %12 = tpu.matmul %11, %3, %cst {dimension_numbers = #tpu.dot_dimension_numbers<[0], [0], [1], [1], [0, 1, 1, 1], [], []>} : vector<64x128xbf16>, vector<64x64xbf16>, vector<128x64xf32> -> vector<128x64xf32>
    %13 = vector.broadcast %6 : vector<1x64xf32> to vector<128x64xf32>
    %14 = arith.addf %12, %13 : vector<128x64xf32>
    %cst_15 = arith.constant 0.000000e+00 : f32
    %15 = vector.broadcast %cst_15 : f32 to vector<128x64xf32>
    %16 = arith.maximumf %14, %15 : vector<128x64xf32>
    %17 = arith.truncf %16 : vector<128x64xf32> to vector<128x64xbf16>
    %cst_16 = arith.constant dense<0.000000e+00> : vector<128x128xf32>
    %18 = tpu.matmul %17, %4, %cst_16 {dimension_numbers = #tpu.dot_dimension_numbers<[1], [0], [0], [1], [0, 0, 1, 1], [], []>} : vector<128x64xbf16>, vector<64x128xbf16>, vector<128x128xf32> -> vector<128x128xf32>
    %19 = vector.broadcast %7 : vector<1x128xf32> to vector<128x128xf32>
    %20 = arith.addf %18, %19 : vector<128x128xf32>
    %cst_17 = arith.constant 0.000000e+00 : f32
    %21 = vector.broadcast %cst_17 : f32 to vector<128x128xf32>
    %22 = arith.maximumf %20, %21 : vector<128x128xf32>
    %23 = arith.truncf %22 : vector<128x128xf32> to vector<128x128xbf16>
    %cst_18 = arith.constant dense<0.000000e+00> : vector<128x1024xf32>
    %24 = tpu.matmul %23, %5, %cst_18 {dimension_numbers = #tpu.dot_dimension_numbers<[1], [0], [0], [1], [0, 0, 1, 1], [], []>} : vector<128x128xbf16>, vector<128x1024xbf16>, vector<128x1024xf32> -> vector<128x1024xf32>
    %25 = vector.broadcast %8 : vector<1x1024xf32> to vector<128x1024xf32>
    %26 = arith.addf %24, %25 : vector<128x1024xf32>
    %cst_19 = arith.constant 0.000000e+00 : f32
    %27 = vector.broadcast %cst_19 : f32 to vector<128x1024xf32>
    %28 = arith.maximumf %26, %27 : vector<128x1024xf32>
    %cst_20 = arith.constant dense<0xFF800000> : vector<1024xf32>
    %29 = vector.multi_reduction <maximumf>, %28, %cst_20 [0] : vector<128x1024xf32> to vector<1024xf32>
    %30 = vector.shape_cast %29 : vector<1024xf32> to vector<1x1024xf32>
    %c0_21 = arith.constant 0 : index
    %c0_22 = arith.constant 0 : index
    %31 = vector.load %arg10[%c0_21, %c0_22] : memref<2x1024xf32, #tpu.memory_space<vmem>>, vector<1x1024xf32>
    %32 = arith.maximumf %31, %30 : vector<1x1024xf32>
    %c0_23 = arith.constant 0 : index
    %c0_24 = arith.constant 0 : index
    %33 = vector.load %arg10[%c0_23, %c0_24] : memref<2x1024xf32, #tpu.memory_space<vmem>>, vector<1x1024xf32>
    tpu.vector_store %arg10[%c0_23, %c0_24], %32 {strides = array<i32>} : memref<2x1024xf32, #tpu.memory_space<vmem>>, vector<1x1024xf32>,
    %c1 = arith.constant 1 : index
    %c0_25 = arith.constant 0 : index
    %c0_26 = arith.constant 0 : index
    %34 = vector.load %arg2[%c1, %c0_25, %c0_26] : memref<2x64x128xf32, #tpu.memory_space<vmem>>, vector<1x64x128xf32>
    %35 = vector.shape_cast %34 : vector<1x64x128xf32> to vector<64x128xf32>
    %36 = arith.truncf %35 : vector<64x128xf32> to vector<64x128xbf16>
    %cst_27 = arith.constant dense<0.000000e+00> : vector<128x64xf32>
    %37 = tpu.matmul %36, %3, %cst_27 {dimension_numbers = #tpu.dot_dimension_numbers<[0], [0], [1], [1], [0, 1, 1, 1], [], []>} : vector<64x128xbf16>, vector<64x64xbf16>, vector<128x64xf32> -> vector<128x64xf32>
    %38 = vector.broadcast %6 : vector<1x64xf32> to vector<128x64xf32>
    %39 = arith.addf %37, %38 : vector<128x64xf32>
    %cst_28 = arith.constant 0.000000e+00 : f32
    %40 = vector.broadcast %cst_28 : f32 to vector<128x64xf32>
    %41 = arith.maximumf %39, %40 : vector<128x64xf32>
    %42 = arith.truncf %41 : vector<128x64xf32> to vector<128x64xbf16>
    %cst_29 = arith.constant dense<0.000000e+00> : vector<128x128xf32>
    %43 = tpu.matmul %42, %4, %cst_29 {dimension_numbers = #tpu.dot_dimension_numbers<[1], [0], [0], [1], [0, 0, 1, 1], [], []>} : vector<128x64xbf16>, vector<64x128xbf16>, vector<128x128xf32> -> vector<128x128xf32>
    %44 = vector.broadcast %7 : vector<1x128xf32> to vector<128x128xf32>
    %45 = arith.addf %43, %44 : vector<128x128xf32>
    %cst_30 = arith.constant 0.000000e+00 : f32
    %46 = vector.broadcast %cst_30 : f32 to vector<128x128xf32>
    %47 = arith.maximumf %45, %46 : vector<128x128xf32>
    %48 = arith.truncf %47 : vector<128x128xf32> to vector<128x128xbf16>
    %cst_31 = arith.constant dense<0.000000e+00> : vector<128x1024xf32>
    %49 = tpu.matmul %48, %5, %cst_31 {dimension_numbers = #tpu.dot_dimension_numbers<[1], [0], [0], [1], [0, 0, 1, 1], [], []>} : vector<128x128xbf16>, vector<128x1024xbf16>, vector<128x1024xf32> -> vector<128x1024xf32>
    %50 = vector.broadcast %8 : vector<1x1024xf32> to vector<128x1024xf32>
    %51 = arith.addf %49, %50 : vector<128x1024xf32>
    %cst_32 = arith.constant 0.000000e+00 : f32
    %52 = vector.broadcast %cst_32 : f32 to vector<128x1024xf32>
    %53 = arith.maximumf %51, %52 : vector<128x1024xf32>
    %cst_33 = arith.constant dense<0xFF800000> : vector<1024xf32>
    %54 = vector.multi_reduction <maximumf>, %53, %cst_33 [0] : vector<128x1024xf32> to vector<1024xf32>
    %55 = vector.shape_cast %54 : vector<1024xf32> to vector<1x1024xf32>
    %c1_34 = arith.constant 1 : index
    %c0_35 = arith.constant 0 : index
    %56 = vector.load %arg10[%c1_34, %c0_35] : memref<2x1024xf32, #tpu.memory_space<vmem>>, vector<1x1024xf32>
    %57 = arith.maximumf %56, %55 : vector<1x1024xf32>
    %c1_36 = arith.constant 1 : index
    %c0_37 = arith.constant 0 : index
    %58 = vector.load %arg10[%c1_36, %c0_37] : memref<2x1024xf32, #tpu.memory_space<vmem>>, vector<1x1024xf32>
    tpu.vector_store %arg10[%c1_36, %c0_37], %57 {strides = array<i32>} : memref<2x1024xf32, #tpu.memory_space<vmem>>, vector<1x1024xf32>,
    %c1_i32 = arith.constant 1 : i32
    %59 = arith.cmpi eq, %arg1, %c1_i32 : i32
    %60 = arith.extui %59 : i1 to i32
    %c0_i32_38 = arith.constant 0 : i32
    %61 = arith.cmpi ne, %60, %c0_i32_38 : i32
    scf.if %61 {
      %c0_39 = arith.constant 0 : index
      %c0_40 = arith.constant 0 : index
      %62 = vector.load %arg10[%c0_39, %c0_40] : memref<2x1024xf32, #tpu.memory_space<vmem>>, vector<2x1024xf32>
      %c0_41 = arith.constant 0 : index
      %c0_42 = arith.constant 0 : index
      %63 = vector.load %arg9[%c0_41, %c0_42] : memref<2x1024xf32, #tpu.memory_space<vmem>>, vector<2x1024xf32>
      tpu.vector_store %arg9[%c0_41, %c0_42], %62 {strides = array<i32>} : memref<2x1024xf32, #tpu.memory_space<vmem>>, vector<2x1024xf32>,
    } else {
    }
    return
  }
  func.func @transform_0(%arg0: i32, %arg1: i32) -> (i32, i32, i32) {
    %c0_i32 = arith.constant 0 : i32
    %c0_i32_0 = arith.constant 0 : i32
    return %arg0, %c0_i32, %arg1 : i32, i32, i32
  }
  func.func @transform_1(%arg0: i32, %arg1: i32) -> (i32, i32) {
    %c0_i32 = arith.constant 0 : i32
    %c0_i32_0 = arith.constant 0 : i32
    %c0_i32_1 = arith.constant 0 : i32
    return %c0_i32, %c0_i32_0 : i32, i32
  }
  func.func @transform_2(%arg0: i32, %arg1: i32) -> (i32, i32) {
    %c0_i32 = arith.constant 0 : i32
    %c0_i32_0 = arith.constant 0 : i32
    %c0_i32_1 = arith.constant 0 : i32
    return %c0_i32, %c0_i32_0 : i32, i32
  }
  func.func @transform_3(%arg0: i32, %arg1: i32) -> (i32, i32) {
    %c0_i32 = arith.constant 0 : i32
    %c0_i32_0 = arith.constant 0 : i32
    %c0_i32_1 = arith.constant 0 : i32
    return %c0_i32, %c0_i32_0 : i32, i32
  }
  func.func @transform_4(%arg0: i32, %arg1: i32) -> (i32, i32) {
    %c0_i32 = arith.constant 0 : i32
    %c0_i32_0 = arith.constant 0 : i32
    %c0_i32_1 = arith.constant 0 : i32
    return %c0_i32, %c0_i32_0 : i32, i32
  }
  func.func @transform_5(%arg0: i32, %arg1: i32) -> (i32, i32) {
    %c0_i32 = arith.constant 0 : i32
    %c0_i32_0 = arith.constant 0 : i32
    %c0_i32_1 = arith.constant 0 : i32
    return %c0_i32, %c0_i32_0 : i32, i32
  }
  func.func @transform_6(%arg0: i32, %arg1: i32) -> (i32, i32) {
    %c0_i32 = arith.constant 0 : i32
    %c0_i32_0 = arith.constant 0 : i32
    %c0_i32_1 = arith.constant 0 : i32
    return %c0_i32, %c0_i32_0 : i32, i32
  }
  func.func @transform_7(%arg0: i32, %arg1: i32) -> (i32, i32) {
    %c0_i32 = arith.constant 0 : i32
    %c0_i32_0 = arith.constant 0 : i32
    return %arg0, %c0_i32 : i32, i32
  }
}

</mosaic_0001>

<llo_original>
// kernel: tpu_custom_call.1
$region0: #{tpu_custom_call.1}
  #allocation0 [shape = 'u32[]', space=smem, size = 0x4, offset = 0x4, fixed_abs, tag = 'smem constant byte address 0x4 - core index']
  #allocation1 [shape = 'u32[144,128]{1,0:T(1,128)}', space=vmem, size = 0x12000, scoped, tag = 'internal scratch']
  #allocation2 [shape = 'f32[2,1024]{1,0:T(2,128)}', space=vmem, size = 0x2000, scoped, tag = 'scratch operand']
  %s0 = inlined_call_operand.hbm [shape: f32[2,64,256], index: 0, kind: input, shape index: {}]
  %s1 = inlined_call_operand.hbm [shape: bf16[64,64], index: 1, kind: input, shape index: {}]
  %s2 = inlined_call_operand.vmem [shape: f32[1,64], index: 2, kind: input, shape index: {}]
  %s3 = inlined_call_operand.hbm [shape: bf16[64,128], index: 3, kind: input, shape index: {}]
  %s4 = inlined_call_operand.vmem [shape: f32[1,128], index: 4, kind: input, shape index: {}]
  %s5 = inlined_call_operand.hbm [shape: bf16[128,1024], index: 5, kind: input, shape index: {}]
  %s6 = inlined_call_operand.vmem [shape: f32[1,1024], index: 6, kind: input, shape index: {}]
  %s7 = inlined_call_operand.hbm [shape: f32[2,1024], index: 7, kind: output, shape index: {}]
  %s8 = sld [smem:[#allocation0]]
  $region85: #{tpu_custom_call.1} parent=0
    _
  %s10 = ssub.s32 1, %s8
  %s11 = scalar_select 0, %s10, %s8
  $region1: #{tpu_custom_call.1} parent=0
    #allocation3 [shape = 'u8[131072]{0}', space=vmem, size = 0x20000, scoped, tag = 'input window, operand 0']
    #allocation4 [shape = 's32[2]{0}', space=sflag, size = 0x8, scoped, tag = 'scoped memory for tpu_custom_call.1']
    #allocation5 [shape = 's32[2]{0}', space=sflag, size = 0x8, scoped, tag = 'scoped memory for tpu_custom_call.1']
    #allocation6 [shape = 'u8[16384]{0}', space=vmem, size = 0x4000, scoped, tag = 'input window, operand 1, single buffered']
    #allocation7 [shape = 's32[1]{0}', space=sflag, size = 0x4, scoped, tag = 'scoped memory for tpu_custom_call.1']
    #allocation8 [shape = 'u8[16384]{0}', space=vmem, size = 0x4000, scoped, tag = 'input window, operand 3, single buffered']
    #allocation9 [shape = 'u8[262144]{0}', space=vmem, size = 0x40000, scoped, tag = 'input window, operand 5, single buffered']
    #allocation10 [shape = 's32[1]{0}', space=sflag, size = 0x4, scoped, tag = 'scoped memory for tpu_custom_call.1']
    #allocation11 [shape = 'u8[8192]{0}', space=vmem, size = 0x2000, scoped, tag = 'output window, operand 0, single buffered']
    %12 = vsyncpa [#allocation4], 0
    %s13 = scalar_lea.sflag [#allocation4], 1
    %14 = vsyncpa %s13, 0
    %15 = vsyncpa [#allocation7], 0
    %16 = vsyncpa [#allocation10], 0
    %17 = vsyncpa [#allocation5], 0
    loop: start=0, step=1, limit=4
    $region2: #{tpu_custom_call.1} parent=1 // loop_pre_header
      _
    $region3: #{tpu_custom_call.1} parent=1 // loop_header
      %s19 = sphi 0, %s23
      %p20 = scmp.ge.s32.totalorder %s19, 4
      %s26 = sphi 0, %s38
      %s27 = sphi 0, %s34
      %s28 = sphi 0, %s26
      %s29 = sphi 0, %s27
      %s30 = sphi 0, %s28
      %s31 = sphi 0, %s29
      %s43 = sphi 0, %s45
      %s46 = sphi 0, %s43
      %s47 = sphi 0, %s46
      %s63 = sphi 0, %s47
      %s67 = sphi 0, %s67
      %s69 = sphi 0, %s67
      %s70 = sphi 0, %s69
      %s84 = sphi 0, %s70
      %s88 = sphi 0, %s88
      %s90 = sphi 0, %s88
      %s91 = sphi 0, %s90
      %s105 = sphi 0, %s91
      %s109 = sphi 0, %s109
      %s111 = sphi 0, %s109
      %s112 = sphi 0, %s111
      %s126 = sphi 0, %s112
      %s130 = sphi 0, %s130
      %s132 = sphi 0, %s130
      %s133 = sphi 0, %s132
      %s147 = sphi 0, %s133
      %s151 = sphi 0, %s151
      %s153 = sphi 0, %s151
      %s154 = sphi 0, %s153
      %s168 = sphi 0, %s154
      %s172 = sphi 0, %s172
      %s174 = sphi 0, %s172
      %s175 = sphi 0, %s174
      %s189 = sphi 0, %s175
      %s195 = sphi 0, %s197
      %s198 = sphi 0, %s195
      %s199 = sphi 0, %s198
      %s215 = sphi 0, %s199
    $region4: #{tpu_custom_call.1} parent=1 // loop_header_branch
      %22 = sbr.rel (%p20) target = $region8
    $region5: #{tpu_custom_call.1} parent=1 // loop_body
      %s24 = ssub.s32 %s19, 1
      %s25 = ssub.s32 %s19, 2
      %s32 = sadd.s32 1, %s27
      %p33 = scmp.ge.s32.totalorder %s32, 2
      %s34 = scalar_select %p33, 0, %s32
      %s35 = sadd.s32 1, %s26
      %s36 = scalar_select %p33, %s35, %s26
      %p37 = scmp.ge.s32.totalorder %s36, 1
      %s38 = scalar_select %p37, 0, %s36
      %s39 = ssub.s32 %s26, %s38
      %s40 = ssub.s32 %s27, %s34
      %s41 = sor.u32 %s39, %s40
      %p42 = scmp.eq.s32.totalorder %s41, 0
      %s44 = sadd.s32 %s43, 1
      %s45 = scalar_select %p42, %s43, %s44
      %p48 = pneg %p42
      %p49 = scmp.eq.s32.totalorder %s19, 1
      %p50 = por %p48, %p49
      %p51 = scmp.ne.s32.totalorder %s43, %s46
      %p52 = scmp.eq.s32.totalorder %s19, 0
      %p53 = por %p51, %p52
      %p54 = scmp.ne.s32.totalorder %s43, %s46
      %p55 = scmp.eq.s32.totalorder %s24, 1
      %p56 = por %p54, %p55
      %p57 = scmp.ne.s32.totalorder %s46, %s47
      %p58 = scmp.eq.s32.totalorder %s24, 0
      %p59 = por %p57, %p58
      %p60 = scmp.ne.s32.totalorder %s46, %s47
      %p61 = scmp.eq.s32.totalorder %s25, 1
      %p62 = por %p60, %p61
      %p64 = scmp.ne.s32.totalorder %s47, %s63
      %p65 = scmp.eq.s32.totalorder %s25, 0
      %p66 = por %p64, %p65
      %s68 = sadd.s32 %s67, 1
      %p71 = scmp.eq.s32.totalorder %s19, 1
      %p72 = scmp.ne.s32.totalorder %s67, %s69
      %p73 = scmp.eq.s32.totalorder %s19, 0
      %p74 = por %p72, %p73
      %p75 = scmp.ne.s32.totalorder %s67, %s69
      %p76 = scmp.eq.s32.totalorder %s24, 1
      %p77 = por %p75, %p76
      %p78 = scmp.ne.s32.totalorder %s69, %s70
      %p79 = scmp.eq.s32.totalorder %s24, 0
      %p80 = por %p78, %p79
      %p81 = scmp.ne.s32.totalorder %s69, %s70
      %p82 = scmp.eq.s32.totalorder %s25, 1
      %p83 = por %p81, %p82
      %p85 = scmp.ne.s32.totalorder %s70, %s84
      %p86 = scmp.eq.s32.totalorder %s25, 0
      %p87 = por %p85, %p86
      %s89 = sadd.s32 %s88, 1
      %p92 = scmp.eq.s32.totalorder %s19, 1
      %p93 = scmp.ne.s32.totalorder %s88, %s90
      %p94 = scmp.eq.s32.totalorder %s19, 0
      %p95 = por %p93, %p94
      %p96 = scmp.ne.s32.totalorder %s88, %s90
      %p97 = scmp.eq.s32.totalorder %s24, 1
      %p98 = por %p96, %p97
      %p99 = scmp.ne.s32.totalorder %s90, %s91
      %p100 = scmp.eq.s32.totalorder %s24, 0
      %p101 = por %p99, %p100
      %p102 = scmp.ne.s32.totalorder %s90, %s91
      %p103 = scmp.eq.s32.totalorder %s25, 1
      %p104 = por %p102, %p103
      %p106 = scmp.ne.s32.totalorder %s91, %s105
      %p107 = scmp.eq.s32.totalorder %s25, 0
      %p108 = por %p106, %p107
      %s110 = sadd.s32 %s109, 1
      %p113 = scmp.eq.s32.totalorder %s19, 1
      %p114 = scmp.ne.s32.totalorder %s109, %s111
      %p115 = scmp.eq.s32.totalorder %s19, 0
      %p116 = por %p114, %p115
      %p117 = scmp.ne.s32.totalorder %s109, %s111
      %p118 = scmp.eq.s32.totalorder %s24, 1
      %p119 = por %p117, %p118
      %p120 = scmp.ne.s32.totalorder %s111, %s112
      %p121 = scmp.eq.s32.totalorder %s24, 0
      %p122 = por %p120, %p121
      %p123 = scmp.ne.s32.totalorder %s111, %s112
      %p124 = scmp.eq.s32.totalorder %s25, 1
      %p125 = por %p123, %p124
      %p127 = scmp.ne.s32.totalorder %s112, %s126
      %p128 = scmp.eq.s32.totalorder %s25, 0
      %p129 = por %p127, %p128
      %s131 = sadd.s32 %s130, 1
      %p134 = scmp.eq.s32.totalorder %s19, 1
      %p135 = scmp.ne.s32.totalorder %s130, %s132
      %p136 = scmp.eq.s32.totalorder %s19, 0
      %p137 = por %p135, %p136
      %p138 = scmp.ne.s32.totalorder %s130, %s132
      %p139 = scmp.eq.s32.totalorder %s24, 1
      %p140 = por %p138, %p139
      %p141 = scmp.ne.s32.totalorder %s132, %s133
      %p142 = scmp.eq.s32.totalorder %s24, 0
      %p143 = por %p141, %p142
      %p144 = scmp.ne.s32.totalorder %s132, %s133
      %p145 = scmp.eq.s32.totalorder %s25, 1
      %p146 = por %p144, %p145
      %p148 = scmp.ne.s32.totalorder %s133, %s147
      %p149 = scmp.eq.s32.totalorder %s25, 0
      %p150 = por %p148, %p149
      %s152 = sadd.s32 %s151, 1
      %p155 = scmp.eq.s32.totalorder %s19, 1
      %p156 = scmp.ne.s32.totalorder %s151, %s153
      %p157 = scmp.eq.s32.totalorder %s19, 0
      %p158 = por %p156, %p157
      %p159 = scmp.ne.s32.totalorder %s151, %s153
      %p160 = scmp.eq.s32.totalorder %s24, 1
      %p161 = por %p159, %p160
      %p162 = scmp.ne.s32.totalorder %s153, %s154
      %p163 = scmp.eq.s32.totalorder %s24, 0
      %p164 = por %p162, %p163
      %p165 = scmp.ne.s32.totalorder %s153, %s154
      %p166 = scmp.eq.s32.totalorder %s25, 1
      %p167 = por %p165, %p166
      %p169 = scmp.ne.s32.totalorder %s154, %s168
      %p170 = scmp.eq.s32.totalorder %s25, 0
      %p171 = por %p169, %p170
      %s173 = sadd.s32 %s172, 1
      %p176 = scmp.eq.s32.totalorder %s19, 1
      %p177 = scmp.ne.s32.totalorder %s172, %s174
      %p178 = scmp.eq.s32.totalorder %s19, 0
      %p179 = por %p177, %p178
      %p180 = scmp.ne.s32.totalorder %s172, %s174
      %p181 = scmp.eq.s32.totalorder %s24, 1
      %p182 = por %p180, %p181
      %p183 = scmp.ne.s32.totalorder %s174, %s175
      %p184 = scmp.eq.s32.totalorder %s24, 0
      %p185 = por %p183, %p184
      %p186 = scmp.ne.s32.totalorder %s174, %s175
      %p187 = scmp.eq.s32.totalorder %s25, 1
      %p188 = por %p186, %p187
      %p190 = scmp.ne.s32.totalorder %s175, %s189
      %p191 = scmp.eq.s32.totalorder %s25, 0
      %p192 = por %p190, %p191
      %s193 = ssub.s32 %s26, %s38
      %p194 = scmp.eq.s32.totalorder %s193, 0
      %s196 = sadd.s32 %s195, 1
      %s197 = scalar_select %p194, %s195, %s196
      %p200 = pneg %p194
      %p201 = scmp.eq.s32.totalorder %s19, 1
      %p202 = por %p200, %p201
      %p203 = scmp.ne.s32.totalorder %s195, %s198
      %p204 = scmp.eq.s32.totalorder %s19, 0
      %p205 = por %p203, %p204
      %p206 = scmp.ne.s32.totalorder %s195, %s198
      %p207 = scmp.eq.s32.totalorder %s24, 1
      %p208 = por %p206, %p207
      %p209 = scmp.ne.s32.totalorder %s198, %s199
      %p210 = scmp.eq.s32.totalorder %s24, 0
      %p211 = por %p209, %p210
      %p212 = scmp.ne.s32.totalorder %s198, %s199
      %p213 = scmp.eq.s32.totalorder %s25, 1
      %p214 = por %p212, %p213
      %p216 = scmp.ne.s32.totalorder %s199, %s215
      %p217 = scmp.eq.s32.totalorder %s25, 0
      %p218 = por %p216, %p217
      %p219 = scmp.le.s32.totalorder 1, %s19
      %p220 = scmp.lt.s32.totalorder %s19, 3
      %p221 = pnand %p219, %p220
      %p222 = pneg %p221
      // Predicated region
      $region9: #{tpu_custom_call.1} parent=5 // pred_check
        _
      $region10: #{tpu_custom_call.1} parent=5 // pred_check_branch
        %224 = sbr.rel (%p221) target = $region12
      $region11: #{tpu_custom_call.1} parent=5 // pred_region
        %s225 = ssub.s32 %s19, 1
        // Predicated region
        $region13: #{tpu_custom_call.1} parent=11 // pred_check
          %p226 = pneg %p80
        $region14: #{tpu_custom_call.1} parent=11 // pred_check_branch
          %228 = sbr.rel (%p226) target = $region16
        $region15: #{tpu_custom_call.1} parent=11 // pred_region
          %s230 = ssub.s32 512, 512
          %231 = vsyncadd [#allocation7], %s230
          %s232 = sshll.u32 [#allocation6], 4
          %s233 = int_to_ptr.vmem [resolvable:$true] %s232
          %238 = dma.hbm_to_vmem [thread:$0]  %s1, 512, %s233, [#allocation7], 64, 64, 4
        $region16: #{tpu_custom_call.1} parent=11 // pred_fallthru
          _
        // Predicated region
        $region17: #{tpu_custom_call.1} parent=11 // pred_check
          %p239 = pneg %p101
        $region18: #{tpu_custom_call.1} parent=11 // pred_check_branch
          %241 = sbr.rel (%p239) target = $region20
        $region19: #{tpu_custom_call.1} parent=11 // pred_region
          _
        $region20: #{tpu_custom_call.1} parent=11 // pred_fallthru
          _
        // Predicated region
        $region21: #{tpu_custom_call.1} parent=11 // pred_check
          %p242 = pneg %p122
        $region22: #{tpu_custom_call.1} parent=11 // pred_check_branch
          %244 = sbr.rel (%p242) target = $region24
        $region23: #{tpu_custom_call.1} parent=11 // pred_region
          %s246 = ssub.s32 512, 512
          %247 = vsyncadd [#allocation7], %s246
          %s248 = sshll.u32 [#allocation8], 4
          %s249 = int_to_ptr.vmem [resolvable:$true] %s248
          %254 = dma.hbm_to_vmem [thread:$0]  %s3, 512, %s249, [#allocation7], 64, 64, 4
        $region24: #{tpu_custom_call.1} parent=11 // pred_fallthru
          _
        // Predicated region
        $region25: #{tpu_custom_call.1} parent=11 // pred_check
          %p255 = pneg %p143
        $region26: #{tpu_custom_call.1} parent=11 // pred_check_branch
          %257 = sbr.rel (%p255) target = $region28
        $region27: #{tpu_custom_call.1} parent=11 // pred_region
          _
        $region28: #{tpu_custom_call.1} parent=11 // pred_fallthru
          _
        // Predicated region
        $region29: #{tpu_custom_call.1} parent=11 // pred_check
          %p258 = pneg %p164
        $region30: #{tpu_custom_call.1} parent=11 // pred_check_branch
          %260 = sbr.rel (%p258) target = $region32
        $region31: #{tpu_custom_call.1} parent=11 // pred_region
          %s262 = ssub.s32 8192, 8192
          %263 = vsyncadd [#allocation10], %s262
          %s264 = sshll.u32 [#allocation9], 4
          %s265 = int_to_ptr.vmem [resolvable:$true] %s264
          %270 = dma.hbm_to_vmem [thread:$0]  %s5, 8192, %s265, [#allocation10], 512, 512, 32
        $region32: #{tpu_custom_call.1} parent=11 // pred_fallthru
          _
        // Predicated region
        $region33: #{tpu_custom_call.1} parent=11 // pred_check
          %p271 = pneg %p185
        $region34: #{tpu_custom_call.1} parent=11 // pred_check_branch
          %273 = sbr.rel (%p271) target = $region36
        $region35: #{tpu_custom_call.1} parent=11 // pred_region
          _
        $region36: #{tpu_custom_call.1} parent=11 // pred_fallthru
          _
      $region12: #{tpu_custom_call.1} parent=5 // pred_fallthru
        _
      %p274 = scmp.lt.s32.totalorder %s19, 2
      // Predicated region
      $region37: #{tpu_custom_call.1} parent=5 // pred_check
        %p275 = pneg %p274
      $region38: #{tpu_custom_call.1} parent=5 // pred_check_branch
        %277 = sbr.rel (%p275) target = $region40
      $region39: #{tpu_custom_call.1} parent=5 // pred_region
        // Predicated region
        $region41: #{tpu_custom_call.1} parent=39 // pred_check
          %p278 = pneg %p53
        $region42: #{tpu_custom_call.1} parent=39 // pred_check_branch
          %280 = sbr.rel (%p278) target = $region44
        $region43: #{tpu_custom_call.1} parent=39 // pred_region
          %s281 = sand.u32 %s43, 1
          %s282 = scalar_lea.sflag [#allocation4], %s281
          %s283 = sand.u32 %s43, 1
          %s284 = smul.addr %s283, 128
          %s285 = scalar_lea.vmem [#allocation3], %s284
          %s286 = smul.u32 2, %s26
          %s288 = ssub.s32 2048, 2048
          %289 = vsyncadd %s282, %s288
          %s290 = smul.addr %s286, 16
          %s291 = sadd.s32 %s27, %s290
          %s292 = smul.addr %s291, 128
          %s293 = scalar_lea.hbm %s0, %s292
          %s294 = sshll.u32 %s285, 4
          %s295 = int_to_ptr.vmem [resolvable:$true] %s294
          %300 = dma.hbm_to_vmem [thread:$0]  %s293, 2048, %s295, %s282, 256, 128, 8
        $region44: #{tpu_custom_call.1} parent=39 // pred_fallthru
          _
      $region40: #{tpu_custom_call.1} parent=5 // pred_fallthru
        _
      %p301 = scmp.le.s32.totalorder 1, %s19
      %p302 = scmp.lt.s32.totalorder %s19, 3
      %p303 = pnand %p301, %p302
      %p304 = pneg %p303
      // Predicated region
      $region45: #{tpu_custom_call.1} parent=5 // pred_check
        _
      $region46: #{tpu_custom_call.1} parent=5 // pred_check_branch
        %306 = sbr.rel (%p303) target = $region48
      $region47: #{tpu_custom_call.1} parent=5 // pred_region
        %s307 = ssub.s32 %s19, 1
        %s308 = sand.u32 %s46, 1
        %s309 = scalar_lea.sflag [#allocation4], %s308
        %s310 = sand.u32 %s46, 1
        %s311 = smul.addr %s310, 128
        %s312 = scalar_lea.vmem [#allocation3], %s311
        // Predicated region
        $region49: #{tpu_custom_call.1} parent=47 // pred_check
          %p313 = pneg %p59
        $region50: #{tpu_custom_call.1} parent=47 // pred_check_branch
          %315 = sbr.rel (%p313) target = $region52
        $region51: #{tpu_custom_call.1} parent=47 // pred_region
          %316 = dma.done %s309, 2048
        $region52: #{tpu_custom_call.1} parent=47 // pred_fallthru
          _
        // Predicated region
        $region53: #{tpu_custom_call.1} parent=47 // pred_check
          %p317 = pneg %p80
        $region54: #{tpu_custom_call.1} parent=47 // pred_check_branch
          %319 = sbr.rel (%p317) target = $region56
        $region55: #{tpu_custom_call.1} parent=47 // pred_region
          %320 = dma.done [#allocation7], 512
        $region56: #{tpu_custom_call.1} parent=47 // pred_fallthru
          _
        // Predicated region
        $region57: #{tpu_custom_call.1} parent=47 // pred_check
          %p321 = pneg %p122
        $region58: #{tpu_custom_call.1} parent=47 // pred_check_branch
          %323 = sbr.rel (%p321) target = $region60
        $region59: #{tpu_custom_call.1} parent=47 // pred_region
          %324 = dma.done [#allocation7], 512
        $region60: #{tpu_custom_call.1} parent=47 // pred_fallthru
          _
        // Predicated region
        $region61: #{tpu_custom_call.1} parent=47 // pred_check
          %p325 = pneg %p164
        $region62: #{tpu_custom_call.1} parent=47 // pred_check_branch
          %327 = sbr.rel (%p325) target = $region64
        $region63: #{tpu_custom_call.1} parent=47 // pred_region
          %328 = dma.done [#allocation10], 8192
        $region64: #{tpu_custom_call.1} parent=47 // pred_fallthru
          _
        %s329 = sand.u32 %s46, 1
        %s330 = scalar_lea.sflag [#allocation4], %s329
        %s331 = sand.u32 %s46, 1
        %s332 = smul.addr %s331, 128
        %s333 = scalar_lea.vmem [#allocation3], %s332
        %p334 = pneg %p59
        %p335 = pneg %p56
        %p336 = pneg %p80
        %p337 = pneg %p77
        %p338 = pneg %p101
        %p339 = pneg %p98
        %p340 = pneg %p122
        %p341 = pneg %p119
        %p342 = pneg %p143
        %p343 = pneg %p140
        %p344 = pneg %p164
        %p345 = pneg %p161
        %p346 = pneg %p185
        %p347 = pneg %p182
        %p348 = pneg %p211
        %p349 = pneg %p208
        %s350 = smul.u32 2, %s28
        %p352 = scmp.eq.s32.totalorder %s29, 0
        // Predicated region
        $region65: #{tpu_custom_call.1} parent=47 // pred_check
          %p353 = pneg %p352
        $region66: #{tpu_custom_call.1} parent=47 // pred_check_branch
          %355 = sbr.rel (%p353) target = $region68
        $region67: #{tpu_custom_call.1} parent=47 // pred_region
          %356 = vst [vmem:[#allocation2] sm:$0xff] -inf
          %357 = vst [vmem:[#allocation2 + $0x8] sm:$0xff] -inf
        $region68: #{tpu_custom_call.1} parent=47 // pred_fallthru
          _
        %v358 = vld [vmem:[#allocation6] sm:$0xf]
        %v359 = vld [vmem:[#allocation6 + $0x4] sm:$0xf]
        %v360 = vld [vmem:[#allocation6 + $0x8] sm:$0xf]
        %v361 = vld [vmem:[#allocation6 + $0xc] sm:$0xf]
        %v362 = vld [vmem:[#allocation6 + $0x10] sm:$0xf]
        %v363 = vld [vmem:[#allocation6 + $0x14] sm:$0xf]
        %v364 = vld [vmem:[#allocation6 + $0x18] sm:$0xf]
        %v365 = vld [vmem:[#allocation6 + $0x1c] sm:$0xf]
        %v366 = vld [vmem:[#allocation8] sm:$0xf]
        %v367 = vld [vmem:[#allocation8 + $0x4] sm:$0xf]
        %v368 = vld [vmem:[#allocation8 + $0x8] sm:$0xf]
        %v369 = vld [vmem:[#allocation8 + $0xc] sm:$0xf]
        %v370 = vld [vmem:[#allocation8 + $0x10] sm:$0xf]
        %v371 = vld [vmem:[#allocation8 + $0x14] sm:$0xf]
        %v372 = vld [vmem:[#allocation8 + $0x18] sm:$0xf]
        %v373 = vld [vmem:[#allocation8 + $0x1c] sm:$0xf]
        %v374 = vld [vmem:[#allocation9] sm:$0xff]
        %v375 = vld [vmem:[#allocation9 + $0x8] sm:$0xff]
        %v376 = vld [vmem:[#allocation9 + $0x10] sm:$0xff]
        %v377 = vld [vmem:[#allocation9 + $0x18] sm:$0xff]
        %v378 = vld [vmem:[#allocation9 + $0x20] sm:$0xff]
        %v379 = vld [vmem:[#allocation9 + $0x28] sm:$0xff]
        %v380 = vld [vmem:[#allocation9 + $0x30] sm:$0xff]
        %v381 = vld [vmem:[#allocation9 + $0x38] sm:$0xff]
        %v382 = vld [vmem:[#allocation9 + $0x40] sm:$0xff]
        %v383 = vld [vmem:[#allocation9 + $0x48] sm:$0xff]
        %v384 = vld [vmem:[#allocation9 + $0x50] sm:$0xff]
        %v385 = vld [vmem:[#allocation9 + $0x58] sm:$0xff]
        %v386 = vld [vmem:[#allocation9 + $0x60] sm:$0xff]
        %v387 = vld [vmem:[#allocation9 + $0x68] sm:$0xff]
        %v388 = vld [vmem:[#allocation9 + $0x70] sm:$0xff]
        %v389 = vld [vmem:[#allocation9 + $0x78] sm:$0xff]
        %v390 = vld [vmem:[#allocation9 + $0x80] sm:$0xff]
        %v391 = vld [vmem:[#allocation9 + $0x88] sm:$0xff]
        %v392 = vld [vmem:[#allocation9 + $0x90] sm:$0xff]
        %v393 = vld [vmem:[#allocation9 + $0x98] sm:$0xff]
        %v394 = vld [vmem:[#allocation9 + $0xa0] sm:$0xff]
        %v395 = vld [vmem:[#allocation9 + $0xa8] sm:$0xff]
        %v396 = vld [vmem:[#allocation9 + $0xb0] sm:$0xff]
        %v397 = vld [vmem:[#allocation9 + $0xb8] sm:$0xff]
        %v398 = vld [vmem:[#allocation9 + $0xc0] sm:$0xff]
        %v399 = vld [vmem:[#allocation9 + $0xc8] sm:$0xff]
        %v400 = vld [vmem:[#allocation9 + $0xd0] sm:$0xff]
        %v401 = vld [vmem:[#allocation9 + $0xd8] sm:$0xff]
        %v402 = vld [vmem:[#allocation9 + $0xe0] sm:$0xff]
        %v403 = vld [vmem:[#allocation9 + $0xe8] sm:$0xff]
        %v404 = vld [vmem:[#allocation9 + $0xf0] sm:$0xff]
        %v405 = vld [vmem:[#allocation9 + $0xf8] sm:$0xff]
        %v406 = vld [vmem:[#allocation9 + $0x100] sm:$0xff]
        %v407 = vld [vmem:[#allocation9 + $0x108] sm:$0xff]
        %v408 = vld [vmem:[#allocation9 + $0x110] sm:$0xff]
        %v409 = vld [vmem:[#allocation9 + $0x118] sm:$0xff]
        %v410 = vld [vmem:[#allocation9 + $0x120] sm:$0xff]
        %v411 = vld [vmem:[#allocation9 + $0x128] sm:$0xff]
        %v412 = vld [vmem:[#allocation9 + $0x130] sm:$0xff]
        %v413 = vld [vmem:[#allocation9 + $0x138] sm:$0xff]
        %v414 = vld [vmem:[#allocation9 + $0x140] sm:$0xff]
        %v415 = vld [vmem:[#allocation9 + $0x148] sm:$0xff]
        %v416 = vld [vmem:[#allocation9 + $0x150] sm:$0xff]
        %v417 = vld [vmem:[#allocation9 + $0x158] sm:$0xff]
        %v418 = vld [vmem:[#allocation9 + $0x160] sm:$0xff]
        %v419 = vld [vmem:[#allocation9 + $0x168] sm:$0xff]
        %v420 = vld [vmem:[#allocation9 + $0x170] sm:$0xff]
        %v421 = vld [vmem:[#allocation9 + $0x178] sm:$0xff]
        %v422 = vld [vmem:[#allocation9 + $0x180] sm:$0xff]
        %v423 = vld [vmem:[#allocation9 + $0x188] sm:$0xff]
        %v424 = vld [vmem:[#allocation9 + $0x190] sm:$0xff]
        %v425 = vld [vmem:[#allocation9 + $0x198] sm:$0xff]
        %v426 = vld [vmem:[#allocation9 + $0x1a0] sm:$0xff]
        %v427 = vld [vmem:[#allocation9 + $0x1a8] sm:$0xff]
        %v428 = vld [vmem:[#allocation9 + $0x1b0] sm:$0xff]
        %v429 = vld [vmem:[#allocation9 + $0x1b8] sm:$0xff]
        %v430 = vld [vmem:[#allocation9 + $0x1c0] sm:$0xff]
        %v431 = vld [vmem:[#allocation9 + $0x1c8] sm:$0xff]
        %v432 = vld [vmem:[#allocation9 + $0x1d0] sm:$0xff]
        %v433 = vld [vmem:[#allocation9 + $0x1d8] sm:$0xff]
        %v434 = vld [vmem:[#allocation9 + $0x1e0] sm:$0xff]
        %v435 = vld [vmem:[#allocation9 + $0x1e8] sm:$0xff]
        %v436 = vld [vmem:[#allocation9 + $0x1f0] sm:$0xff]
        %v437 = vld [vmem:[#allocation9 + $0x1f8] sm:$0xff]
        %v438 = vld [vmem:[%s2] sm:$0x1]
        %v439 = vld [vmem:[%s4] sm:$0x1]
        %v440 = vld [vmem:[%s6] sm:$0xff]
        %v441 = vld [vmem:[%s312] sm:$0xff]
        %v442 = vld [vmem:[%s312 + $0x8] sm:$0xff]
        %v443 = vld [vmem:[%s312 + $0x10] sm:$0xff]
        %v444 = vld [vmem:[%s312 + $0x18] sm:$0xff]
        %v445 = vld [vmem:[%s312 + $0x20] sm:$0xff]
        %v446 = vld [vmem:[%s312 + $0x28] sm:$0xff]
        %v447 = vld [vmem:[%s312 + $0x30] sm:$0xff]
        %v448 = vld [vmem:[%s312 + $0x38] sm:$0xff]
        %v449 = vpack.c.bf16 %v442, %v441
        %v450 = vpack.c.bf16 %v444, %v443
        %v451 = vpack.c.bf16 %v446, %v445
        %v452 = vpack.c.bf16 %v448, %v447
        %v454 = vlaneseq
        %v455 = vshrl.u32 %v454, 7
        %v456 = vsub.s32 0, %v455
        %v457 = vrot.slane %v438, %v456
        %459 = vxpose.xlu0.c.b16.start [1/8] %v449, 128
        %460 = vxpose.xlu0.c.b16.cont [2/8] %v450, 128
        %461 = vxpose.xlu0.c.b16.cont [3/8] %v451, 128
        %462 = vxpose.xlu0.c.b16.cont [4/8] %v452, 128
        %463 = vxpose.xlu0.c.b16.cont [5/8] 0, 128
        %464 = vxpose.xlu0.c.b16.cont [6/8] 0, 128
        %465 = vxpose.xlu0.c.b16.cont [7/8] 0, 128
        %466 = vxpose.xlu0.c.b16.end [8/8] 0, 128
        %v467 = vpop.trf.xlu0
        %v468 = vpop.trf.xlu0
        %v469 = vpop.trf.xlu0
        %v470 = vpop.trf.xlu0
        %v471 = vpop.trf.xlu0
        %v472 = vpop.trf.xlu0
        %v473 = vpop.trf.xlu0
        %v474 = vpop.trf.xlu0
        %v483 = vunpack.c.l.b16 %v358
        %v484 = vunpack.c.l.b16 %v359
        %v485 = vunpack.c.l.b16 %v360
        %v486 = vunpack.c.l.b16 %v361
        %v487 = vunpack.c.l.b16 %v362
        %v488 = vunpack.c.l.b16 %v363
        %v489 = vunpack.c.l.b16 %v364
        %v490 = vunpack.c.l.b16 %v365
        %v491 = vpack.c.b16 %v484, %v483
        %v492 = vpack.c.b16 %v486, %v485
        %v493 = vpack.c.b16 %v488, %v487
        %v494 = vpack.c.b16 %v490, %v489
        %vm499 = vcmask 523264
        %v501 = vsel %vm499, %v467, 0
        %v504 = vsel %vm499, %v468, 0
        %v507 = vsel %vm499, %v469, 0
        %v510 = vsel %vm499, %v470, 0
        %v513 = vsel %vm499, %v471, 0
        %v516 = vsel %vm499, %v472, 0
        %v519 = vsel %vm499, %v473, 0
        %v522 = vsel %vm499, %v474, 0
        %524 = vmatprep.subr.bf16.mxu0 0
        %525 = vmatpush1.bf16.msra.mxu0 %v491
        %526 = vmatprep.subr.bf16.mxu0 0
        %527 = vmatpush1.bf16.msra.mxu0 %v492
        %528 = vmatprep.subr.bf16.mxu0 0
        %529 = vmatpush1.bf16.msra.mxu0 %v493
        %530 = vmatprep.subr.bf16.mxu0 0
        %531 = vmatpush1.bf16.msra.mxu0 %v494
        %532 = vmatprep.subr.bf16.mxu0 0
        %533 = vmatpush1.bf16.msra.mxu0 0
        %534 = vmatprep.subr.bf16.mxu0 0
        %535 = vmatpush1.bf16.msra.mxu0 0
        %536 = vmatprep.subr.bf16.mxu0 0
        %537 = vmatpush1.bf16.msra.mxu0 0
        %538 = vmatprep.subr.bf16.mxu0 0
        %539 = vmatpush1.bf16.msra.mxu0 0
        %540 = vmatprep.subr.bf16.mxu0 0
        %541 = vmatpush1.bf16.msra.mxu0 0
        %542 = vmatprep.subr.bf16.mxu0 0
        %543 = vmatpush1.bf16.msra.mxu0 0
        %544 = vmatprep.subr.bf16.mxu0 0
        %545 = vmatpush1.bf16.msra.mxu0 0
        %546 = vmatprep.subr.bf16.mxu0 0
        %547 = vmatpush1.bf16.msra.mxu0 0
        %548 = vmatprep.subr.bf16.mxu0 0
        %549 = vmatpush1.bf16.msra.mxu0 0
        %550 = vmatprep.subr.bf16.mxu0 0
        %551 = vmatpush1.bf16.msra.mxu0 0
        %552 = vmatprep.subr.bf16.mxu0 0
        %553 = vmatpush1.bf16.msra.mxu0 0
        %554 = vmatprep.subr.bf16.mxu0 0
        %555 = vmatpush1.bf16.msra.mxu0 0
        %556 = vmatprep.mubr.bf16.mxu0 0
        %557 = vmatmul.mubr.bf16.gmra.mrb[0].mxu0 %v501
        %v558 = vpop.f32.mrb[0].mxu0
        %v559 = vadd.f32 %v457, %v558
        %v560 = vpop.f32.mrb[0].mxu0
        %v561 = vpop.f32.mrb[0].mxu0
        %v562 = vadd.f32 %v457, %v561
        %v563 = vpop.f32.mrb[0].mxu0
        %564 = vmatprep.mubr.bf16.mxu0 0
        %565 = vmatmul.mubr.bf16.gmra.mrb[0].mxu0 %v504
        %v566 = vpop.f32.mrb[0].mxu0
        %v567 = vadd.f32 %v457, %v566
        %v568 = vpop.f32.mrb[0].mxu0
        %v569 = vpop.f32.mrb[0].mxu0
        %v570 = vadd.f32 %v457, %v569
        %v571 = vpop.f32.mrb[0].mxu0
        %572 = vmatprep.mubr.bf16.mxu0 0
        %573 = vmatmul.mubr.bf16.gmra.mrb[0].mxu0 %v507
        %v574 = vpop.f32.mrb[0].mxu0
        %v575 = vadd.f32 %v457, %v574
        %v576 = vpop.f32.mrb[0].mxu0
        %v577 = vpop.f32.mrb[0].mxu0
        %v578 = vadd.f32 %v457, %v577
        %v579 = vpop.f32.mrb[0].mxu0
        %580 = vmatprep.mubr.bf16.mxu0 0
        %581 = vmatmul.mubr.bf16.gmra.mrb[0].mxu0 %v510
        %v582 = vpop.f32.mrb[0].mxu0
        %v583 = vadd.f32 %v457, %v582
        %v584 = vpop.f32.mrb[0].mxu0
        %v585 = vpop.f32.mrb[0].mxu0
        %v586 = vadd.f32 %v457, %v585
        %v587 = vpop.f32.mrb[0].mxu0
        %588 = vmatprep.mubr.bf16.mxu0 0
        %589 = vmatmul.mubr.bf16.gmra.mrb[0].mxu0 %v513
        %v590 = vpop.f32.mrb[0].mxu0
        %v591 = vadd.f32 %v457, %v590
        %v592 = vpop.f32.mrb[0].mxu0
        %v593 = vpop.f32.mrb[0].mxu0
        %v594 = vadd.f32 %v457, %v593
        %v595 = vpop.f32.mrb[0].mxu0
        %596 = vmatprep.mubr.bf16.mxu0 0
        %597 = vmatmul.mubr.bf16.gmra.mrb[0].mxu0 %v516
        %v598 = vpop.f32.mrb[0].mxu0
        %v599 = vadd.f32 %v457, %v598
        %v600 = vpop.f32.mrb[0].mxu0
        %v601 = vpop.f32.mrb[0].mxu0
        %v602 = vadd.f32 %v457, %v601
        %v603 = vpop.f32.mrb[0].mxu0
        %604 = vmatprep.mubr.bf16.mxu0 0
        %605 = vmatmul.mubr.bf16.gmra.mrb[0].mxu0 %v519
        %v606 = vpop.f32.mrb[0].mxu0
        %v607 = vadd.f32 %v457, %v606
        %v608 = vpop.f32.mrb[0].mxu0
        %v609 = vpop.f32.mrb[0].mxu0
        %v610 = vadd.f32 %v457, %v609
        %v611 = vpop.f32.mrb[0].mxu0
        %612 = vmatprep.mubr.bf16.mxu0 0
        %613 = vmatmul.mubr.bf16.gmra.mrb[0].mxu0 %v522
        %v614 = vpop.f32.mrb[0].mxu0
        %v615 = vadd.f32 %v457, %v614
        %v616 = vpop.f32.mrb[0].mxu0
        %v617 = vpop.f32.mrb[0].mxu0
        %v618 = vadd.f32 %v457, %v617
        %v619 = vpop.f32.mrb[0].mxu0
        %620 = vdwg.mxu0
        %v621 = vmax.f32 %v559, 0.0
        %v622 = vmax.f32 %v562, 0.0
        %v623 = vmax.f32 %v567, 0.0
        %v624 = vmax.f32 %v570, 0.0
        %v625 = vmax.f32 %v575, 0.0
        %v626 = vmax.f32 %v578, 0.0
        %v627 = vmax.f32 %v583, 0.0
        %v628 = vmax.f32 %v586, 0.0
        %v629 = vmax.f32 %v591, 0.0
        %v630 = vmax.f32 %v594, 0.0
        %v631 = vmax.f32 %v599, 0.0
        %v632 = vmax.f32 %v602, 0.0
        %v633 = vmax.f32 %v607, 0.0
        %v634 = vmax.f32 %v610, 0.0
        %v635 = vmax.f32 %v615, 0.0
        %v636 = vmax.f32 %v618, 0.0
        %v637 = vpack.c.bf16 %v622, %v621
        %v638 = vpack.c.bf16 %v624, %v623
        %v639 = vpack.c.bf16 %v626, %v625
        %v640 = vpack.c.bf16 %v628, %v627
        %v641 = vpack.c.bf16 %v630, %v629
        %v642 = vpack.c.bf16 %v632, %v631
        %v643 = vpack.c.bf16 %v634, %v633
        %v644 = vpack.c.bf16 %v636, %v635
        %v646 = vlaneseq
        %v647 = vshrl.u32 %v646, 7
        %v648 = vsub.s32 0, %v647
        %v649 = vrot.slane %v439, %v648
        %v659 = vunpack.c.l.b16 %v366
        %v660 = vunpack.c.l.b16 %v367
        %v661 = vunpack.c.l.b16 %v368
        %v662 = vunpack.c.l.b16 %v369
        %v663 = vunpack.c.l.b16 %v370
        %v664 = vunpack.c.l.b16 %v371
        %v665 = vunpack.c.l.b16 %v372
        %v666 = vunpack.c.l.b16 %v373
        %v667 = vpack.c.b16 %v660, %v659
        %v668 = vpack.c.b16 %v662, %v661
        %v669 = vpack.c.b16 %v664, %v663
        %v670 = vpack.c.b16 %v666, %v665
        %v676 = vsel %vm499, %v637, 0
        %v679 = vsel %vm499, %v638, 0
        %v682 = vsel %vm499, %v639, 0
        %v685 = vsel %vm499, %v640, 0
        %v688 = vsel %vm499, %v641, 0
        %v691 = vsel %vm499, %v642, 0
        %v694 = vsel %vm499, %v643, 0
        %v697 = vsel %vm499, %v644, 0
        %699 = vmatprep.subr.bf16.mxu0 0
        %700 = vmatpush1.bf16.msra.mxu0 %v667
        %701 = vmatprep.subr.bf16.mxu0 0
        %702 = vmatpush1.bf16.msra.mxu0 %v668
        %703 = vmatprep.subr.bf16.mxu0 0
        %704 = vmatpush1.bf16.msra.mxu0 %v669
        %705 = vmatprep.subr.bf16.mxu0 0
        %706 = vmatpush1.bf16.msra.mxu0 %v670
        %707 = vmatprep.subr.bf16.mxu0 0
        %708 = vmatpush1.bf16.msra.mxu0 0
        %709 = vmatprep.subr.bf16.mxu0 0
        %710 = vmatpush1.bf16.msra.mxu0 0
        %711 = vmatprep.subr.bf16.mxu0 0
        %712 = vmatpush1.bf16.msra.mxu0 0
        %713 = vmatprep.subr.bf16.mxu0 0
        %714 = vmatpush1.bf16.msra.mxu0 0
        %715 = vmatprep.subr.bf16.mxu0 0
        %716 = vmatpush1.bf16.msra.mxu0 0
        %717 = vmatprep.subr.bf16.mxu0 0
        %718 = vmatpush1.bf16.msra.mxu0 0
        %719 = vmatprep.subr.bf16.mxu0 0
        %720 = vmatpush1.bf16.msra.mxu0 0
        %721 = vmatprep.subr.bf16.mxu0 0
        %722 = vmatpush1.bf16.msra.mxu0 0
        %723 = vmatprep.subr.bf16.mxu0 0
        %724 = vmatpush1.bf16.msra.mxu0 0
        %725 = vmatprep.subr.bf16.mxu0 0
        %726 = vmatpush1.bf16.msra.mxu0 0
        %727 = vmatprep.subr.bf16.mxu0 0
        %728 = vmatpush1.bf16.msra.mxu0 0
        %729 = vmatprep.subr.bf16.mxu0 0
        %730 = vmatpush1.bf16.msra.mxu0 0
        %731 = vmatprep.mubr.bf16.mxu0 0
        %732 = vmatmul.mubr.bf16.gmra.mrb[0].mxu0 %v676
        %v733 = vpop.f32.mrb[0].mxu0
        %v734 = vadd.f32 %v649, %v733
        %v735 = vpop.f32.mrb[0].mxu0
        %v736 = vpop.f32.mrb[0].mxu0
        %v737 = vadd.f32 %v649, %v736
        %v738 = vpop.f32.mrb[0].mxu0
        %739 = vmatprep.mubr.bf16.mxu0 0
        %740 = vmatmul.mubr.bf16.gmra.mrb[0].mxu0 %v679
        %v741 = vpop.f32.mrb[0].mxu0
        %v742 = vadd.f32 %v649, %v741
        %v743 = vpop.f32.mrb[0].mxu0
        %v744 = vpop.f32.mrb[0].mxu0
        %v745 = vadd.f32 %v649, %v744
        %v746 = vpop.f32.mrb[0].mxu0
        %747 = vmatprep.mubr.bf16.mxu0 0
        %748 = vmatmul.mubr.bf16.gmra.mrb[0].mxu0 %v682
        %v749 = vpop.f32.mrb[0].mxu0
        %v750 = vadd.f32 %v649, %v749
        %v751 = vpop.f32.mrb[0].mxu0
        %v752 = vpop.f32.mrb[0].mxu0
        %v753 = vadd.f32 %v649, %v752
        %v754 = vpop.f32.mrb[0].mxu0
        %755 = vmatprep.mubr.bf16.mxu0 0
        %756 = vmatmul.mubr.bf16.gmra.mrb[0].mxu0 %v685
        %v757 = vpop.f32.mrb[0].mxu0
        %v758 = vadd.f32 %v649, %v757
        %v759 = vpop.f32.mrb[0].mxu0
        %v760 = vpop.f32.mrb[0].mxu0
        %v761 = vadd.f32 %v649, %v760
        %v762 = vpop.f32.mrb[0].mxu0
        %763 = vmatprep.mubr.bf16.mxu0 0
        %764 = vmatmul.mubr.bf16.gmra.mrb[0].mxu0 %v688
        %v765 = vpop.f32.mrb[0].mxu0
        %v766 = vadd.f32 %v649, %v765
        %v767 = vpop.f32.mrb[0].mxu0
        %v768 = vpop.f32.mrb[0].mxu0
        %v769 = vadd.f32 %v649, %v768
        %v770 = vpop.f32.mrb[0].mxu0
        %771 = vmatprep.mubr.bf16.mxu0 0
        %772 = vmatmul.mubr.bf16.gmra.mrb[0].mxu0 %v691
        %v773 = vpop.f32.mrb[0].mxu0
        %v774 = vadd.f32 %v649, %v773
        %v775 = vpop.f32.mrb[0].mxu0
        %v776 = vpop.f32.mrb[0].mxu0
        %v777 = vadd.f32 %v649, %v776
        %v778 = vpop.f32.mrb[0].mxu0
        %779 = vmatprep.mubr.bf16.mxu0 0
        %780 = vmatmul.mubr.bf16.gmra.mrb[0].mxu0 %v694
        %v781 = vpop.f32.mrb[0].mxu0
        %v782 = vadd.f32 %v649, %v781
        %v783 = vpop.f32.mrb[0].mxu0
        %v784 = vpop.f32.mrb[0].mxu0
        %v785 = vadd.f32 %v649, %v784
        %v786 = vpop.f32.mrb[0].mxu0
        %787 = vmatprep.mubr.bf16.mxu0 0
        %788 = vmatmul.mubr.bf16.gmra.mrb[0].mxu0 %v697
        %v789 = vpop.f32.mrb[0].mxu0
        %v790 = vadd.f32 %v649, %v789
        %v791 = vpop.f32.mrb[0].mxu0
        %v792 = vpop.f32.mrb[0].mxu0
        %v793 = vadd.f32 %v649, %v792
        %v794 = vpop.f32.mrb[0].mxu0
        %795 = vdwg.mxu0
        %v796 = vmax.f32 %v734, 0.0
        %v797 = vmax.f32 %v737, 0.0
        %v798 = vmax.f32 %v742, 0.0
        %v799 = vmax.f32 %v745, 0.0
        %v800 = vmax.f32 %v750, 0.0
        %v801 = vmax.f32 %v753, 0.0
        %v802 = vmax.f32 %v758, 0.0
        %v803 = vmax.f32 %v761, 0.0
        %v804 = vmax.f32 %v766, 0.0
        %v805 = vmax.f32 %v769, 0.0
        %v806 = vmax.f32 %v774, 0.0
        %v807 = vmax.f32 %v777, 0.0
        %v808 = vmax.f32 %v782, 0.0
        %v809 = vmax.f32 %v785, 0.0
        %v810 = vmax.f32 %v790, 0.0
        %v811 = vmax.f32 %v793, 0.0
        %v812 = vpack.c.bf16 %v797, %v796
        %v813 = vpack.c.bf16 %v799, %v798
        %v814 = vpack.c.bf16 %v801, %v800
        %v815 = vpack.c.bf16 %v803, %v802
        %v816 = vpack.c.bf16 %v805, %v804
        %v817 = vpack.c.bf16 %v807, %v806
        %v818 = vpack.c.bf16 %v809, %v808
        %v819 = vpack.c.bf16 %v811, %v810
        %v821 = vlaneseq
        %v822 = vshrl.u32 %v821, 7
        %v823 = vsub.s32 0, %v822
        %v824 = vrot.slane %v440, %v823
        %v825 = vlaneseq
        %v826 = vshrl.u32 %v825, 7
        %v827 = vsub.s32 1, %v826
        %v828 = vrot.slane %v440, %v827
        %v829 = vlaneseq
        %v830 = vshrl.u32 %v829, 7
        %v831 = vsub.s32 2, %v830
        %v832 = vrot.slane %v440, %v831
        %v833 = vlaneseq
        %v834 = vshrl.u32 %v833, 7
        %v835 = vsub.s32 3, %v834
        %v836 = vrot.slane %v440, %v835
        %v837 = vlaneseq
        %v838 = vshrl.u32 %v837, 7
        %v839 = vsub.s32 4, %v838
        %v840 = vrot.slane %v440, %v839
        %v841 = vlaneseq
        %v842 = vshrl.u32 %v841, 7
        %v843 = vsub.s32 5, %v842
        %v844 = vrot.slane %v440, %v843
        %v845 = vlaneseq
        %v846 = vshrl.u32 %v845, 7
        %v847 = vsub.s32 6, %v846
        %v848 = vrot.slane %v440, %v847
        %v849 = vlaneseq
        %v850 = vshrl.u32 %v849, 7
        %v851 = vsub.s32 7, %v850
        %v852 = vrot.slane %v440, %v851
        %v925 = vunpack.c.l.b16 %v374
        %v926 = vunpack.c.h.b16 %v374
        %v927 = vunpack.c.l.b16 %v375
        %v928 = vunpack.c.h.b16 %v375
        %v929 = vunpack.c.l.b16 %v376
        %v930 = vunpack.c.h.b16 %v376
        %v931 = vunpack.c.l.b16 %v377
        %v932 = vunpack.c.h.b16 %v377
        %v933 = vunpack.c.l.b16 %v378
        %v934 = vunpack.c.h.b16 %v378
        %v935 = vunpack.c.l.b16 %v379
        %v936 = vunpack.c.h.b16 %v379
        %v937 = vunpack.c.l.b16 %v380
        %v938 = vunpack.c.h.b16 %v380
        %v939 = vunpack.c.l.b16 %v381
        %v940 = vunpack.c.h.b16 %v381
        %v941 = vunpack.c.l.b16 %v382
        %v942 = vunpack.c.h.b16 %v382
        %v943 = vunpack.c.l.b16 %v383
        %v944 = vunpack.c.h.b16 %v383
        %v945 = vunpack.c.l.b16 %v384
        %v946 = vunpack.c.h.b16 %v384
        %v947 = vunpack.c.l.b16 %v385
        %v948 = vunpack.c.h.b16 %v385
        %v949 = vunpack.c.l.b16 %v386
        %v950 = vunpack.c.h.b16 %v386
        %v951 = vunpack.c.l.b16 %v387
        %v952 = vunpack.c.h.b16 %v387
        %v953 = vunpack.c.l.b16 %v388
        %v954 = vunpack.c.h.b16 %v388
        %v955 = vunpack.c.l.b16 %v389
        %v956 = vunpack.c.h.b16 %v389
        %v957 = vunpack.c.l.b16 %v390
        %v958 = vunpack.c.h.b16 %v390
        %v959 = vunpack.c.l.b16 %v391
        %v960 = vunpack.c.h.b16 %v391
        %v961 = vunpack.c.l.b16 %v392
        %v962 = vunpack.c.h.b16 %v392
        %v963 = vunpack.c.l.b16 %v393
        %v964 = vunpack.c.h.b16 %v393
        %v965 = vunpack.c.l.b16 %v394
        %v966 = vunpack.c.h.b16 %v394
        %v967 = vunpack.c.l.b16 %v395
        %v968 = vunpack.c.h.b16 %v395
        %v969 = vunpack.c.l.b16 %v396
        %v970 = vunpack.c.h.b16 %v396
        %v971 = vunpack.c.l.b16 %v397
        %v972 = vunpack.c.h.b16 %v397
        %v973 = vunpack.c.l.b16 %v398
        %v974 = vunpack.c.h.b16 %v398
        %v975 = vunpack.c.l.b16 %v399
        %v976 = vunpack.c.h.b16 %v399
        %v977 = vunpack.c.l.b16 %v400
        %v978 = vunpack.c.h.b16 %v400
        %v979 = vunpack.c.l.b16 %v401
        %v980 = vunpack.c.h.b16 %v401
        %v981 = vunpack.c.l.b16 %v402
        %v982 = vunpack.c.h.b16 %v402
        %v983 = vunpack.c.l.b16 %v403
        %v984 = vunpack.c.h.b16 %v403
        %v985 = vunpack.c.l.b16 %v404
        %v986 = vunpack.c.h.b16 %v404
        %v987 = vunpack.c.l.b16 %v405
        %v988 = vunpack.c.h.b16 %v405
        %v989 = vunpack.c.l.b16 %v406
        %v990 = vunpack.c.h.b16 %v406
        %v991 = vunpack.c.l.b16 %v407
        %v992 = vunpack.c.h.b16 %v407
        %v993 = vunpack.c.l.b16 %v408
        %v994 = vunpack.c.h.b16 %v408
        %v995 = vunpack.c.l.b16 %v409
        %v996 = vunpack.c.h.b16 %v409
        %v997 = vunpack.c.l.b16 %v410
        %v998 = vunpack.c.h.b16 %v410
        %v999 = vunpack.c.l.b16 %v411
        %v1000 = vunpack.c.h.b16 %v411
        %v1001 = vunpack.c.l.b16 %v412
        %v1002 = vunpack.c.h.b16 %v412
        %v1003 = vunpack.c.l.b16 %v413
        %v1004 = vunpack.c.h.b16 %v413
        %v1005 = vunpack.c.l.b16 %v414
        %v1006 = vunpack.c.h.b16 %v414
        %v1007 = vunpack.c.l.b16 %v415
        %v1008 = vunpack.c.h.b16 %v415
        %v1009 = vunpack.c.l.b16 %v416
        %v1010 = vunpack.c.h.b16 %v416
        %v1011 = vunpack.c.l.b16 %v417
        %v1012 = vunpack.c.h.b16 %v417
        %v1013 = vunpack.c.l.b16 %v418
        %v1014 = vunpack.c.h.b16 %v418
        %v1015 = vunpack.c.l.b16 %v419
        %v1016 = vunpack.c.h.b16 %v419
        %v1017 = vunpack.c.l.b16 %v420
        %v1018 = vunpack.c.h.b16 %v420
        %v1019 = vunpack.c.l.b16 %v421
        %v1020 = vunpack.c.h.b16 %v421
        %v1021 = vunpack.c.l.b16 %v422
        %v1022 = vunpack.c.h.b16 %v422
        %v1023 = vunpack.c.l.b16 %v423
        %v1024 = vunpack.c.h.b16 %v423
        %v1025 = vunpack.c.l.b16 %v424
        %v1026 = vunpack.c.h.b16 %v424
        %v1027 = vunpack.c.l.b16 %v425
        %v1028 = vunpack.c.h.b16 %v425
        %v1029 = vunpack.c.l.b16 %v426
        %v1030 = vunpack.c.h.b16 %v426
        %v1031 = vunpack.c.l.b16 %v427
        %v1032 = vunpack.c.h.b16 %v427
        %v1033 = vunpack.c.l.b16 %v428
        %v1034 = vunpack.c.h.b16 %v428
        %v1035 = vunpack.c.l.b16 %v429
        %v1036 = vunpack.c.h.b16 %v429
        %v1037 = vunpack.c.l.b16 %v430
        %v1038 = vunpack.c.h.b16 %v430
        %v1039 = vunpack.c.l.b16 %v431
        %v1040 = vunpack.c.h.b16 %v431
        %v1041 = vunpack.c.l.b16 %v432
        %v1042 = vunpack.c.h.b16 %v432
        %v1043 = vunpack.c.l.b16 %v433
        %v1044 = vunpack.c.h.b16 %v433
        %v1045 = vunpack.c.l.b16 %v434
        %v1046 = vunpack.c.h.b16 %v434
        %v1047 = vunpack.c.l.b16 %v435
        %v1048 = vunpack.c.h.b16 %v435
        %v1049 = vunpack.c.l.b16 %v436
        %v1050 = vunpack.c.h.b16 %v436
        %v1051 = vunpack.c.l.b16 %v437
        %v1052 = vunpack.c.h.b16 %v437
        %v1053 = vpack.c.b16 %v933, %v925
        %v1054 = vpack.c.b16 %v934, %v926
        %v1055 = vpack.c.b16 %v935, %v927
        %v1056 = vpack.c.b16 %v936, %v928
        %v1057 = vpack.c.b16 %v937, %v929
        %v1058 = vpack.c.b16 %v938, %v930
        %v1059 = vpack.c.b16 %v939, %v931
        %v1060 = vpack.c.b16 %v940, %v932
        %v1061 = vpack.c.b16 %v949, %v941
        %v1062 = vpack.c.b16 %v950, %v942
        %v1063 = vpack.c.b16 %v951, %v943
        %v1064 = vpack.c.b16 %v952, %v944
        %v1065 = vpack.c.b16 %v953, %v945
        %v1066 = vpack.c.b16 %v954, %v946
        %v1067 = vpack.c.b16 %v955, %v947
        %v1068 = vpack.c.b16 %v956, %v948
        %v1069 = vpack.c.b16 %v965, %v957
        %v1070 = vpack.c.b16 %v966, %v958
        %v1071 = vpack.c.b16 %v967, %v959
        %v1072 = vpack.c.b16 %v968, %v960
        %v1073 = vpack.c.b16 %v969, %v961
        %v1074 = vpack.c.b16 %v970, %v962
        %v1075 = vpack.c.b16 %v971, %v963
        %v1076 = vpack.c.b16 %v972, %v964
        %v1077 = vpack.c.b16 %v981, %v973
        %v1078 = vpack.c.b16 %v982, %v974
        %v1079 = vpack.c.b16 %v983, %v975
        %v1080 = vpack.c.b16 %v984, %v976
        %v1081 = vpack.c.b16 %v985, %v977
        %v1082 = vpack.c.b16 %v986, %v978
        %v1083 = vpack.c.b16 %v987, %v979
        %v1084 = vpack.c.b16 %v988, %v980
        %v1085 = vpack.c.b16 %v997, %v989
        %v1086 = vpack.c.b16 %v998, %v990
        %v1087 = vpack.c.b16 %v999, %v991
        %v1088 = vpack.c.b16 %v1000, %v992
        %v1089 = vpack.c.b16 %v1001, %v993
        %v1090 = vpack.c.b16 %v1002, %v994
        %v1091 = vpack.c.b16 %v1003, %v995
        %v1092 = vpack.c.b16 %v1004, %v996
        %v1093 = vpack.c.b16 %v1013, %v1005
        %v1094 = vpack.c.b16 %v1014, %v1006
        %v1095 = vpack.c.b16 %v1015, %v1007
        %v1096 = vpack.c.b16 %v1016, %v1008
        %v1097 = vpack.c.b16 %v1017, %v1009
        %v1098 = vpack.c.b16 %v1018, %v1010
        %v1099 = vpack.c.b16 %v1019, %v1011
        %v1100 = vpack.c.b16 %v1020, %v1012
        %v1101 = vpack.c.b16 %v1029, %v1021
        %v1102 = vpack.c.b16 %v1030, %v1022
        %v1103 = vpack.c.b16 %v1031, %v1023
        %v1104 = vpack.c.b16 %v1032, %v1024
        %v1105 = vpack.c.b16 %v1033, %v1025
        %v1106 = vpack.c.b16 %v1034, %v1026
        %v1107 = vpack.c.b16 %v1035, %v1027
        %v1108 = vpack.c.b16 %v1036, %v1028
        %v1109 = vpack.c.b16 %v1045, %v1037
        %v1110 = vpack.c.b16 %v1046, %v1038
        %v1111 = vpack.c.b16 %v1047, %v1039
        %v1112 = vpack.c.b16 %v1048, %v1040
        %v1113 = vpack.c.b16 %v1049, %v1041
        %v1114 = vpack.c.b16 %v1050, %v1042
        %v1115 = vpack.c.b16 %v1051, %v1043
        %v1116 = vpack.c.b16 %v1052, %v1044
        %1181 = vmatprep.subr.bf16.mxu0 %v1054
        %1182 = vmatpush1.bf16.msra.mxu0 %v1053
        %1183 = vmatprep.subr.bf16.mxu0 %v1062
        %1184 = vmatpush1.bf16.msra.mxu0 %v1061
        %1185 = vmatprep.subr.bf16.mxu0 %v1070
        %1186 = vmatpush1.bf16.msra.mxu0 %v1069
        %1187 = vmatprep.subr.bf16.mxu0 %v1078
        %1188 = vmatpush1.bf16.msra.mxu0 %v1077
        %1189 = vmatprep.subr.bf16.mxu0 %v1086
        %1190 = vmatpush1.bf16.msra.mxu0 %v1085
        %1191 = vmatprep.subr.bf16.mxu0 %v1094
        %1192 = vmatpush1.bf16.msra.mxu0 %v1093
        %1193 = vmatprep.subr.bf16.mxu0 %v1102
        %1194 = vmatpush1.bf16.msra.mxu0 %v1101
        %1195 = vmatprep.subr.bf16.mxu0 %v1110
        %1196 = vmatpush1.bf16.msra.mxu0 %v1109
        %1197 = vmatprep.subr.bf16.mxu0 0
        %1198 = vmatpush1.bf16.msra.mxu0 0
        %1199 = vmatprep.subr.bf16.mxu0 0
        %1200 = vmatpush1.bf16.msra.mxu0 0
        %1201 = vmatprep.subr.bf16.mxu0 0
        %1202 = vmatpush1.bf16.msra.mxu0 0
        %1203 = vmatprep.subr.bf16.mxu0 0
        %1204 = vmatpush1.bf16.msra.mxu0 0
        %1205 = vmatprep.subr.bf16.mxu0 0
        %1206 = vmatpush1.bf16.msra.mxu0 0
        %1207 = vmatprep.subr.bf16.mxu0 0
        %1208 = vmatpush1.bf16.msra.mxu0 0
        %1209 = vmatprep.subr.bf16.mxu0 0
        %1210 = vmatpush1.bf16.msra.mxu0 0
        %1211 = vmatprep.subr.bf16.mxu0 0
        %1212 = vmatpush1.bf16.msra.mxu0 0
        %1213 = vmatprep.mubr.bf16.mxu0 0
        %1214 = vmatmul.mubr.bf16.gmra.mrb[0].mxu0 %v812
        %v1215 = vpop.f32.mrb[0].mxu0
        %v1216 = vadd.f32 %v824, %v1215
        %v1217 = vpop.f32.mrb[0].mxu0
        %v1218 = vadd.f32 %v828, %v1217
        %v1219 = vpop.f32.mrb[0].mxu0
        %v1220 = vadd.f32 %v824, %v1219
        %v1221 = vpop.f32.mrb[0].mxu0
        %v1222 = vadd.f32 %v828, %v1221
        %1223 = vmatprep.mubr.bf16.mxu0 0
        %1224 = vmatmul.mubr.bf16.gmra.mrb[0].mxu0 %v813
        %v1225 = vpop.f32.mrb[0].mxu0
        %v1226 = vadd.f32 %v824, %v1225
        %v1227 = vpop.f32.mrb[0].mxu0
        %v1228 = vadd.f32 %v828, %v1227
        %v1229 = vpop.f32.mrb[0].mxu0
        %v1230 = vadd.f32 %v824, %v1229
        %v1231 = vpop.f32.mrb[0].mxu0
        %v1232 = vadd.f32 %v828, %v1231
        %1233 = vmatprep.mubr.bf16.mxu0 0
        %1234 = vmatmul.mubr.bf16.gmra.mrb[0].mxu0 %v814
        %v1235 = vpop.f32.mrb[0].mxu0
        %v1236 = vadd.f32 %v824, %v1235
        %v1237 = vpop.f32.mrb[0].mxu0
        %v1238 = vadd.f32 %v828, %v1237
        %v1239 = vpop.f32.mrb[0].mxu0
        %v1240 = vadd.f32 %v824, %v1239
        %v1241 = vpop.f32.mrb[0].mxu0
        %v1242 = vadd.f32 %v828, %v1241
        %1243 = vmatprep.mubr.bf16.mxu0 0
        %1244 = vmatmul.mubr.bf16.gmra.mrb[0].mxu0 %v815
        %v1245 = vpop.f32.mrb[0].mxu0
        %v1246 = vadd.f32 %v824, %v1245
        %v1247 = vpop.f32.mrb[0].mxu0
        %v1248 = vadd.f32 %v828, %v1247
        %v1249 = vpop.f32.mrb[0].mxu0
        %v1250 = vadd.f32 %v824, %v1249
        %v1251 = vpop.f32.mrb[0].mxu0
        %v1252 = vadd.f32 %v828, %v1251
        %1253 = vmatprep.mubr.bf16.mxu0 0
        %1254 = vmatmul.mubr.bf16.gmra.mrb[0].mxu0 %v816
        %v1255 = vpop.f32.mrb[0].mxu0
        %v1256 = vadd.f32 %v824, %v1255
        %v1257 = vpop.f32.mrb[0].mxu0
        %v1258 = vadd.f32 %v828, %v1257
        %v1259 = vpop.f32.mrb[0].mxu0
        %v1260 = vadd.f32 %v824, %v1259
        %v1261 = vpop.f32.mrb[0].mxu0
        %v1262 = vadd.f32 %v828, %v1261
        %1263 = vmatprep.mubr.bf16.mxu0 0
        %1264 = vmatmul.mubr.bf16.gmra.mrb[0].mxu0 %v817
        %v1265 = vpop.f32.mrb[0].mxu0
        %v1266 = vadd.f32 %v824, %v1265
        %v1267 = vpop.f32.mrb[0].mxu0
        %v1268 = vadd.f32 %v828, %v1267
        %v1269 = vpop.f32.mrb[0].mxu0
        %v1270 = vadd.f32 %v824, %v1269
        %v1271 = vpop.f32.mrb[0].mxu0
        %v1272 = vadd.f32 %v828, %v1271
        %1273 = vmatprep.mubr.bf16.mxu0 0
        %1274 = vmatmul.mubr.bf16.gmra.mrb[0].mxu0 %v818
        %v1275 = vpop.f32.mrb[0].mxu0
        %v1276 = vadd.f32 %v824, %v1275
        %v1277 = vpop.f32.mrb[0].mxu0
        %v1278 = vadd.f32 %v828, %v1277
        %v1279 = vpop.f32.mrb[0].mxu0
        %v1280 = vadd.f32 %v824, %v1279
        %v1281 = vpop.f32.mrb[0].mxu0
        %v1282 = vadd.f32 %v828, %v1281
        %1283 = vmatprep.mubr.bf16.mxu0 0
        %1284 = vmatmul.mubr.bf16.gmra.mrb[0].mxu0 %v819
        %v1285 = vpop.f32.mrb[0].mxu0
        %v1286 = vadd.f32 %v824, %v1285
        %v1287 = vpop.f32.mrb[0].mxu0
        %v1288 = vadd.f32 %v828, %v1287
        %v1289 = vpop.f32.mrb[0].mxu0
        %v1290 = vadd.f32 %v824, %v1289
        %v1291 = vpop.f32.mrb[0].mxu0
        %v1292 = vadd.f32 %v828, %v1291
        %1293 = vdwg.mxu0
        %1294 = vmatprep.subr.bf16.mxu0 %v1056
        %1295 = vmatpush1.bf16.msra.mxu0 %v1055
        %1296 = vmatprep.subr.bf16.mxu0 %v1064
        %1297 = vmatpush1.bf16.msra.mxu0 %v1063
        %1298 = vmatprep.subr.bf16.mxu0 %v1072
        %1299 = vmatpush1.bf16.msra.mxu0 %v1071
        %1300 = vmatprep.subr.bf16.mxu0 %v1080
        %1301 = vmatpush1.bf16.msra.mxu0 %v1079
        %1302 = vmatprep.subr.bf16.mxu0 %v1088
        %1303 = vmatpush1.bf16.msra.mxu0 %v1087
        %1304 = vmatprep.subr.bf16.mxu0 %v1096
        %1305 = vmatpush1.bf16.msra.mxu0 %v1095
        %1306 = vmatprep.subr.bf16.mxu0 %v1104
        %1307 = vmatpush1.bf16.msra.mxu0 %v1103
        %1308 = vmatprep.subr.bf16.mxu0 %v1112
        %1309 = vmatpush1.bf16.msra.mxu0 %v1111
        %1310 = vmatprep.subr.bf16.mxu0 0
        %1311 = vmatpush1.bf16.msra.mxu0 0
        %1312 = vmatprep.subr.bf16.mxu0 0
        %1313 = vmatpush1.bf16.msra.mxu0 0
        %1314 = vmatprep.subr.bf16.mxu0 0
        %1315 = vmatpush1.bf16.msra.mxu0 0
        %1316 = vmatprep.subr.bf16.mxu0 0
        %1317 = vmatpush1.bf16.msra.mxu0 0
        %1318 = vmatprep.subr.bf16.mxu0 0
        %1319 = vmatpush1.bf16.msra.mxu0 0
        %1320 = vmatprep.subr.bf16.mxu0 0
        %1321 = vmatpush1.bf16.msra.mxu0 0
        %1322 = vmatprep.subr.bf16.mxu0 0
        %1323 = vmatpush1.bf16.msra.mxu0 0
        %1324 = vmatprep.subr.bf16.mxu0 0
        %1325 = vmatpush1.bf16.msra.mxu0 0
        %1326 = vmatprep.mubr.bf16.mxu0 0
        %1327 = vmatmul.mubr.bf16.gmra.mrb[0].mxu0 %v812
        %v1328 = vpop.f32.mrb[0].mxu0
        %v1329 = vadd.f32 %v832, %v1328
        %v1330 = vpop.f32.mrb[0].mxu0
        %v1331 = vadd.f32 %v836, %v1330
        %v1332 = vpop.f32.mrb[0].mxu0
        %v1333 = vadd.f32 %v832, %v1332
        %v1334 = vpop.f32.mrb[0].mxu0
        %v1335 = vadd.f32 %v836, %v1334
        %1336 = vmatprep.mubr.bf16.mxu0 0
        %1337 = vmatmul.mubr.bf16.gmra.mrb[0].mxu0 %v813
        %v1338 = vpop.f32.mrb[0].mxu0
        %v1339 = vadd.f32 %v832, %v1338
        %v1340 = vpop.f32.mrb[0].mxu0
        %v1341 = vadd.f32 %v836, %v1340
        %v1342 = vpop.f32.mrb[0].mxu0
        %v1343 = vadd.f32 %v832, %v1342
        %v1344 = vpop.f32.mrb[0].mxu0
        %v1345 = vadd.f32 %v836, %v1344
        %1346 = vmatprep.mubr.bf16.mxu0 0
        %1347 = vmatmul.mubr.bf16.gmra.mrb[0].mxu0 %v814
        %v1348 = vpop.f32.mrb[0].mxu0
        %v1349 = vadd.f32 %v832, %v1348
        %v1350 = vpop.f32.mrb[0].mxu0
        %v1351 = vadd.f32 %v836, %v1350
        %v1352 = vpop.f32.mrb[0].mxu0
        %v1353 = vadd.f32 %v832, %v1352
        %v1354 = vpop.f32.mrb[0].mxu0
        %v1355 = vadd.f32 %v836, %v1354
        %1356 = vmatprep.mubr.bf16.mxu0 0
        %1357 = vmatmul.mubr.bf16.gmra.mrb[0].mxu0 %v815
        %v1358 = vpop.f32.mrb[0].mxu0
        %v1359 = vadd.f32 %v832, %v1358
        %v1360 = vpop.f32.mrb[0].mxu0
        %v1361 = vadd.f32 %v836, %v1360
        %v1362 = vpop.f32.mrb[0].mxu0
        %v1363 = vadd.f32 %v832, %v1362
        %v1364 = vpop.f32.mrb[0].mxu0
        %v1365 = vadd.f32 %v836, %v1364
        %1366 = vmatprep.mubr.bf16.mxu0 0
        %1367 = vmatmul.mubr.bf16.gmra.mrb[0].mxu0 %v816
        %v1368 = vpop.f32.mrb[0].mxu0
        %v1369 = vadd.f32 %v832, %v1368
        %v1370 = vpop.f32.mrb[0].mxu0
        %v1371 = vadd.f32 %v836, %v1370
        %v1372 = vpop.f32.mrb[0].mxu0
        %v1373 = vadd.f32 %v832, %v1372
        %v1374 = vpop.f32.mrb[0].mxu0
        %v1375 = vadd.f32 %v836, %v1374
        %1376 = vmatprep.mubr.bf16.mxu0 0
        %1377 = vmatmul.mubr.bf16.gmra.mrb[0].mxu0 %v817
        %v1378 = vpop.f32.mrb[0].mxu0
        %v1379 = vadd.f32 %v832, %v1378
        %v1380 = vpop.f32.mrb[0].mxu0
        %v1381 = vadd.f32 %v836, %v1380
        %v1382 = vpop.f32.mrb[0].mxu0
        %v1383 = vadd.f32 %v832, %v1382
        %v1384 = vpop.f32.mrb[0].mxu0
        %v1385 = vadd.f32 %v836, %v1384
        %1386 = vmatprep.mubr.bf16.mxu0 0
        %1387 = vmatmul.mubr.bf16.gmra.mrb[0].mxu0 %v818
        %v1388 = vpop.f32.mrb[0].mxu0
        %v1389 = vadd.f32 %v832, %v1388
        %v1390 = vpop.f32.mrb[0].mxu0
        %v1391 = vadd.f32 %v836, %v1390
        %v1392 = vpop.f32.mrb[0].mxu0
        %v1393 = vadd.f32 %v832, %v1392
        %v1394 = vpop.f32.mrb[0].mxu0
        %v1395 = vadd.f32 %v836, %v1394
        %1396 = vmatprep.mubr.bf16.mxu0 0
        %1397 = vmatmul.mubr.bf16.gmra.mrb[0].mxu0 %v819
        %v1398 = vpop.f32.mrb[0].mxu0
        %v1399 = vadd.f32 %v832, %v1398
        %v1400 = vpop.f32.mrb[0].mxu0
        %v1401 = vadd.f32 %v836, %v1400
        %v1402 = vpop.f32.mrb[0].mxu0
        %v1403 = vadd.f32 %v832, %v1402
        %v1404 = vpop.f32.mrb[0].mxu0
        %v1405 = vadd.f32 %v836, %v1404
        %1406 = vdwg.mxu0
        %1407 = vmatprep.subr.bf16.mxu0 %v1058
        %1408 = vmatpush1.bf16.msra.mxu0 %v1057
        %1409 = vmatprep.subr.bf16.mxu0 %v1066
        %1410 = vmatpush1.bf16.msra.mxu0 %v1065
        %1411 = vmatprep.subr.bf16.mxu0 %v1074
        %1412 = vmatpush1.bf16.msra.mxu0 %v1073
        %1413 = vmatprep.subr.bf16.mxu0 %v1082
        %1414 = vmatpush1.bf16.msra.mxu0 %v1081
        %1415 = vmatprep.subr.bf16.mxu0 %v1090
        %1416 = vmatpush1.bf16.msra.mxu0 %v1089
        %1417 = vmatprep.subr.bf16.mxu0 %v1098
        %1418 = vmatpush1.bf16.msra.mxu0 %v1097
        %1419 = vmatprep.subr.bf16.mxu0 %v1106
        %1420 = vmatpush1.bf16.msra.mxu0 %v1105
        %1421 = vmatprep.subr.bf16.mxu0 %v1114
        %1422 = vmatpush1.bf16.msra.mxu0 %v1113
        %1423 = vmatprep.subr.bf16.mxu0 0
        %1424 = vmatpush1.bf16.msra.mxu0 0
        %1425 = vmatprep.subr.bf16.mxu0 0
        %1426 = vmatpush1.bf16.msra.mxu0 0
        %1427 = vmatprep.subr.bf16.mxu0 0
        %1428 = vmatpush1.bf16.msra.mxu0 0
        %1429 = vmatprep.subr.bf16.mxu0 0
        %1430 = vmatpush1.bf16.msra.mxu0 0
        %1431 = vmatprep.subr.bf16.mxu0 0
        %1432 = vmatpush1.bf16.msra.mxu0 0
        %1433 = vmatprep.subr.bf16.mxu0 0
        %1434 = vmatpush1.bf16.msra.mxu0 0
        %1435 = vmatprep.subr.bf16.mxu0 0
        %1436 = vmatpush1.bf16.msra.mxu0 0
        %1437 = vmatprep.subr.bf16.mxu0 0
        %1438 = vmatpush1.bf16.msra.mxu0 0
        %1439 = vmatprep.mubr.bf16.mxu0 0
        %1440 = vmatmul.mubr.bf16.gmra.mrb[0].mxu0 %v812
        %v1441 = vpop.f32.mrb[0].mxu0
        %v1442 = vadd.f32 %v840, %v1441
        %v1443 = vpop.f32.mrb[0].mxu0
        %v1444 = vadd.f32 %v844, %v1443
        %v1445 = vpop.f32.mrb[0].mxu0
        %v1446 = vadd.f32 %v840, %v1445
        %v1447 = vpop.f32.mrb[0].mxu0
        %v1448 = vadd.f32 %v844, %v1447
        %1449 = vmatprep.mubr.bf16.mxu0 0
        %1450 = vmatmul.mubr.bf16.gmra.mrb[0].mxu0 %v813
        %v1451 = vpop.f32.mrb[0].mxu0
        %v1452 = vadd.f32 %v840, %v1451
        %v1453 = vpop.f32.mrb[0].mxu0
        %v1454 = vadd.f32 %v844, %v1453
        %v1455 = vpop.f32.mrb[0].mxu0
        %v1456 = vadd.f32 %v840, %v1455
        %v1457 = vpop.f32.mrb[0].mxu0
        %v1458 = vadd.f32 %v844, %v1457
        %1459 = vmatprep.mubr.bf16.mxu0 0
        %1460 = vmatmul.mubr.bf16.gmra.mrb[0].mxu0 %v814
        %v1461 = vpop.f32.mrb[0].mxu0
        %v1462 = vadd.f32 %v840, %v1461
        %v1463 = vpop.f32.mrb[0].mxu0
        %v1464 = vadd.f32 %v844, %v1463
        %v1465 = vpop.f32.mrb[0].mxu0
        %v1466 = vadd.f32 %v840, %v1465
        %v1467 = vpop.f32.mrb[0].mxu0
        %v1468 = vadd.f32 %v844, %v1467
        %1469 = vmatprep.mubr.bf16.mxu0 0
        %1470 = vmatmul.mubr.bf16.gmra.mrb[0].mxu0 %v815
        %v1471 = vpop.f32.mrb[0].mxu0
        %v1472 = vadd.f32 %v840, %v1471
        %v1473 = vpop.f32.mrb[0].mxu0
        %v1474 = vadd.f32 %v844, %v1473
        %v1475 = vpop.f32.mrb[0].mxu0
        %v1476 = vadd.f32 %v840, %v1475
        %v1477 = vpop.f32.mrb[0].mxu0
        %v1478 = vadd.f32 %v844, %v1477
        %1479 = vmatprep.mubr.bf16.mxu0 0
        %1480 = vmatmul.mubr.bf16.gmra.mrb[0].mxu0 %v816
        %v1481 = vpop.f32.mrb[0].mxu0
        %v1482 = vadd.f32 %v840, %v1481
        %v1483 = vpop.f32.mrb[0].mxu0
        %v1484 = vadd.f32 %v844, %v1483
        %v1485 = vpop.f32.mrb[0].mxu0
        %v1486 = vadd.f32 %v840, %v1485
        %v1487 = vpop.f32.mrb[0].mxu0
        %v1488 = vadd.f32 %v844, %v1487
        %1489 = vmatprep.mubr.bf16.mxu0 0
        %1490 = vmatmul.mubr.bf16.gmra.mrb[0].mxu0 %v817
        %v1491 = vpop.f32.mrb[0].mxu0
        %v1492 = vadd.f32 %v840, %v1491
        %v1493 = vpop.f32.mrb[0].mxu0
        %v1494 = vadd.f32 %v844, %v1493
        %v1495 = vpop.f32.mrb[0].mxu0
        %v1496 = vadd.f32 %v840, %v1495
        %v1497 = vpop.f32.mrb[0].mxu0
        %v1498 = vadd.f32 %v844, %v1497
        %1499 = vmatprep.mubr.bf16.mxu0 0
        %1500 = vmatmul.mubr.bf16.gmra.mrb[0].mxu0 %v818
        %v1501 = vpop.f32.mrb[0].mxu0
        %v1502 = vadd.f32 %v840, %v1501
        %v1503 = vpop.f32.mrb[0].mxu0
        %v1504 = vadd.f32 %v844, %v1503
        %v1505 = vpop.f32.mrb[0].mxu0
        %v1506 = vadd.f32 %v840, %v1505
        %v1507 = vpop.f32.mrb[0].mxu0
        %v1508 = vadd.f32 %v844, %v1507
        %1509 = vmatprep.mubr.bf16.mxu0 0
        %1510 = vmatmul.mubr.bf16.gmra.mrb[0].mxu0 %v819
        %v1511 = vpop.f32.mrb[0].mxu0
        %v1512 = vadd.f32 %v840, %v1511
        %v1513 = vpop.f32.mrb[0].mxu0
        %v1514 = vadd.f32 %v844, %v1513
        %v1515 = vpop.f32.mrb[0].mxu0
        %v1516 = vadd.f32 %v840, %v1515
        %v1517 = vpop.f32.mrb[0].mxu0
        %v1518 = vadd.f32 %v844, %v1517
        %1519 = vdwg.mxu0
        %1520 = vmatprep.subr.bf16.mxu0 %v1060
        %1521 = vmatpush1.bf16.msra.mxu0 %v1059
        %1522 = vmatprep.subr.bf16.mxu0 %v1068
        %1523 = vmatpush1.bf16.msra.mxu0 %v1067
        %1524 = vmatprep.subr.bf16.mxu0 %v1076
        %1525 = vmatpush1.bf16.msra.mxu0 %v1075
        %1526 = vmatprep.subr.bf16.mxu0 %v1084
        %1527 = vmatpush1.bf16.msra.mxu0 %v1083
        %1528 = vmatprep.subr.bf16.mxu0 %v1092
        %1529 = vmatpush1.bf16.msra.mxu0 %v1091
        %1530 = vmatprep.subr.bf16.mxu0 %v1100
        %1531 = vmatpush1.bf16.msra.mxu0 %v1099
        %1532 = vmatprep.subr.bf16.mxu0 %v1108
        %1533 = vmatpush1.bf16.msra.mxu0 %v1107
        %1534 = vmatprep.subr.bf16.mxu0 %v1116
        %1535 = vmatpush1.bf16.msra.mxu0 %v1115
        %1536 = vmatprep.subr.bf16.mxu0 0
        %1537 = vmatpush1.bf16.msra.mxu0 0
        %1538 = vmatprep.subr.bf16.mxu0 0
        %1539 = vmatpush1.bf16.msra.mxu0 0
        %1540 = vmatprep.subr.bf16.mxu0 0
        %1541 = vmatpush1.bf16.msra.mxu0 0
        %1542 = vmatprep.subr.bf16.mxu0 0
        %1543 = vmatpush1.bf16.msra.mxu0 0
        %1544 = vmatprep.subr.bf16.mxu0 0
        %1545 = vmatpush1.bf16.msra.mxu0 0
        %1546 = vmatprep.subr.bf16.mxu0 0
        %1547 = vmatpush1.bf16.msra.mxu0 0
        %1548 = vmatprep.subr.bf16.mxu0 0
        %1549 = vmatpush1.bf16.msra.mxu0 0
        %1550 = vmatprep.subr.bf16.mxu0 0
        %1551 = vmatpush1.bf16.msra.mxu0 0
        %1552 = vmatprep.mubr.bf16.mxu0 0
        %1553 = vmatmul.mubr.bf16.gmra.mrb[0].mxu0 %v812
        %v1554 = vpop.f32.mrb[0].mxu0
        %v1555 = vadd.f32 %v848, %v1554
        %v1556 = vpop.f32.mrb[0].mxu0
        %v1557 = vadd.f32 %v852, %v1556
        %v1558 = vpop.f32.mrb[0].mxu0
        %v1559 = vadd.f32 %v848, %v1558
        %v1560 = vpop.f32.mrb[0].mxu0
        %v1561 = vadd.f32 %v852, %v1560
        %1562 = vmatprep.mubr.bf16.mxu0 0
        %1563 = vmatmul.mubr.bf16.gmra.mrb[0].mxu0 %v813
        %v1564 = vpop.f32.mrb[0].mxu0
        %v1565 = vadd.f32 %v848, %v1564
        %v1566 = vpop.f32.mrb[0].mxu0
        %v1567 = vadd.f32 %v852, %v1566
        %v1568 = vpop.f32.mrb[0].mxu0
        %v1569 = vadd.f32 %v848, %v1568
        %v1570 = vpop.f32.mrb[0].mxu0
        %v1571 = vadd.f32 %v852, %v1570
        %1572 = vmatprep.mubr.bf16.mxu0 0
        %1573 = vmatmul.mubr.bf16.gmra.mrb[0].mxu0 %v814
        %v1574 = vpop.f32.mrb[0].mxu0
        %v1575 = vadd.f32 %v848, %v1574
        %v1576 = vpop.f32.mrb[0].mxu0
        %v1577 = vadd.f32 %v852, %v1576
        %v1578 = vpop.f32.mrb[0].mxu0
        %v1579 = vadd.f32 %v848, %v1578
        %v1580 = vpop.f32.mrb[0].mxu0
        %v1581 = vadd.f32 %v852, %v1580
        %1582 = vmatprep.mubr.bf16.mxu0 0
        %1583 = vmatmul.mubr.bf16.gmra.mrb[0].mxu0 %v815
        %v1584 = vpop.f32.mrb[0].mxu0
        %v1585 = vadd.f32 %v848, %v1584
        %v1586 = vpop.f32.mrb[0].mxu0
        %v1587 = vadd.f32 %v852, %v1586
        %v1588 = vpop.f32.mrb[0].mxu0
        %v1589 = vadd.f32 %v848, %v1588
        %v1590 = vpop.f32.mrb[0].mxu0
        %v1591 = vadd.f32 %v852, %v1590
        %1592 = vmatprep.mubr.bf16.mxu0 0
        %1593 = vmatmul.mubr.bf16.gmra.mrb[0].mxu0 %v816
        %v1594 = vpop.f32.mrb[0].mxu0
        %v1595 = vadd.f32 %v848, %v1594
        %v1596 = vpop.f32.mrb[0].mxu0
        %v1597 = vadd.f32 %v852, %v1596
        %v1598 = vpop.f32.mrb[0].mxu0
        %v1599 = vadd.f32 %v848, %v1598
        %v1600 = vpop.f32.mrb[0].mxu0
        %v1601 = vadd.f32 %v852, %v1600
        %1602 = vmatprep.mubr.bf16.mxu0 0
        %1603 = vmatmul.mubr.bf16.gmra.mrb[0].mxu0 %v817
        %v1604 = vpop.f32.mrb[0].mxu0
        %v1605 = vadd.f32 %v848, %v1604
        %v1606 = vpop.f32.mrb[0].mxu0
        %v1607 = vadd.f32 %v852, %v1606
        %v1608 = vpop.f32.mrb[0].mxu0
        %v1609 = vadd.f32 %v848, %v1608
        %v1610 = vpop.f32.mrb[0].mxu0
        %v1611 = vadd.f32 %v852, %v1610
        %1612 = vmatprep.mubr.bf16.mxu0 0
        %1613 = vmatmul.mubr.bf16.gmra.mrb[0].mxu0 %v818
        %v1614 = vpop.f32.mrb[0].mxu0
        %v1615 = vadd.f32 %v848, %v1614
        %v1616 = vpop.f32.mrb[0].mxu0
        %v1617 = vadd.f32 %v852, %v1616
        %v1618 = vpop.f32.mrb[0].mxu0
        %v1619 = vadd.f32 %v848, %v1618
        %v1620 = vpop.f32.mrb[0].mxu0
        %v1621 = vadd.f32 %v852, %v1620
        %1622 = vmatprep.mubr.bf16.mxu0 0
        %1623 = vmatmul.mubr.bf16.gmra.mrb[0].mxu0 %v819
        %v1624 = vpop.f32.mrb[0].mxu0
        %v1625 = vadd.f32 %v848, %v1624
        %v1626 = vpop.f32.mrb[0].mxu0
        %v1627 = vadd.f32 %v852, %v1626
        %v1628 = vpop.f32.mrb[0].mxu0
        %v1629 = vadd.f32 %v848, %v1628
        %v1630 = vpop.f32.mrb[0].mxu0
        %v1631 = vadd.f32 %v852, %v1630
        %1632 = vdwg.mxu0
        %v1633 = vmax.f32 %v1216, 0.0
        %v1634 = vmax.f32 %v1218, 0.0
        %v1635 = vmax.f32 %v1329, 0.0
        %v1636 = vmax.f32 %v1331, 0.0
        %v1637 = vmax.f32 %v1442, 0.0
        %v1638 = vmax.f32 %v1444, 0.0
        %v1639 = vmax.f32 %v1555, 0.0
        %v1640 = vmax.f32 %v1557, 0.0
        %v1641 = vmax.f32 %v1220, 0.0
        %v1642 = vmax.f32 %v1222, 0.0
        %v1643 = vmax.f32 %v1333, 0.0
        %v1644 = vmax.f32 %v1335, 0.0
        %v1645 = vmax.f32 %v1446, 0.0
        %v1646 = vmax.f32 %v1448, 0.0
        %v1647 = vmax.f32 %v1559, 0.0
        %v1648 = vmax.f32 %v1561, 0.0
        %v1649 = vmax.f32 %v1226, 0.0
        %v1650 = vmax.f32 %v1228, 0.0
        %v1651 = vmax.f32 %v1339, 0.0
        %v1652 = vmax.f32 %v1341, 0.0
        %v1653 = vmax.f32 %v1452, 0.0
        %v1654 = vmax.f32 %v1454, 0.0
        %v1655 = vmax.f32 %v1565, 0.0
        %v1656 = vmax.f32 %v1567, 0.0
        %v1657 = vmax.f32 %v1230, 0.0
        %v1658 = vmax.f32 %v1232, 0.0
        %v1659 = vmax.f32 %v1343, 0.0
        %v1660 = vmax.f32 %v1345, 0.0
        %v1661 = vmax.f32 %v1456, 0.0
        %v1662 = vmax.f32 %v1458, 0.0
        %v1663 = vmax.f32 %v1569, 0.0
        %v1664 = vmax.f32 %v1571, 0.0
        %v1665 = vmax.f32 %v1236, 0.0
        %v1666 = vmax.f32 %v1238, 0.0
        %v1667 = vmax.f32 %v1349, 0.0
        %v1668 = vmax.f32 %v1351, 0.0
        %v1669 = vmax.f32 %v1462, 0.0
        %v1670 = vmax.f32 %v1464, 0.0
        %v1671 = vmax.f32 %v1575, 0.0
        %v1672 = vmax.f32 %v1577, 0.0
        %v1673 = vmax.f32 %v1240, 0.0
        %v1674 = vmax.f32 %v1242, 0.0
        %v1675 = vmax.f32 %v1353, 0.0
        %v1676 = vmax.f32 %v1355, 0.0
        %v1677 = vmax.f32 %v1466, 0.0
        %v1678 = vmax.f32 %v1468, 0.0
        %v1679 = vmax.f32 %v1579, 0.0
        %v1680 = vmax.f32 %v1581, 0.0
        %v1681 = vmax.f32 %v1246, 0.0
        %v1682 = vmax.f32 %v1248, 0.0
        %v1683 = vmax.f32 %v1359, 0.0
        %v1684 = vmax.f32 %v1361, 0.0
        %v1685 = vmax.f32 %v1472, 0.0
        %v1686 = vmax.f32 %v1474, 0.0
        %v1687 = vmax.f32 %v1585, 0.0
        %v1688 = vmax.f32 %v1587, 0.0
        %v1689 = vmax.f32 %v1250, 0.0
        %v1690 = vmax.f32 %v1252, 0.0
        %v1691 = vmax.f32 %v1363, 0.0
        %v1692 = vmax.f32 %v1365, 0.0
        %v1693 = vmax.f32 %v1476, 0.0
        %v1694 = vmax.f32 %v1478, 0.0
        %v1695 = vmax.f32 %v1589, 0.0
        %v1696 = vmax.f32 %v1591, 0.0
        %v1697 = vmax.f32 %v1256, 0.0
        %v1698 = vmax.f32 %v1258, 0.0
        %v1699 = vmax.f32 %v1369, 0.0
        %v1700 = vmax.f32 %v1371, 0.0
        %v1701 = vmax.f32 %v1482, 0.0
        %v1702 = vmax.f32 %v1484, 0.0
        %v1703 = vmax.f32 %v1595, 0.0
        %v1704 = vmax.f32 %v1597, 0.0
        %v1705 = vmax.f32 %v1260, 0.0
        %v1706 = vmax.f32 %v1262, 0.0
        %v1707 = vmax.f32 %v1373, 0.0
        %v1708 = vmax.f32 %v1375, 0.0
        %v1709 = vmax.f32 %v1486, 0.0
        %v1710 = vmax.f32 %v1488, 0.0
        %v1711 = vmax.f32 %v1599, 0.0
        %v1712 = vmax.f32 %v1601, 0.0
        %v1713 = vmax.f32 %v1266, 0.0
        %v1714 = vmax.f32 %v1268, 0.0
        %v1715 = vmax.f32 %v1379, 0.0
        %v1716 = vmax.f32 %v1381, 0.0
        %v1717 = vmax.f32 %v1492, 0.0
        %v1718 = vmax.f32 %v1494, 0.0
        %v1719 = vmax.f32 %v1605, 0.0
        %v1720 = vmax.f32 %v1607, 0.0
        %v1721 = vmax.f32 %v1270, 0.0
        %v1722 = vmax.f32 %v1272, 0.0
        %v1723 = vmax.f32 %v1383, 0.0
        %v1724 = vmax.f32 %v1385, 0.0
        %v1725 = vmax.f32 %v1496, 0.0
        %v1726 = vmax.f32 %v1498, 0.0
        %v1727 = vmax.f32 %v1609, 0.0
        %v1728 = vmax.f32 %v1611, 0.0
        %v1729 = vmax.f32 %v1276, 0.0
        %v1730 = vmax.f32 %v1278, 0.0
        %v1731 = vmax.f32 %v1389, 0.0
        %v1732 = vmax.f32 %v1391, 0.0
        %v1733 = vmax.f32 %v1502, 0.0
        %v1734 = vmax.f32 %v1504, 0.0
        %v1735 = vmax.f32 %v1615, 0.0
        %v1736 = vmax.f32 %v1617, 0.0
        %v1737 = vmax.f32 %v1280, 0.0
        %v1738 = vmax.f32 %v1282, 0.0
        %v1739 = vmax.f32 %v1393, 0.0
        %v1740 = vmax.f32 %v1395, 0.0
        %v1741 = vmax.f32 %v1506, 0.0
        %v1742 = vmax.f32 %v1508, 0.0
        %v1743 = vmax.f32 %v1619, 0.0
        %v1744 = vmax.f32 %v1621, 0.0
        %v1745 = vmax.f32 %v1286, 0.0
        %v1746 = vmax.f32 %v1288, 0.0
        %v1747 = vmax.f32 %v1399, 0.0
        %v1748 = vmax.f32 %v1401, 0.0
        %v1749 = vmax.f32 %v1512, 0.0
        %v1750 = vmax.f32 %v1514, 0.0
        %v1751 = vmax.f32 %v1625, 0.0
        %v1752 = vmax.f32 %v1627, 0.0
        %v1753 = vmax.f32 %v1290, 0.0
        %v1754 = vmax.f32 %v1292, 0.0
        %v1755 = vmax.f32 %v1403, 0.0
        %v1756 = vmax.f32 %v1405, 0.0
        %v1757 = vmax.f32 %v1516, 0.0
        %v1758 = vmax.f32 %v1518, 0.0
        %v1759 = vmax.f32 %v1629, 0.0
        %v1760 = vmax.f32 %v1631, 0.0
        %v1761 = vmax.f32 %v1633, %v1641
        %v1762 = vmax.f32 %v1761, %v1649
        %v1763 = vmax.f32 %v1762, %v1657
        %v1764 = vmax.f32 %v1763, %v1665
        %v1765 = vmax.f32 %v1764, %v1673
        %v1766 = vmax.f32 %v1765, %v1681
        %v1767 = vmax.f32 %v1766, %v1689
        %v1768 = vmax.f32 %v1767, %v1697
        %v1769 = vmax.f32 %v1768, %v1705
        %v1770 = vmax.f32 %v1769, %v1713
        %v1771 = vmax.f32 %v1770, %v1721
        %v1772 = vmax.f32 %v1771, %v1729
        %v1773 = vmax.f32 %v1772, %v1737
        %v1774 = vmax.f32 %v1773, %v1745
        %v1775 = vmax.f32 %v1774, %v1753
        %v1776 = vrot.slane %v1775, 4
        %v1777 = vmax.f32 %v1775, %v1776
        %v1778 = vrot.slane %v1777, 2
        %v1779 = vmax.f32 %v1777, %v1778
        %v1780 = vrot.slane %v1779, 1
        %v1781 = vmax.f32 %v1779, %v1780
        %v1782 = vmax.f32 %v1634, %v1642
        %v1783 = vmax.f32 %v1782, %v1650
        %v1784 = vmax.f32 %v1783, %v1658
        %v1785 = vmax.f32 %v1784, %v1666
        %v1786 = vmax.f32 %v1785, %v1674
        %v1787 = vmax.f32 %v1786, %v1682
        %v1788 = vmax.f32 %v1787, %v1690
        %v1789 = vmax.f32 %v1788, %v1698
        %v1790 = vmax.f32 %v1789, %v1706
        %v1791 = vmax.f32 %v1790, %v1714
        %v1792 = vmax.f32 %v1791, %v1722
        %v1793 = vmax.f32 %v1792, %v1730
        %v1794 = vmax.f32 %v1793, %v1738
        %v1795 = vmax.f32 %v1794, %v1746
        %v1796 = vmax.f32 %v1795, %v1754
        %v1797 = vrot.slane %v1796, 4
        %v1798 = vmax.f32 %v1796, %v1797
        %v1799 = vrot.slane %v1798, 2
        %v1800 = vmax.f32 %v1798, %v1799
        %v1801 = vrot.slane %v1800, 1
        %v1802 = vmax.f32 %v1800, %v1801
        %v1803 = vmax.f32 %v1635, %v1643
        %v1804 = vmax.f32 %v1803, %v1651
        %v1805 = vmax.f32 %v1804, %v1659
        %v1806 = vmax.f32 %v1805, %v1667
        %v1807 = vmax.f32 %v1806, %v1675
        %v1808 = vmax.f32 %v1807, %v1683
        %v1809 = vmax.f32 %v1808, %v1691
        %v1810 = vmax.f32 %v1809, %v1699
        %v1811 = vmax.f32 %v1810, %v1707
        %v1812 = vmax.f32 %v1811, %v1715
        %v1813 = vmax.f32 %v1812, %v1723
        %v1814 = vmax.f32 %v1813, %v1731
        %v1815 = vmax.f32 %v1814, %v1739
        %v1816 = vmax.f32 %v1815, %v1747
        %v1817 = vmax.f32 %v1816, %v1755
        %v1818 = vrot.slane %v1817, 4
        %v1819 = vmax.f32 %v1817, %v1818
        %v1820 = vrot.slane %v1819, 2
        %v1821 = vmax.f32 %v1819, %v1820
        %v1822 = vrot.slane %v1821, 1
        %v1823 = vmax.f32 %v1821, %v1822
        %v1824 = vmax.f32 %v1636, %v1644
        %v1825 = vmax.f32 %v1824, %v1652
        %v1826 = vmax.f32 %v1825, %v1660
        %v1827 = vmax.f32 %v1826, %v1668
        %v1828 = vmax.f32 %v1827, %v1676
        %v1829 = vmax.f32 %v1828, %v1684
        %v1830 = vmax.f32 %v1829, %v1692
        %v1831 = vmax.f32 %v1830, %v1700
        %v1832 = vmax.f32 %v1831, %v1708
        %v1833 = vmax.f32 %v1832, %v1716
        %v1834 = vmax.f32 %v1833, %v1724
        %v1835 = vmax.f32 %v1834, %v1732
        %v1836 = vmax.f32 %v1835, %v1740
        %v1837 = vmax.f32 %v1836, %v1748
        %v1838 = vmax.f32 %v1837, %v1756
        %v1839 = vrot.slane %v1838, 4
        %v1840 = vmax.f32 %v1838, %v1839
        %v1841 = vrot.slane %v1840, 2
        %v1842 = vmax.f32 %v1840, %v1841
        %v1843 = vrot.slane %v1842, 1
        %v1844 = vmax.f32 %v1842, %v1843
        %v1845 = vmax.f32 %v1637, %v1645
        %v1846 = vmax.f32 %v1845, %v1653
        %v1847 = vmax.f32 %v1846, %v1661
        %v1848 = vmax.f32 %v1847, %v1669
        %v1849 = vmax.f32 %v1848, %v1677
        %v1850 = vmax.f32 %v1849, %v1685
        %v1851 = vmax.f32 %v1850, %v1693
        %v1852 = vmax.f32 %v1851, %v1701
        %v1853 = vmax.f32 %v1852, %v1709
        %v1854 = vmax.f32 %v1853, %v1717
        %v1855 = vmax.f32 %v1854, %v1725
        %v1856 = vmax.f32 %v1855, %v1733
        %v1857 = vmax.f32 %v1856, %v1741
        %v1858 = vmax.f32 %v1857, %v1749
        %v1859 = vmax.f32 %v1858, %v1757
        %v1860 = vrot.slane %v1859, 4
        %v1861 = vmax.f32 %v1859, %v1860
        %v1862 = vrot.slane %v1861, 2
        %v1863 = vmax.f32 %v1861, %v1862
        %v1864 = vrot.slane %v1863, 1
        %v1865 = vmax.f32 %v1863, %v1864
        %v1866 = vmax.f32 %v1638, %v1646
        %v1867 = vmax.f32 %v1866, %v1654
        %v1868 = vmax.f32 %v1867, %v1662
        %v1869 = vmax.f32 %v1868, %v1670
        %v1870 = vmax.f32 %v1869, %v1678
        %v1871 = vmax.f32 %v1870, %v1686
        %v1872 = vmax.f32 %v1871, %v1694
        %v1873 = vmax.f32 %v1872, %v1702
        %v1874 = vmax.f32 %v1873, %v1710
        %v1875 = vmax.f32 %v1874, %v1718
        %v1876 = vmax.f32 %v1875, %v1726
        %v1877 = vmax.f32 %v1876, %v1734
        %v1878 = vmax.f32 %v1877, %v1742
        %v1879 = vmax.f32 %v1878, %v1750
        %v1880 = vmax.f32 %v1879, %v1758
        %v1881 = vrot.slane %v1880, 4
        %v1882 = vmax.f32 %v1880, %v1881
        %v1883 = vrot.slane %v1882, 2
        %v1884 = vmax.f32 %v1882, %v1883
        %v1885 = vrot.slane %v1884, 1
        %v1886 = vmax.f32 %v1884, %v1885
        %v1887 = vmax.f32 %v1639, %v1647
        %v1888 = vmax.f32 %v1887, %v1655
        %v1889 = vmax.f32 %v1888, %v1663
        %v1890 = vmax.f32 %v1889, %v1671
        %v1891 = vmax.f32 %v1890, %v1679
        %v1892 = vmax.f32 %v1891, %v1687
        %v1893 = vmax.f32 %v1892, %v1695
        %v1894 = vmax.f32 %v1893, %v1703
        %v1895 = vmax.f32 %v1894, %v1711
        %v1896 = vmax.f32 %v1895, %v1719
        %v1897 = vmax.f32 %v1896, %v1727
        %v1898 = vmax.f32 %v1897, %v1735
        %v1899 = vmax.f32 %v1898, %v1743
        %v1900 = vmax.f32 %v1899, %v1751
        %v1901 = vmax.f32 %v1900, %v1759
        %v1902 = vrot.slane %v1901, 4
        %v1903 = vmax.f32 %v1901, %v1902
        %v1904 = vrot.slane %v1903, 2
        %v1905 = vmax.f32 %v1903, %v1904
        %v1906 = vrot.slane %v1905, 1
        %v1907 = vmax.f32 %v1905, %v1906
        %v1908 = vmax.f32 %v1640, %v1648
        %v1909 = vmax.f32 %v1908, %v1656
        %v1910 = vmax.f32 %v1909, %v1664
        %v1911 = vmax.f32 %v1910, %v1672
        %v1912 = vmax.f32 %v1911, %v1680
        %v1913 = vmax.f32 %v1912, %v1688
        %v1914 = vmax.f32 %v1913, %v1696
        %v1915 = vmax.f32 %v1914, %v1704
        %v1916 = vmax.f32 %v1915, %v1712
        %v1917 = vmax.f32 %v1916, %v1720
        %v1918 = vmax.f32 %v1917, %v1728
        %v1919 = vmax.f32 %v1918, %v1736
        %v1920 = vmax.f32 %v1919, %v1744
        %v1921 = vmax.f32 %v1920, %v1752
        %v1922 = vmax.f32 %v1921, %v1760
        %v1923 = vrot.slane %v1922, 4
        %v1924 = vmax.f32 %v1922, %v1923
        %v1925 = vrot.slane %v1924, 2
        %v1926 = vmax.f32 %v1924, %v1925
        %v1927 = vrot.slane %v1926, 1
        %v1928 = vmax.f32 %v1926, %v1927
        %v1929 = vld [vmem:[#allocation2] ss:$2 sm:$0xff]
        %v1938 = vcombine.low %v1781, %v1802
        %v1939 = vcombine.low %v1823, %v1844
        %v1940 = vcombine.low %v1865, %v1886
        %v1941 = vcombine.low %v1907, %v1928
        %v1943 = vunpack.c.l.s4 1966171168
        %v1944 = vunpack.c.0.s8 %v1943
        %v1945 = vlaneseq
        %v1946 = vshrl.u32 %v1945, 7
        %v1947 = vsub.s32 %v1944, %v1946
        %v1948 = vrot.slane %v1938, %v1947
        %v1950 = vunpack.c.l.s4 1966171168
        %v1951 = vunpack.c.0.s8 %v1950
        %v1952 = vlaneseq
        %v1953 = vshrl.u32 %v1952, 7
        %v1954 = vsub.s32 %v1951, %v1953
        %v1955 = vrot.slane %v1939, %v1954
        %v1957 = vunpack.c.l.s4 1966171168
        %v1958 = vunpack.c.0.s8 %v1957
        %v1959 = vlaneseq
        %v1960 = vshrl.u32 %v1959, 7
        %v1961 = vsub.s32 %v1958, %v1960
        %v1962 = vrot.slane %v1940, %v1961
        %v1964 = vunpack.c.l.s4 1966171168
        %v1965 = vunpack.c.0.s8 %v1964
        %v1966 = vlaneseq
        %v1967 = vshrl.u32 %v1966, 7
        %v1968 = vsub.s32 %v1965, %v1967
        %v1969 = vrot.slane %v1941, %v1968
        %v1970 = vcombine.low %v1948, %v1955
        %v1971 = vcombine.low %v1962, %v1969
        %v1973 = vunpack.c.l.s4 1966171168
        %v1974 = vunpack.c.0.s8 %v1973
        %v1975 = vlaneseq
        %v1976 = vshrl.u32 %v1975, 7
        %v1977 = vsub.s32 %v1974, %v1976
        %v1978 = vrot.slane %v1970, %v1977
        %v1980 = vunpack.c.l.s4 1966171168
        %v1981 = vunpack.c.0.s8 %v1980
        %v1982 = vlaneseq
        %v1983 = vshrl.u32 %v1982, 7
        %v1984 = vsub.s32 %v1981, %v1983
        %v1985 = vrot.slane %v1971, %v1984
        %v1986 = vcombine.low %v1978, %v1985
        %v1988 = vmax.f32 %v1929, %v1986
        %1989 = vst [vmem:[#allocation2] ss:$2 sm:$0xff] %v1988
        %s1990 = scalar_lea.vmem %s312, 64 [#allocation3]
        %v1991 = vld [vmem:[%s1990] sm:$0xff]
        %v1992 = vld [vmem:[%s1990 + $0x8] sm:$0xff]
        %v1993 = vld [vmem:[%s1990 + $0x10] sm:$0xff]
        %v1994 = vld [vmem:[%s1990 + $0x18] sm:$0xff]
        %v1995 = vld [vmem:[%s1990 + $0x20] sm:$0xff]
        %v1996 = vld [vmem:[%s1990 + $0x28] sm:$0xff]
        %v1997 = vld [vmem:[%s1990 + $0x30] sm:$0xff]
        %v1998 = vld [vmem:[%s1990 + $0x38] sm:$0xff]
        %v1999 = vpack.c.bf16 %v1992, %v1991
        %v2000 = vpack.c.bf16 %v1994, %v1993
        %v2001 = vpack.c.bf16 %v1996, %v1995
        %v2002 = vpack.c.bf16 %v1998, %v1997
        %2003 = vxpose.xlu0.c.b16.start [1/8] %v1999, 128
        %2004 = vxpose.xlu0.c.b16.cont [2/8] %v2000, 128
        %2005 = vxpose.xlu0.c.b16.cont [3/8] %v2001, 128
        %2006 = vxpose.xlu0.c.b16.cont [4/8] %v2002, 128
        %2007 = vxpose.xlu0.c.b16.cont [5/8] 0, 128
        %2008 = vxpose.xlu0.c.b16.cont [6/8] 0, 128
        %2009 = vxpose.xlu0.c.b16.cont [7/8] 0, 128
        %2010 = vxpose.xlu0.c.b16.end [8/8] 0, 128
        %v2011 = vpop.trf.xlu0
        %v2012 = vpop.trf.xlu0
        %v2013 = vpop.trf.xlu0
        %v2014 = vpop.trf.xlu0
        %v2015 = vpop.trf.xlu0
        %v2016 = vpop.trf.xlu0
        %v2017 = vpop.trf.xlu0
        %v2018 = vpop.trf.xlu0
        %v2020 = vsel %vm499, %v2011, 0
        %v2023 = vsel %vm499, %v2012, 0
        %v2026 = vsel %vm499, %v2013, 0
        %v2029 = vsel %vm499, %v2014, 0
        %v2032 = vsel %vm499, %v2015, 0
        %v2035 = vsel %vm499, %v2016, 0
        %v2038 = vsel %vm499, %v2017, 0
        %v2041 = vsel %vm499, %v2018, 0
        %2043 = vmatprep.subr.bf16.mxu0 0
        %2044 = vmatpush1.bf16.msra.mxu0 %v491
        %2045 = vmatprep.subr.bf16.mxu0 0
        %2046 = vmatpush1.bf16.msra.mxu0 %v492
        %2047 = vmatprep.subr.bf16.mxu0 0
        %2048 = vmatpush1.bf16.msra.mxu0 %v493
        %2049 = vmatprep.subr.bf16.mxu0 0
        %2050 = vmatpush1.bf16.msra.mxu0 %v494
        %2051 = vmatprep.subr.bf16.mxu0 0
        %2052 = vmatpush1.bf16.msra.mxu0 0
        %2053 = vmatprep.subr.bf16.mxu0 0
        %2054 = vmatpush1.bf16.msra.mxu0 0
        %2055 = vmatprep.subr.bf16.mxu0 0
        %2056 = vmatpush1.bf16.msra.mxu0 0
        %2057 = vmatprep.subr.bf16.mxu0 0
        %2058 = vmatpush1.bf16.msra.mxu0 0
        %2059 = vmatprep.subr.bf16.mxu0 0
        %2060 = vmatpush1.bf16.msra.mxu0 0
        %2061 = vmatprep.subr.bf16.mxu0 0
        %2062 = vmatpush1.bf16.msra.mxu0 0
        %2063 = vmatprep.subr.bf16.mxu0 0
        %2064 = vmatpush1.bf16.msra.mxu0 0
        %2065 = vmatprep.subr.bf16.mxu0 0
        %2066 = vmatpush1.bf16.msra.mxu0 0
        %2067 = vmatprep.subr.bf16.mxu0 0
        %2068 = vmatpush1.bf16.msra.mxu0 0
        %2069 = vmatprep.subr.bf16.mxu0 0
        %2070 = vmatpush1.bf16.msra.mxu0 0
        %2071 = vmatprep.subr.bf16.mxu0 0
        %2072 = vmatpush1.bf16.msra.mxu0 0
        %2073 = vmatprep.subr.bf16.mxu0 0
        %2074 = vmatpush1.bf16.msra.mxu0 0
        %2075 = vmatprep.mubr.bf16.mxu0 0
        %2076 = vmatmul.mubr.bf16.gmra.mrb[0].mxu0 %v2020
        %v2077 = vpop.f32.mrb[0].mxu0
        %v2078 = vadd.f32 %v457, %v2077
        %v2079 = vpop.f32.mrb[0].mxu0
        %v2080 = vpop.f32.mrb[0].mxu0
        %v2081 = vadd.f32 %v457, %v2080
        %v2082 = vpop.f32.mrb[0].mxu0
        %2083 = vmatprep.mubr.bf16.mxu0 0
        %2084 = vmatmul.mubr.bf16.gmra.mrb[0].mxu0 %v2023
        %v2085 = vpop.f32.mrb[0].mxu0
        %v2086 = vadd.f32 %v457, %v2085
        %v2087 = vpop.f32.mrb[0].mxu0
        %v2088 = vpop.f32.mrb[0].mxu0
        %v2089 = vadd.f32 %v457, %v2088
        %v2090 = vpop.f32.mrb[0].mxu0
        %2091 = vmatprep.mubr.bf16.mxu0 0
        %2092 = vmatmul.mubr.bf16.gmra.mrb[0].mxu0 %v2026
        %v2093 = vpop.f32.mrb[0].mxu0
        %v2094 = vadd.f32 %v457, %v2093
        %v2095 = vpop.f32.mrb[0].mxu0
        %v2096 = vpop.f32.mrb[0].mxu0
        %v2097 = vadd.f32 %v457, %v2096
        %v2098 = vpop.f32.mrb[0].mxu0
        %2099 = vmatprep.mubr.bf16.mxu0 0
        %2100 = vmatmul.mubr.bf16.gmra.mrb[0].mxu0 %v2029
        %v2101 = vpop.f32.mrb[0].mxu0
        %v2102 = vadd.f32 %v457, %v2101
        %v2103 = vpop.f32.mrb[0].mxu0
        %v2104 = vpop.f32.mrb[0].mxu0
        %v2105 = vadd.f32 %v457, %v2104
        %v2106 = vpop.f32.mrb[0].mxu0
        %2107 = vmatprep.mubr.bf16.mxu0 0
        %2108 = vmatmul.mubr.bf16.gmra.mrb[0].mxu0 %v2032
        %v2109 = vpop.f32.mrb[0].mxu0
        %v2110 = vadd.f32 %v457, %v2109
        %v2111 = vpop.f32.mrb[0].mxu0
        %v2112 = vpop.f32.mrb[0].mxu0
        %v2113 = vadd.f32 %v457, %v2112
        %v2114 = vpop.f32.mrb[0].mxu0
        %2115 = vmatprep.mubr.bf16.mxu0 0
        %2116 = vmatmul.mubr.bf16.gmra.mrb[0].mxu0 %v2035
        %v2117 = vpop.f32.mrb[0].mxu0
        %v2118 = vadd.f32 %v457, %v2117
        %v2119 = vpop.f32.mrb[0].mxu0
        %v2120 = vpop.f32.mrb[0].mxu0
        %v2121 = vadd.f32 %v457, %v2120
        %v2122 = vpop.f32.mrb[0].mxu0
        %2123 = vmatprep.mubr.bf16.mxu0 0
        %2124 = vmatmul.mubr.bf16.gmra.mrb[0].mxu0 %v2038
        %v2125 = vpop.f32.mrb[0].mxu0
        %v2126 = vadd.f32 %v457, %v2125
        %v2127 = vpop.f32.mrb[0].mxu0
        %v2128 = vpop.f32.mrb[0].mxu0
        %v2129 = vadd.f32 %v457, %v2128
        %v2130 = vpop.f32.mrb[0].mxu0
        %2131 = vmatprep.mubr.bf16.mxu0 0
        %2132 = vmatmul.mubr.bf16.gmra.mrb[0].mxu0 %v2041
        %v2133 = vpop.f32.mrb[0].mxu0
        %v2134 = vadd.f32 %v457, %v2133
        %v2135 = vpop.f32.mrb[0].mxu0
        %v2136 = vpop.f32.mrb[0].mxu0
        %v2137 = vadd.f32 %v457, %v2136
        %v2138 = vpop.f32.mrb[0].mxu0
        %2139 = vdwg.mxu0
        %v2140 = vmax.f32 %v2078, 0.0
        %v2141 = vmax.f32 %v2081, 0.0
        %v2142 = vmax.f32 %v2086, 0.0
        %v2143 = vmax.f32 %v2089, 0.0
        %v2144 = vmax.f32 %v2094, 0.0
        %v2145 = vmax.f32 %v2097, 0.0
        %v2146 = vmax.f32 %v2102, 0.0
        %v2147 = vmax.f32 %v2105, 0.0
        %v2148 = vmax.f32 %v2110, 0.0
        %v2149 = vmax.f32 %v2113, 0.0
        %v2150 = vmax.f32 %v2118, 0.0
        %v2151 = vmax.f32 %v2121, 0.0
        %v2152 = vmax.f32 %v2126, 0.0
        %v2153 = vmax.f32 %v2129, 0.0
        %v2154 = vmax.f32 %v2134, 0.0
        %v2155 = vmax.f32 %v2137, 0.0
        %v2156 = vpack.c.bf16 %v2141, %v2140
        %v2157 = vpack.c.bf16 %v2143, %v2142
        %v2158 = vpack.c.bf16 %v2145, %v2144
        %v2159 = vpack.c.bf16 %v2147, %v2146
        %v2160 = vpack.c.bf16 %v2149, %v2148
        %v2161 = vpack.c.bf16 %v2151, %v2150
        %v2162 = vpack.c.bf16 %v2153, %v2152
        %v2163 = vpack.c.bf16 %v2155, %v2154
        %v2165 = vsel %vm499, %v2156, 0
        %v2168 = vsel %vm499, %v2157, 0
        %v2171 = vsel %vm499, %v2158, 0
        %v2174 = vsel %vm499, %v2159, 0
        %v2177 = vsel %vm499, %v2160, 0
        %v2180 = vsel %vm499, %v2161, 0
        %v2183 = vsel %vm499, %v2162, 0
        %v2186 = vsel %vm499, %v2163, 0
        %2188 = vmatprep.subr.bf16.mxu0 0
        %2189 = vmatpush1.bf16.msra.mxu0 %v667
        %2190 = vmatprep.subr.bf16.mxu0 0
        %2191 = vmatpush1.bf16.msra.mxu0 %v668
        %2192 = vmatprep.subr.bf16.mxu0 0
        %2193 = vmatpush1.bf16.msra.mxu0 %v669
        %2194 = vmatprep.subr.bf16.mxu0 0
        %2195 = vmatpush1.bf16.msra.mxu0 %v670
        %2196 = vmatprep.subr.bf16.mxu0 0
        %2197 = vmatpush1.bf16.msra.mxu0 0
        %2198 = vmatprep.subr.bf16.mxu0 0
        %2199 = vmatpush1.bf16.msra.mxu0 0
        %2200 = vmatprep.subr.bf16.mxu0 0
        %2201 = vmatpush1.bf16.msra.mxu0 0
        %2202 = vmatprep.subr.bf16.mxu0 0
        %2203 = vmatpush1.bf16.msra.mxu0 0
        %2204 = vmatprep.subr.bf16.mxu0 0
        %2205 = vmatpush1.bf16.msra.mxu0 0
        %2206 = vmatprep.subr.bf16.mxu0 0
        %2207 = vmatpush1.bf16.msra.mxu0 0
        %2208 = vmatprep.subr.bf16.mxu0 0
        %2209 = vmatpush1.bf16.msra.mxu0 0
        %2210 = vmatprep.subr.bf16.mxu0 0
        %2211 = vmatpush1.bf16.msra.mxu0 0
        %2212 = vmatprep.subr.bf16.mxu0 0
        %2213 = vmatpush1.bf16.msra.mxu0 0
        %2214 = vmatprep.subr.bf16.mxu0 0
        %2215 = vmatpush1.bf16.msra.mxu0 0
        %2216 = vmatprep.subr.bf16.mxu0 0
        %2217 = vmatpush1.bf16.msra.mxu0 0
        %2218 = vmatprep.subr.bf16.mxu0 0
        %2219 = vmatpush1.bf16.msra.mxu0 0
        %2220 = vmatprep.mubr.bf16.mxu0 0
        %2221 = vmatmul.mubr.bf16.gmra.mrb[0].mxu0 %v2165
        %v2222 = vpop.f32.mrb[0].mxu0
        %v2223 = vadd.f32 %v649, %v2222
        %v2224 = vpop.f32.mrb[0].mxu0
        %v2225 = vpop.f32.mrb[0].mxu0
        %v2226 = vadd.f32 %v649, %v2225
        %v2227 = vpop.f32.mrb[0].mxu0
        %2228 = vmatprep.mubr.bf16.mxu0 0
        %2229 = vmatmul.mubr.bf16.gmra.mrb[0].mxu0 %v2168
        %v2230 = vpop.f32.mrb[0].mxu0
        %v2231 = vadd.f32 %v649, %v2230
        %v2232 = vpop.f32.mrb[0].mxu0
        %v2233 = vpop.f32.mrb[0].mxu0
        %v2234 = vadd.f32 %v649, %v2233
        %v2235 = vpop.f32.mrb[0].mxu0
        %2236 = vmatprep.mubr.bf16.mxu0 0
        %2237 = vmatmul.mubr.bf16.gmra.mrb[0].mxu0 %v2171
        %v2238 = vpop.f32.mrb[0].mxu0
        %v2239 = vadd.f32 %v649, %v2238
        %v2240 = vpop.f32.mrb[0].mxu0
        %v2241 = vpop.f32.mrb[0].mxu0
        %v2242 = vadd.f32 %v649, %v2241
        %v2243 = vpop.f32.mrb[0].mxu0
        %2244 = vmatprep.mubr.bf16.mxu0 0
        %2245 = vmatmul.mubr.bf16.gmra.mrb[0].mxu0 %v2174
        %v2246 = vpop.f32.mrb[0].mxu0
        %v2247 = vadd.f32 %v649, %v2246
        %v2248 = vpop.f32.mrb[0].mxu0
        %v2249 = vpop.f32.mrb[0].mxu0
        %v2250 = vadd.f32 %v649, %v2249
        %v2251 = vpop.f32.mrb[0].mxu0
        %2252 = vmatprep.mubr.bf16.mxu0 0
        %2253 = vmatmul.mubr.bf16.gmra.mrb[0].mxu0 %v2177
        %v2254 = vpop.f32.mrb[0].mxu0
        %v2255 = vadd.f32 %v649, %v2254
        %v2256 = vpop.f32.mrb[0].mxu0
        %v2257 = vpop.f32.mrb[0].mxu0
        %v2258 = vadd.f32 %v649, %v2257
        %v2259 = vpop.f32.mrb[0].mxu0
        %2260 = vmatprep.mubr.bf16.mxu0 0
        %2261 = vmatmul.mubr.bf16.gmra.mrb[0].mxu0 %v2180
        %v2262 = vpop.f32.mrb[0].mxu0
        %v2263 = vadd.f32 %v649, %v2262
        %v2264 = vpop.f32.mrb[0].mxu0
        %v2265 = vpop.f32.mrb[0].mxu0
        %v2266 = vadd.f32 %v649, %v2265
        %v2267 = vpop.f32.mrb[0].mxu0
        %2268 = vmatprep.mubr.bf16.mxu0 0
        %2269 = vmatmul.mubr.bf16.gmra.mrb[0].mxu0 %v2183
        %v2270 = vpop.f32.mrb[0].mxu0
        %v2271 = vadd.f32 %v649, %v2270
        %v2272 = vpop.f32.mrb[0].mxu0
        %v2273 = vpop.f32.mrb[0].mxu0
        %v2274 = vadd.f32 %v649, %v2273
        %v2275 = vpop.f32.mrb[0].mxu0
        %2276 = vmatprep.mubr.bf16.mxu0 0
        %2277 = vmatmul.mubr.bf16.gmra.mrb[0].mxu0 %v2186
        %v2278 = vpop.f32.mrb[0].mxu0
        %v2279 = vadd.f32 %v649, %v2278
        %v2280 = vpop.f32.mrb[0].mxu0
        %v2281 = vpop.f32.mrb[0].mxu0
        %v2282 = vadd.f32 %v649, %v2281
        %v2283 = vpop.f32.mrb[0].mxu0
        %2284 = vdwg.mxu0
        %v2285 = vmax.f32 %v2223, 0.0
        %v2286 = vmax.f32 %v2226, 0.0
        %v2287 = vmax.f32 %v2231, 0.0
        %v2288 = vmax.f32 %v2234, 0.0
        %v2289 = vmax.f32 %v2239, 0.0
        %v2290 = vmax.f32 %v2242, 0.0
        %v2291 = vmax.f32 %v2247, 0.0
        %v2292 = vmax.f32 %v2250, 0.0
        %v2293 = vmax.f32 %v2255, 0.0
        %v2294 = vmax.f32 %v2258, 0.0
        %v2295 = vmax.f32 %v2263, 0.0
        %v2296 = vmax.f32 %v2266, 0.0
        %v2297 = vmax.f32 %v2271, 0.0
        %v2298 = vmax.f32 %v2274, 0.0
        %v2299 = vmax.f32 %v2279, 0.0
        %v2300 = vmax.f32 %v2282, 0.0
        %v2301 = vpack.c.bf16 %v2286, %v2285
        %v2302 = vpack.c.bf16 %v2288, %v2287
        %v2303 = vpack.c.bf16 %v2290, %v2289
        %v2304 = vpack.c.bf16 %v2292, %v2291
        %v2305 = vpack.c.bf16 %v2294, %v2293
        %v2306 = vpack.c.bf16 %v2296, %v2295
        %v2307 = vpack.c.bf16 %v2298, %v2297
        %v2308 = vpack.c.bf16 %v2300, %v2299
        %2309 = vmatprep.subr.bf16.mxu0 %v1054
        %2310 = vmatpush1.bf16.msra.mxu0 %v1053
        %2311 = vmatprep.subr.bf16.mxu0 %v1062
        %2312 = vmatpush1.bf16.msra.mxu0 %v1061
        %2313 = vmatprep.subr.bf16.mxu0 %v1070
        %2314 = vmatpush1.bf16.msra.mxu0 %v1069
        %2315 = vmatprep.subr.bf16.mxu0 %v1078
        %2316 = vmatpush1.bf16.msra.mxu0 %v1077
        %2317 = vmatprep.subr.bf16.mxu0 %v1086
        %2318 = vmatpush1.bf16.msra.mxu0 %v1085
        %2319 = vmatprep.subr.bf16.mxu0 %v1094
        %2320 = vmatpush1.bf16.msra.mxu0 %v1093
        %2321 = vmatprep.subr.bf16.mxu0 %v1102
        %2322 = vmatpush1.bf16.msra.mxu0 %v1101
        %2323 = vmatprep.subr.bf16.mxu0 %v1110
        %2324 = vmatpush1.bf16.msra.mxu0 %v1109
        %2325 = vmatprep.subr.bf16.mxu0 0
        %2326 = vmatpush1.bf16.msra.mxu0 0
        %2327 = vmatprep.subr.bf16.mxu0 0
        %2328 = vmatpush1.bf16.msra.mxu0 0
        %2329 = vmatprep.subr.bf16.mxu0 0
        %2330 = vmatpush1.bf16.msra.mxu0 0
        %2331 = vmatprep.subr.bf16.mxu0 0
        %2332 = vmatpush1.bf16.msra.mxu0 0
        %2333 = vmatprep.subr.bf16.mxu0 0
        %2334 = vmatpush1.bf16.msra.mxu0 0
        %2335 = vmatprep.subr.bf16.mxu0 0
        %2336 = vmatpush1.bf16.msra.mxu0 0
        %2337 = vmatprep.subr.bf16.mxu0 0
        %2338 = vmatpush1.bf16.msra.mxu0 0
        %2339 = vmatprep.subr.bf16.mxu0 0
        %2340 = vmatpush1.bf16.msra.mxu0 0
        %2341 = vmatprep.mubr.bf16.mxu0 0
        %2342 = vmatmul.mubr.bf16.gmra.mrb[0].mxu0 %v2301
        %v2343 = vpop.f32.mrb[0].mxu0
        %v2344 = vadd.f32 %v824, %v2343
        %v2345 = vpop.f32.mrb[0].mxu0
        %v2346 = vadd.f32 %v828, %v2345
        %v2347 = vpop.f32.mrb[0].mxu0
        %v2348 = vadd.f32 %v824, %v2347
        %v2349 = vpop.f32.mrb[0].mxu0
        %v2350 = vadd.f32 %v828, %v2349
        %2351 = vmatprep.mubr.bf16.mxu0 0
        %2352 = vmatmul.mubr.bf16.gmra.mrb[0].mxu0 %v2302
        %v2353 = vpop.f32.mrb[0].mxu0
        %v2354 = vadd.f32 %v824, %v2353
        %v2355 = vpop.f32.mrb[0].mxu0
        %v2356 = vadd.f32 %v828, %v2355
        %v2357 = vpop.f32.mrb[0].mxu0
        %v2358 = vadd.f32 %v824, %v2357
        %v2359 = vpop.f32.mrb[0].mxu0
        %v2360 = vadd.f32 %v828, %v2359
        %2361 = vmatprep.mubr.bf16.mxu0 0
        %2362 = vmatmul.mubr.bf16.gmra.mrb[0].mxu0 %v2303
        %v2363 = vpop.f32.mrb[0].mxu0
        %v2364 = vadd.f32 %v824, %v2363
        %v2365 = vpop.f32.mrb[0].mxu0
        %v2366 = vadd.f32 %v828, %v2365
        %v2367 = vpop.f32.mrb[0].mxu0
        %v2368 = vadd.f32 %v824, %v2367
        %v2369 = vpop.f32.mrb[0].mxu0
        %v2370 = vadd.f32 %v828, %v2369
        %2371 = vmatprep.mubr.bf16.mxu0 0
        %2372 = vmatmul.mubr.bf16.gmra.mrb[0].mxu0 %v2304
        %v2373 = vpop.f32.mrb[0].mxu0
        %v2374 = vadd.f32 %v824, %v2373
        %v2375 = vpop.f32.mrb[0].mxu0
        %v2376 = vadd.f32 %v828, %v2375
        %v2377 = vpop.f32.mrb[0].mxu0
        %v2378 = vadd.f32 %v824, %v2377
        %v2379 = vpop.f32.mrb[0].mxu0
        %v2380 = vadd.f32 %v828, %v2379
        %2381 = vmatprep.mubr.bf16.mxu0 0
        %2382 = vmatmul.mubr.bf16.gmra.mrb[0].mxu0 %v2305
        %v2383 = vpop.f32.mrb[0].mxu0
        %v2384 = vadd.f32 %v824, %v2383
        %v2385 = vpop.f32.mrb[0].mxu0
        %v2386 = vadd.f32 %v828, %v2385
        %v2387 = vpop.f32.mrb[0].mxu0
        %v2388 = vadd.f32 %v824, %v2387
        %v2389 = vpop.f32.mrb[0].mxu0
        %v2390 = vadd.f32 %v828, %v2389
        %2391 = vmatprep.mubr.bf16.mxu0 0
        %2392 = vmatmul.mubr.bf16.gmra.mrb[0].mxu0 %v2306
        %v2393 = vpop.f32.mrb[0].mxu0
        %v2394 = vadd.f32 %v824, %v2393
        %v2395 = vpop.f32.mrb[0].mxu0
        %v2396 = vadd.f32 %v828, %v2395
        %v2397 = vpop.f32.mrb[0].mxu0
        %v2398 = vadd.f32 %v824, %v2397
        %v2399 = vpop.f32.mrb[0].mxu0
        %v2400 = vadd.f32 %v828, %v2399
        %2401 = vmatprep.mubr.bf16.mxu0 0
        %2402 = vmatmul.mubr.bf16.gmra.mrb[0].mxu0 %v2307
        %v2403 = vpop.f32.mrb[0].mxu0
        %v2404 = vadd.f32 %v824, %v2403
        %v2405 = vpop.f32.mrb[0].mxu0
        %v2406 = vadd.f32 %v828, %v2405
        %v2407 = vpop.f32.mrb[0].mxu0
        %v2408 = vadd.f32 %v824, %v2407
        %v2409 = vpop.f32.mrb[0].mxu0
        %v2410 = vadd.f32 %v828, %v2409
        %2411 = vmatprep.mubr.bf16.mxu0 0
        %2412 = vmatmul.mubr.bf16.gmra.mrb[0].mxu0 %v2308
        %v2413 = vpop.f32.mrb[0].mxu0
        %v2414 = vadd.f32 %v824, %v2413
        %v2415 = vpop.f32.mrb[0].mxu0
        %v2416 = vadd.f32 %v828, %v2415
        %v2417 = vpop.f32.mrb[0].mxu0
        %v2418 = vadd.f32 %v824, %v2417
        %v2419 = vpop.f32.mrb[0].mxu0
        %v2420 = vadd.f32 %v828, %v2419
        %2421 = vdwg.mxu0
        %2422 = vmatprep.subr.bf16.mxu0 %v1056
        %2423 = vmatpush1.bf16.msra.mxu0 %v1055
        %2424 = vmatprep.subr.bf16.mxu0 %v1064
        %2425 = vmatpush1.bf16.msra.mxu0 %v1063
        %2426 = vmatprep.subr.bf16.mxu0 %v1072
        %2427 = vmatpush1.bf16.msra.mxu0 %v1071
        %2428 = vmatprep.subr.bf16.mxu0 %v1080
        %2429 = vmatpush1.bf16.msra.mxu0 %v1079
        %2430 = vmatprep.subr.bf16.mxu0 %v1088
        %2431 = vmatpush1.bf16.msra.mxu0 %v1087
        %2432 = vmatprep.subr.bf16.mxu0 %v1096
        %2433 = vmatpush1.bf16.msra.mxu0 %v1095
        %2434 = vmatprep.subr.bf16.mxu0 %v1104
        %2435 = vmatpush1.bf16.msra.mxu0 %v1103
        %2436 = vmatprep.subr.bf16.mxu0 %v1112
        %2437 = vmatpush1.bf16.msra.mxu0 %v1111
        %2438 = vmatprep.subr.bf16.mxu0 0
        %2439 = vmatpush1.bf16.msra.mxu0 0
        %2440 = vmatprep.subr.bf16.mxu0 0
        %2441 = vmatpush1.bf16.msra.mxu0 0
        %2442 = vmatprep.subr.bf16.mxu0 0
        %2443 = vmatpush1.bf16.msra.mxu0 0
        %2444 = vmatprep.subr.bf16.mxu0 0
        %2445 = vmatpush1.bf16.msra.mxu0 0
        %2446 = vmatprep.subr.bf16.mxu0 0
        %2447 = vmatpush1.bf16.msra.mxu0 0
        %2448 = vmatprep.subr.bf16.mxu0 0
        %2449 = vmatpush1.bf16.msra.mxu0 0
        %2450 = vmatprep.subr.bf16.mxu0 0
        %2451 = vmatpush1.bf16.msra.mxu0 0
        %2452 = vmatprep.subr.bf16.mxu0 0
        %2453 = vmatpush1.bf16.msra.mxu0 0
        %2454 = vmatprep.mubr.bf16.mxu0 0
        %2455 = vmatmul.mubr.bf16.gmra.mrb[0].mxu0 %v2301
        %v2456 = vpop.f32.mrb[0].mxu0
        %v2457 = vadd.f32 %v832, %v2456
        %v2458 = vpop.f32.mrb[0].mxu0
        %v2459 = vadd.f32 %v836, %v2458
        %v2460 = vpop.f32.mrb[0].mxu0
        %v2461 = vadd.f32 %v832, %v2460
        %v2462 = vpop.f32.mrb[0].mxu0
        %v2463 = vadd.f32 %v836, %v2462
        %2464 = vmatprep.mubr.bf16.mxu0 0
        %2465 = vmatmul.mubr.bf16.gmra.mrb[0].mxu0 %v2302
        %v2466 = vpop.f32.mrb[0].mxu0
        %v2467 = vadd.f32 %v832, %v2466
        %v2468 = vpop.f32.mrb[0].mxu0
        %v2469 = vadd.f32 %v836, %v2468
        %v2470 = vpop.f32.mrb[0].mxu0
        %v2471 = vadd.f32 %v832, %v2470
        %v2472 = vpop.f32.mrb[0].mxu0
        %v2473 = vadd.f32 %v836, %v2472
        %2474 = vmatprep.mubr.bf16.mxu0 0
        %2475 = vmatmul.mubr.bf16.gmra.mrb[0].mxu0 %v2303
        %v2476 = vpop.f32.mrb[0].mxu0
        %v2477 = vadd.f32 %v832, %v2476
        %v2478 = vpop.f32.mrb[0].mxu0
        %v2479 = vadd.f32 %v836, %v2478
        %v2480 = vpop.f32.mrb[0].mxu0
        %v2481 = vadd.f32 %v832, %v2480
        %v2482 = vpop.f32.mrb[0].mxu0
        %v2483 = vadd.f32 %v836, %v2482
        %2484 = vmatprep.mubr.bf16.mxu0 0
        %2485 = vmatmul.mubr.bf16.gmra.mrb[0].mxu0 %v2304
        %v2486 = vpop.f32.mrb[0].mxu0
        %v2487 = vadd.f32 %v832, %v2486
        %v2488 = vpop.f32.mrb[0].mxu0
        %v2489 = vadd.f32 %v836, %v2488
        %v2490 = vpop.f32.mrb[0].mxu0
        %v2491 = vadd.f32 %v832, %v2490
        %v2492 = vpop.f32.mrb[0].mxu0
        %v2493 = vadd.f32 %v836, %v2492
        %2494 = vmatprep.mubr.bf16.mxu0 0
        %2495 = vmatmul.mubr.bf16.gmra.mrb[0].mxu0 %v2305
        %v2496 = vpop.f32.mrb[0].mxu0
        %v2497 = vadd.f32 %v832, %v2496
        %v2498 = vpop.f32.mrb[0].mxu0
        %v2499 = vadd.f32 %v836, %v2498
        %v2500 = vpop.f32.mrb[0].mxu0
        %v2501 = vadd.f32 %v832, %v2500
        %v2502 = vpop.f32.mrb[0].mxu0
        %v2503 = vadd.f32 %v836, %v2502
        %2504 = vmatprep.mubr.bf16.mxu0 0
        %2505 = vmatmul.mubr.bf16.gmra.mrb[0].mxu0 %v2306
        %v2506 = vpop.f32.mrb[0].mxu0
        %v2507 = vadd.f32 %v832, %v2506
        %v2508 = vpop.f32.mrb[0].mxu0
        %v2509 = vadd.f32 %v836, %v2508
        %v2510 = vpop.f32.mrb[0].mxu0
        %v2511 = vadd.f32 %v832, %v2510
        %v2512 = vpop.f32.mrb[0].mxu0
        %v2513 = vadd.f32 %v836, %v2512
        %2514 = vmatprep.mubr.bf16.mxu0 0
        %2515 = vmatmul.mubr.bf16.gmra.mrb[0].mxu0 %v2307
        %v2516 = vpop.f32.mrb[0].mxu0
        %v2517 = vadd.f32 %v832, %v2516
        %v2518 = vpop.f32.mrb[0].mxu0
        %v2519 = vadd.f32 %v836, %v2518
        %v2520 = vpop.f32.mrb[0].mxu0
        %v2521 = vadd.f32 %v832, %v2520
        %v2522 = vpop.f32.mrb[0].mxu0
        %v2523 = vadd.f32 %v836, %v2522
        %2524 = vmatprep.mubr.bf16.mxu0 0
        %2525 = vmatmul.mubr.bf16.gmra.mrb[0].mxu0 %v2308
        %v2526 = vpop.f32.mrb[0].mxu0
        %v2527 = vadd.f32 %v832, %v2526
        %v2528 = vpop.f32.mrb[0].mxu0
        %v2529 = vadd.f32 %v836, %v2528
        %v2530 = vpop.f32.mrb[0].mxu0
        %v2531 = vadd.f32 %v832, %v2530
        %v2532 = vpop.f32.mrb[0].mxu0
        %v2533 = vadd.f32 %v836, %v2532
        %2534 = vdwg.mxu0
        %2535 = vmatprep.subr.bf16.mxu0 %v1058
        %2536 = vmatpush1.bf16.msra.mxu0 %v1057
        %2537 = vmatprep.subr.bf16.mxu0 %v1066
        %2538 = vmatpush1.bf16.msra.mxu0 %v1065
        %2539 = vmatprep.subr.bf16.mxu0 %v1074
        %2540 = vmatpush1.bf16.msra.mxu0 %v1073
        %2541 = vmatprep.subr.bf16.mxu0 %v1082
        %2542 = vmatpush1.bf16.msra.mxu0 %v1081
        %2543 = vmatprep.subr.bf16.mxu0 %v1090
        %2544 = vmatpush1.bf16.msra.mxu0 %v1089
        %2545 = vmatprep.subr.bf16.mxu0 %v1098
        %2546 = vmatpush1.bf16.msra.mxu0 %v1097
        %2547 = vmatprep.subr.bf16.mxu0 %v1106
        %2548 = vmatpush1.bf16.msra.mxu0 %v1105
        %2549 = vmatprep.subr.bf16.mxu0 %v1114
        %2550 = vmatpush1.bf16.msra.mxu0 %v1113
        %2551 = vmatprep.subr.bf16.mxu0 0
        %2552 = vmatpush1.bf16.msra.mxu0 0
        %2553 = vmatprep.subr.bf16.mxu0 0
        %2554 = vmatpush1.bf16.msra.mxu0 0
        %2555 = vmatprep.subr.bf16.mxu0 0
        %2556 = vmatpush1.bf16.msra.mxu0 0
        %2557 = vmatprep.subr.bf16.mxu0 0
        %2558 = vmatpush1.bf16.msra.mxu0 0
        %2559 = vmatprep.subr.bf16.mxu0 0
        %2560 = vmatpush1.bf16.msra.mxu0 0
        %2561 = vmatprep.subr.bf16.mxu0 0
        %2562 = vmatpush1.bf16.msra.mxu0 0
        %2563 = vmatprep.subr.bf16.mxu0 0
        %2564 = vmatpush1.bf16.msra.mxu0 0
        %2565 = vmatprep.subr.bf16.mxu0 0
        %2566 = vmatpush1.bf16.msra.mxu0 0
        %2567 = vmatprep.mubr.bf16.mxu0 0
        %2568 = vmatmul.mubr.bf16.gmra.mrb[0].mxu0 %v2301
        %v2569 = vpop.f32.mrb[0].mxu0
        %v2570 = vadd.f32 %v840, %v2569
        %v2571 = vpop.f32.mrb[0].mxu0
        %v2572 = vadd.f32 %v844, %v2571
        %v2573 = vpop.f32.mrb[0].mxu0
        %v2574 = vadd.f32 %v840, %v2573
        %v2575 = vpop.f32.mrb[0].mxu0
        %v2576 = vadd.f32 %v844, %v2575
        %2577 = vmatprep.mubr.bf16.mxu0 0
        %2578 = vmatmul.mubr.bf16.gmra.mrb[0].mxu0 %v2302
        %v2579 = vpop.f32.mrb[0].mxu0
        %v2580 = vadd.f32 %v840, %v2579
        %v2581 = vpop.f32.mrb[0].mxu0
        %v2582 = vadd.f32 %v844, %v2581
        %v2583 = vpop.f32.mrb[0].mxu0
        %v2584 = vadd.f32 %v840, %v2583
        %v2585 = vpop.f32.mrb[0].mxu0
        %v2586 = vadd.f32 %v844, %v2585
        %2587 = vmatprep.mubr.bf16.mxu0 0
        %2588 = vmatmul.mubr.bf16.gmra.mrb[0].mxu0 %v2303
        %v2589 = vpop.f32.mrb[0].mxu0
        %v2590 = vadd.f32 %v840, %v2589
        %v2591 = vpop.f32.mrb[0].mxu0
        %v2592 = vadd.f32 %v844, %v2591
        %v2593 = vpop.f32.mrb[0].mxu0
        %v2594 = vadd.f32 %v840, %v2593
        %v2595 = vpop.f32.mrb[0].mxu0
        %v2596 = vadd.f32 %v844, %v2595
        %2597 = vmatprep.mubr.bf16.mxu0 0
        %2598 = vmatmul.mubr.bf16.gmra.mrb[0].mxu0 %v2304
        %v2599 = vpop.f32.mrb[0].mxu0
        %v2600 = vadd.f32 %v840, %v2599
        %v2601 = vpop.f32.mrb[0].mxu0
        %v2602 = vadd.f32 %v844, %v2601
        %v2603 = vpop.f32.mrb[0].mxu0
        %v2604 = vadd.f32 %v840, %v2603
        %v2605 = vpop.f32.mrb[0].mxu0
        %v2606 = vadd.f32 %v844, %v2605
        %2607 = vmatprep.mubr.bf16.mxu0 0
        %2608 = vmatmul.mubr.bf16.gmra.mrb[0].mxu0 %v2305
        %v2609 = vpop.f32.mrb[0].mxu0
        %v2610 = vadd.f32 %v840, %v2609
        %v2611 = vpop.f32.mrb[0].mxu0
        %v2612 = vadd.f32 %v844, %v2611
        %v2613 = vpop.f32.mrb[0].mxu0
        %v2614 = vadd.f32 %v840, %v2613
        %v2615 = vpop.f32.mrb[0].mxu0
        %v2616 = vadd.f32 %v844, %v2615
        %2617 = vmatprep.mubr.bf16.mxu0 0
        %2618 = vmatmul.mubr.bf16.gmra.mrb[0].mxu0 %v2306
        %v2619 = vpop.f32.mrb[0].mxu0
        %v2620 = vadd.f32 %v840, %v2619
        %v2621 = vpop.f32.mrb[0].mxu0
        %v2622 = vadd.f32 %v844, %v2621
        %v2623 = vpop.f32.mrb[0].mxu0
        %v2624 = vadd.f32 %v840, %v2623
        %v2625 = vpop.f32.mrb[0].mxu0
        %v2626 = vadd.f32 %v844, %v2625
        %2627 = vmatprep.mubr.bf16.mxu0 0
        %2628 = vmatmul.mubr.bf16.gmra.mrb[0].mxu0 %v2307
        %v2629 = vpop.f32.mrb[0].mxu0
        %v2630 = vadd.f32 %v840, %v2629
        %v2631 = vpop.f32.mrb[0].mxu0
        %v2632 = vadd.f32 %v844, %v2631
        %v2633 = vpop.f32.mrb[0].mxu0
        %v2634 = vadd.f32 %v840, %v2633
        %v2635 = vpop.f32.mrb[0].mxu0
        %v2636 = vadd.f32 %v844, %v2635
        %2637 = vmatprep.mubr.bf16.mxu0 0
        %2638 = vmatmul.mubr.bf16.gmra.mrb[0].mxu0 %v2308
        %v2639 = vpop.f32.mrb[0].mxu0
        %v2640 = vadd.f32 %v840, %v2639
        %v2641 = vpop.f32.mrb[0].mxu0
        %v2642 = vadd.f32 %v844, %v2641
        %v2643 = vpop.f32.mrb[0].mxu0
        %v2644 = vadd.f32 %v840, %v2643
        %v2645 = vpop.f32.mrb[0].mxu0
        %v2646 = vadd.f32 %v844, %v2645
        %2647 = vdwg.mxu0
        %2648 = vmatprep.subr.bf16.mxu0 %v1060
        %2649 = vmatpush1.bf16.msra.mxu0 %v1059
        %2650 = vmatprep.subr.bf16.mxu0 %v1068
        %2651 = vmatpush1.bf16.msra.mxu0 %v1067
        %2652 = vmatprep.subr.bf16.mxu0 %v1076
        %2653 = vmatpush1.bf16.msra.mxu0 %v1075
        %2654 = vmatprep.subr.bf16.mxu0 %v1084
        %2655 = vmatpush1.bf16.msra.mxu0 %v1083
        %2656 = vmatprep.subr.bf16.mxu0 %v1092
        %2657 = vmatpush1.bf16.msra.mxu0 %v1091
        %2658 = vmatprep.subr.bf16.mxu0 %v1100
        %2659 = vmatpush1.bf16.msra.mxu0 %v1099
        %2660 = vmatprep.subr.bf16.mxu0 %v1108
        %2661 = vmatpush1.bf16.msra.mxu0 %v1107
        %2662 = vmatprep.subr.bf16.mxu0 %v1116
        %2663 = vmatpush1.bf16.msra.mxu0 %v1115
        %2664 = vmatprep.subr.bf16.mxu0 0
        %2665 = vmatpush1.bf16.msra.mxu0 0
        %2666 = vmatprep.subr.bf16.mxu0 0
        %2667 = vmatpush1.bf16.msra.mxu0 0
        %2668 = vmatprep.subr.bf16.mxu0 0
        %2669 = vmatpush1.bf16.msra.mxu0 0
        %2670 = vmatprep.subr.bf16.mxu0 0
        %2671 = vmatpush1.bf16.msra.mxu0 0
        %2672 = vmatprep.subr.bf16.mxu0 0
        %2673 = vmatpush1.bf16.msra.mxu0 0
        %2674 = vmatprep.subr.bf16.mxu0 0
        %2675 = vmatpush1.bf16.msra.mxu0 0
        %2676 = vmatprep.subr.bf16.mxu0 0
        %2677 = vmatpush1.bf16.msra.mxu0 0
        %2678 = vmatprep.subr.bf16.mxu0 0
        %2679 = vmatpush1.bf16.msra.mxu0 0
        %2680 = vmatprep.mubr.bf16.mxu0 0
        %2681 = vmatmul.mubr.bf16.gmra.mrb[0].mxu0 %v2301
        %v2682 = vpop.f32.mrb[0].mxu0
        %v2683 = vadd.f32 %v848, %v2682
        %v2684 = vpop.f32.mrb[0].mxu0
        %v2685 = vadd.f32 %v852, %v2684
        %v2686 = vpop.f32.mrb[0].mxu0
        %v2687 = vadd.f32 %v848, %v2686
        %v2688 = vpop.f32.mrb[0].mxu0
        %v2689 = vadd.f32 %v852, %v2688
        %2690 = vmatprep.mubr.bf16.mxu0 0
        %2691 = vmatmul.mubr.bf16.gmra.mrb[0].mxu0 %v2302
        %v2692 = vpop.f32.mrb[0].mxu0
        %v2693 = vadd.f32 %v848, %v2692
        %v2694 = vpop.f32.mrb[0].mxu0
        %v2695 = vadd.f32 %v852, %v2694
        %v2696 = vpop.f32.mrb[0].mxu0
        %v2697 = vadd.f32 %v848, %v2696
        %v2698 = vpop.f32.mrb[0].mxu0
        %v2699 = vadd.f32 %v852, %v2698
        %2700 = vmatprep.mubr.bf16.mxu0 0
        %2701 = vmatmul.mubr.bf16.gmra.mrb[0].mxu0 %v2303
        %v2702 = vpop.f32.mrb[0].mxu0
        %v2703 = vadd.f32 %v848, %v2702
        %v2704 = vpop.f32.mrb[0].mxu0
        %v2705 = vadd.f32 %v852, %v2704
        %v2706 = vpop.f32.mrb[0].mxu0
        %v2707 = vadd.f32 %v848, %v2706
        %v2708 = vpop.f32.mrb[0].mxu0
        %v2709 = vadd.f32 %v852, %v2708
        %2710 = vmatprep.mubr.bf16.mxu0 0
        %2711 = vmatmul.mubr.bf16.gmra.mrb[0].mxu0 %v2304
        %v2712 = vpop.f32.mrb[0].mxu0
        %v2713 = vadd.f32 %v848, %v2712
        %v2714 = vpop.f32.mrb[0].mxu0
        %v2715 = vadd.f32 %v852, %v2714
        %v2716 = vpop.f32.mrb[0].mxu0
        %v2717 = vadd.f32 %v848, %v2716
        %v2718 = vpop.f32.mrb[0].mxu0
        %v2719 = vadd.f32 %v852, %v2718
        %2720 = vmatprep.mubr.bf16.mxu0 0
        %2721 = vmatmul.mubr.bf16.gmra.mrb[0].mxu0 %v2305
        %v2722 = vpop.f32.mrb[0].mxu0
        %v2723 = vadd.f32 %v848, %v2722
        %v2724 = vpop.f32.mrb[0].mxu0
        %v2725 = vadd.f32 %v852, %v2724
        %v2726 = vpop.f32.mrb[0].mxu0
        %v2727 = vadd.f32 %v848, %v2726
        %v2728 = vpop.f32.mrb[0].mxu0
        %v2729 = vadd.f32 %v852, %v2728
        %2730 = vmatprep.mubr.bf16.mxu0 0
        %2731 = vmatmul.mubr.bf16.gmra.mrb[0].mxu0 %v2306
        %v2732 = vpop.f32.mrb[0].mxu0
        %v2733 = vadd.f32 %v848, %v2732
        %v2734 = vpop.f32.mrb[0].mxu0
        %v2735 = vadd.f32 %v852, %v2734
        %v2736 = vpop.f32.mrb[0].mxu0
        %v2737 = vadd.f32 %v848, %v2736
        %v2738 = vpop.f32.mrb[0].mxu0
        %v2739 = vadd.f32 %v852, %v2738
        %2740 = vmatprep.mubr.bf16.mxu0 0
        %2741 = vmatmul.mubr.bf16.gmra.mrb[0].mxu0 %v2307
        %v2742 = vpop.f32.mrb[0].mxu0
        %v2743 = vadd.f32 %v848, %v2742
        %v2744 = vpop.f32.mrb[0].mxu0
        %v2745 = vadd.f32 %v852, %v2744
        %v2746 = vpop.f32.mrb[0].mxu0
        %v2747 = vadd.f32 %v848, %v2746
        %v2748 = vpop.f32.mrb[0].mxu0
        %v2749 = vadd.f32 %v852, %v2748
        %2750 = vmatprep.mubr.bf16.mxu0 0
        %2751 = vmatmul.mubr.bf16.gmra.mrb[0].mxu0 %v2308
        %v2752 = vpop.f32.mrb[0].mxu0
        %v2753 = vadd.f32 %v848, %v2752
        %v2754 = vpop.f32.mrb[0].mxu0
        %v2755 = vadd.f32 %v852, %v2754
        %v2756 = vpop.f32.mrb[0].mxu0
        %v2757 = vadd.f32 %v848, %v2756
        %v2758 = vpop.f32.mrb[0].mxu0
        %v2759 = vadd.f32 %v852, %v2758
        %2760 = vdwg.mxu0
        %v2761 = vmax.f32 %v2344, 0.0
        %v2762 = vmax.f32 %v2346, 0.0
        %v2763 = vmax.f32 %v2457, 0.0
        %v2764 = vmax.f32 %v2459, 0.0
        %v2765 = vmax.f32 %v2570, 0.0
        %v2766 = vmax.f32 %v2572, 0.0
        %v2767 = vmax.f32 %v2683, 0.0
        %v2768 = vmax.f32 %v2685, 0.0
        %v2769 = vmax.f32 %v2348, 0.0
        %v2770 = vmax.f32 %v2350, 0.0
        %v2771 = vmax.f32 %v2461, 0.0
        %v2772 = vmax.f32 %v2463, 0.0
        %v2773 = vmax.f32 %v2574, 0.0
        %v2774 = vmax.f32 %v2576, 0.0
        %v2775 = vmax.f32 %v2687, 0.0
        %v2776 = vmax.f32 %v2689, 0.0
        %v2777 = vmax.f32 %v2354, 0.0
        %v2778 = vmax.f32 %v2356, 0.0
        %v2779 = vmax.f32 %v2467, 0.0
        %v2780 = vmax.f32 %v2469, 0.0
        %v2781 = vmax.f32 %v2580, 0.0
        %v2782 = vmax.f32 %v2582, 0.0
        %v2783 = vmax.f32 %v2693, 0.0
        %v2784 = vmax.f32 %v2695, 0.0
        %v2785 = vmax.f32 %v2358, 0.0
        %v2786 = vmax.f32 %v2360, 0.0
        %v2787 = vmax.f32 %v2471, 0.0
        %v2788 = vmax.f32 %v2473, 0.0
        %v2789 = vmax.f32 %v2584, 0.0
        %v2790 = vmax.f32 %v2586, 0.0
        %v2791 = vmax.f32 %v2697, 0.0
        %v2792 = vmax.f32 %v2699, 0.0
        %v2793 = vmax.f32 %v2364, 0.0
        %v2794 = vmax.f32 %v2366, 0.0
        %v2795 = vmax.f32 %v2477, 0.0
        %v2796 = vmax.f32 %v2479, 0.0
        %v2797 = vmax.f32 %v2590, 0.0
        %v2798 = vmax.f32 %v2592, 0.0
        %v2799 = vmax.f32 %v2703, 0.0
        %v2800 = vmax.f32 %v2705, 0.0
        %v2801 = vmax.f32 %v2368, 0.0
        %v2802 = vmax.f32 %v2370, 0.0
        %v2803 = vmax.f32 %v2481, 0.0
        %v2804 = vmax.f32 %v2483, 0.0
        %v2805 = vmax.f32 %v2594, 0.0
        %v2806 = vmax.f32 %v2596, 0.0
        %v2807 = vmax.f32 %v2707, 0.0
        %v2808 = vmax.f32 %v2709, 0.0
        %v2809 = vmax.f32 %v2374, 0.0
        %v2810 = vmax.f32 %v2376, 0.0
        %v2811 = vmax.f32 %v2487, 0.0
        %v2812 = vmax.f32 %v2489, 0.0
        %v2813 = vmax.f32 %v2600, 0.0
        %v2814 = vmax.f32 %v2602, 0.0
        %v2815 = vmax.f32 %v2713, 0.0
        %v2816 = vmax.f32 %v2715, 0.0
        %v2817 = vmax.f32 %v2378, 0.0
        %v2818 = vmax.f32 %v2380, 0.0
        %v2819 = vmax.f32 %v2491, 0.0
        %v2820 = vmax.f32 %v2493, 0.0
        %v2821 = vmax.f32 %v2604, 0.0
        %v2822 = vmax.f32 %v2606, 0.0
        %v2823 = vmax.f32 %v2717, 0.0
        %v2824 = vmax.f32 %v2719, 0.0
        %v2825 = vmax.f32 %v2384, 0.0
        %v2826 = vmax.f32 %v2386, 0.0
        %v2827 = vmax.f32 %v2497, 0.0
        %v2828 = vmax.f32 %v2499, 0.0
        %v2829 = vmax.f32 %v2610, 0.0
        %v2830 = vmax.f32 %v2612, 0.0
        %v2831 = vmax.f32 %v2723, 0.0
        %v2832 = vmax.f32 %v2725, 0.0
        %v2833 = vmax.f32 %v2388, 0.0
        %v2834 = vmax.f32 %v2390, 0.0
        %v2835 = vmax.f32 %v2501, 0.0
        %v2836 = vmax.f32 %v2503, 0.0
        %v2837 = vmax.f32 %v2614, 0.0
        %v2838 = vmax.f32 %v2616, 0.0
        %v2839 = vmax.f32 %v2727, 0.0
        %v2840 = vmax.f32 %v2729, 0.0
        %v2841 = vmax.f32 %v2394, 0.0
        %v2842 = vmax.f32 %v2396, 0.0
        %v2843 = vmax.f32 %v2507, 0.0
        %v2844 = vmax.f32 %v2509, 0.0
        %v2845 = vmax.f32 %v2620, 0.0
        %v2846 = vmax.f32 %v2622, 0.0
        %v2847 = vmax.f32 %v2733, 0.0
        %v2848 = vmax.f32 %v2735, 0.0
        %v2849 = vmax.f32 %v2398, 0.0
        %v2850 = vmax.f32 %v2400, 0.0
        %v2851 = vmax.f32 %v2511, 0.0
        %v2852 = vmax.f32 %v2513, 0.0
        %v2853 = vmax.f32 %v2624, 0.0
        %v2854 = vmax.f32 %v2626, 0.0
        %v2855 = vmax.f32 %v2737, 0.0
        %v2856 = vmax.f32 %v2739, 0.0
        %v2857 = vmax.f32 %v2404, 0.0
        %v2858 = vmax.f32 %v2406, 0.0
        %v2859 = vmax.f32 %v2517, 0.0
        %v2860 = vmax.f32 %v2519, 0.0
        %v2861 = vmax.f32 %v2630, 0.0
        %v2862 = vmax.f32 %v2632, 0.0
        %v2863 = vmax.f32 %v2743, 0.0
        %v2864 = vmax.f32 %v2745, 0.0
        %v2865 = vmax.f32 %v2408, 0.0
        %v2866 = vmax.f32 %v2410, 0.0
        %v2867 = vmax.f32 %v2521, 0.0
        %v2868 = vmax.f32 %v2523, 0.0
        %v2869 = vmax.f32 %v2634, 0.0
        %v2870 = vmax.f32 %v2636, 0.0
        %v2871 = vmax.f32 %v2747, 0.0
        %v2872 = vmax.f32 %v2749, 0.0
        %v2873 = vmax.f32 %v2414, 0.0
        %v2874 = vmax.f32 %v2416, 0.0
        %v2875 = vmax.f32 %v2527, 0.0
        %v2876 = vmax.f32 %v2529, 0.0
        %v2877 = vmax.f32 %v2640, 0.0
        %v2878 = vmax.f32 %v2642, 0.0
        %v2879 = vmax.f32 %v2753, 0.0
        %v2880 = vmax.f32 %v2755, 0.0
        %v2881 = vmax.f32 %v2418, 0.0
        %v2882 = vmax.f32 %v2420, 0.0
        %v2883 = vmax.f32 %v2531, 0.0
        %v2884 = vmax.f32 %v2533, 0.0
        %v2885 = vmax.f32 %v2644, 0.0
        %v2886 = vmax.f32 %v2646, 0.0
        %v2887 = vmax.f32 %v2757, 0.0
        %v2888 = vmax.f32 %v2759, 0.0
        %v2889 = vmax.f32 %v2761, %v2769
        %v2890 = vmax.f32 %v2889, %v2777
        %v2891 = vmax.f32 %v2890, %v2785
        %v2892 = vmax.f32 %v2891, %v2793
        %v2893 = vmax.f32 %v2892, %v2801
        %v2894 = vmax.f32 %v2893, %v2809
        %v2895 = vmax.f32 %v2894, %v2817
        %v2896 = vmax.f32 %v2895, %v2825
        %v2897 = vmax.f32 %v2896, %v2833
        %v2898 = vmax.f32 %v2897, %v2841
        %v2899 = vmax.f32 %v2898, %v2849
        %v2900 = vmax.f32 %v2899, %v2857
        %v2901 = vmax.f32 %v2900, %v2865
        %v2902 = vmax.f32 %v2901, %v2873
        %v2903 = vmax.f32 %v2902, %v2881
        %v2904 = vrot.slane %v2903, 4
        %v2905 = vmax.f32 %v2903, %v2904
        %v2906 = vrot.slane %v2905, 2
        %v2907 = vmax.f32 %v2905, %v2906
        %v2908 = vrot.slane %v2907, 1
        %v2909 = vmax.f32 %v2907, %v2908
        %v2910 = vmax.f32 %v2762, %v2770
        %v2911 = vmax.f32 %v2910, %v2778
        %v2912 = vmax.f32 %v2911, %v2786
        %v2913 = vmax.f32 %v2912, %v2794
        %v2914 = vmax.f32 %v2913, %v2802
        %v2915 = vmax.f32 %v2914, %v2810
        %v2916 = vmax.f32 %v2915, %v2818
        %v2917 = vmax.f32 %v2916, %v2826
        %v2918 = vmax.f32 %v2917, %v2834
        %v2919 = vmax.f32 %v2918, %v2842
        %v2920 = vmax.f32 %v2919, %v2850
        %v2921 = vmax.f32 %v2920, %v2858
        %v2922 = vmax.f32 %v2921, %v2866
        %v2923 = vmax.f32 %v2922, %v2874
        %v2924 = vmax.f32 %v2923, %v2882
        %v2925 = vrot.slane %v2924, 4
        %v2926 = vmax.f32 %v2924, %v2925
        %v2927 = vrot.slane %v2926, 2
        %v2928 = vmax.f32 %v2926, %v2927
        %v2929 = vrot.slane %v2928, 1
        %v2930 = vmax.f32 %v2928, %v2929
        %v2931 = vmax.f32 %v2763, %v2771
        %v2932 = vmax.f32 %v2931, %v2779
        %v2933 = vmax.f32 %v2932, %v2787
        %v2934 = vmax.f32 %v2933, %v2795
        %v2935 = vmax.f32 %v2934, %v2803
        %v2936 = vmax.f32 %v2935, %v2811
        %v2937 = vmax.f32 %v2936, %v2819
        %v2938 = vmax.f32 %v2937, %v2827
        %v2939 = vmax.f32 %v2938, %v2835
        %v2940 = vmax.f32 %v2939, %v2843
        %v2941 = vmax.f32 %v2940, %v2851
        %v2942 = vmax.f32 %v2941, %v2859
        %v2943 = vmax.f32 %v2942, %v2867
        %v2944 = vmax.f32 %v2943, %v2875
        %v2945 = vmax.f32 %v2944, %v2883
        %v2946 = vrot.slane %v2945, 4
        %v2947 = vmax.f32 %v2945, %v2946
        %v2948 = vrot.slane %v2947, 2
        %v2949 = vmax.f32 %v2947, %v2948
        %v2950 = vrot.slane %v2949, 1
        %v2951 = vmax.f32 %v2949, %v2950
        %v2952 = vmax.f32 %v2764, %v2772
        %v2953 = vmax.f32 %v2952, %v2780
        %v2954 = vmax.f32 %v2953, %v2788
        %v2955 = vmax.f32 %v2954, %v2796
        %v2956 = vmax.f32 %v2955, %v2804
        %v2957 = vmax.f32 %v2956, %v2812
        %v2958 = vmax.f32 %v2957, %v2820
        %v2959 = vmax.f32 %v2958, %v2828
        %v2960 = vmax.f32 %v2959, %v2836
        %v2961 = vmax.f32 %v2960, %v2844
        %v2962 = vmax.f32 %v2961, %v2852
        %v2963 = vmax.f32 %v2962, %v2860
        %v2964 = vmax.f32 %v2963, %v2868
        %v2965 = vmax.f32 %v2964, %v2876
        %v2966 = vmax.f32 %v2965, %v2884
        %v2967 = vrot.slane %v2966, 4
        %v2968 = vmax.f32 %v2966, %v2967
        %v2969 = vrot.slane %v2968, 2
        %v2970 = vmax.f32 %v2968, %v2969
        %v2971 = vrot.slane %v2970, 1
        %v2972 = vmax.f32 %v2970, %v2971
        %v2973 = vmax.f32 %v2765, %v2773
        %v2974 = vmax.f32 %v2973, %v2781
        %v2975 = vmax.f32 %v2974, %v2789
        %v2976 = vmax.f32 %v2975, %v2797
        %v2977 = vmax.f32 %v2976, %v2805
        %v2978 = vmax.f32 %v2977, %v2813
        %v2979 = vmax.f32 %v2978, %v2821
        %v2980 = vmax.f32 %v2979, %v2829
        %v2981 = vmax.f32 %v2980, %v2837
        %v2982 = vmax.f32 %v2981, %v2845
        %v2983 = vmax.f32 %v2982, %v2853
        %v2984 = vmax.f32 %v2983, %v2861
        %v2985 = vmax.f32 %v2984, %v2869
        %v2986 = vmax.f32 %v2985, %v2877
        %v2987 = vmax.f32 %v2986, %v2885
        %v2988 = vrot.slane %v2987, 4
        %v2989 = vmax.f32 %v2987, %v2988
        %v2990 = vrot.slane %v2989, 2
        %v2991 = vmax.f32 %v2989, %v2990
        %v2992 = vrot.slane %v2991, 1
        %v2993 = vmax.f32 %v2991, %v2992
        %v2994 = vmax.f32 %v2766, %v2774
        %v2995 = vmax.f32 %v2994, %v2782
        %v2996 = vmax.f32 %v2995, %v2790
        %v2997 = vmax.f32 %v2996, %v2798
        %v2998 = vmax.f32 %v2997, %v2806
        %v2999 = vmax.f32 %v2998, %v2814
        %v3000 = vmax.f32 %v2999, %v2822
        %v3001 = vmax.f32 %v3000, %v2830
        %v3002 = vmax.f32 %v3001, %v2838
        %v3003 = vmax.f32 %v3002, %v2846
        %v3004 = vmax.f32 %v3003, %v2854
        %v3005 = vmax.f32 %v3004, %v2862
        %v3006 = vmax.f32 %v3005, %v2870
        %v3007 = vmax.f32 %v3006, %v2878
        %v3008 = vmax.f32 %v3007, %v2886
        %v3009 = vrot.slane %v3008, 4
        %v3010 = vmax.f32 %v3008, %v3009
        %v3011 = vrot.slane %v3010, 2
        %v3012 = vmax.f32 %v3010, %v3011
        %v3013 = vrot.slane %v3012, 1
        %v3014 = vmax.f32 %v3012, %v3013
        %v3015 = vmax.f32 %v2767, %v2775
        %v3016 = vmax.f32 %v3015, %v2783
        %v3017 = vmax.f32 %v3016, %v2791
        %v3018 = vmax.f32 %v3017, %v2799
        %v3019 = vmax.f32 %v3018, %v2807
        %v3020 = vmax.f32 %v3019, %v2815
        %v3021 = vmax.f32 %v3020, %v2823
        %v3022 = vmax.f32 %v3021, %v2831
        %v3023 = vmax.f32 %v3022, %v2839
        %v3024 = vmax.f32 %v3023, %v2847
        %v3025 = vmax.f32 %v3024, %v2855
        %v3026 = vmax.f32 %v3025, %v2863
        %v3027 = vmax.f32 %v3026, %v2871
        %v3028 = vmax.f32 %v3027, %v2879
        %v3029 = vmax.f32 %v3028, %v2887
        %v3030 = vrot.slane %v3029, 4
        %v3031 = vmax.f32 %v3029, %v3030
        %v3032 = vrot.slane %v3031, 2
        %v3033 = vmax.f32 %v3031, %v3032
        %v3034 = vrot.slane %v3033, 1
        %v3035 = vmax.f32 %v3033, %v3034
        %v3036 = vmax.f32 %v2768, %v2776
        %v3037 = vmax.f32 %v3036, %v2784
        %v3038 = vmax.f32 %v3037, %v2792
        %v3039 = vmax.f32 %v3038, %v2800
        %v3040 = vmax.f32 %v3039, %v2808
        %v3041 = vmax.f32 %v3040, %v2816
        %v3042 = vmax.f32 %v3041, %v2824
        %v3043 = vmax.f32 %v3042, %v2832
        %v3044 = vmax.f32 %v3043, %v2840
        %v3045 = vmax.f32 %v3044, %v2848
        %v3046 = vmax.f32 %v3045, %v2856
        %v3047 = vmax.f32 %v3046, %v2864
        %v3048 = vmax.f32 %v3047, %v2872
        %v3049 = vmax.f32 %v3048, %v2880
        %v3050 = vmax.f32 %v3049, %v2888
        %v3051 = vrot.slane %v3050, 4
        %v3052 = vmax.f32 %v3050, %v3051
        %v3053 = vrot.slane %v3052, 2
        %v3054 = vmax.f32 %v3052, %v3053
        %v3055 = vrot.slane %v3054, 1
        %v3056 = vmax.f32 %v3054, %v3055
        %s3057 = scalar_lea.vmem [#allocation2], 1
        %v3058 = vld [vmem:[%s3057] ss:$2 sm:$0xff]
        %v3067 = vcombine.low %v2909, %v2930
        %v3068 = vcombine.low %v2951, %v2972
        %v3069 = vcombine.low %v2993, %v3014
        %v3070 = vcombine.low %v3035, %v3056
        %v3072 = vunpack.c.l.s4 1966171168
        %v3073 = vunpack.c.0.s8 %v3072
        %v3074 = vlaneseq
        %v3075 = vshrl.u32 %v3074, 7
        %v3076 = vsub.s32 %v3073, %v3075
        %v3077 = vrot.slane %v3067, %v3076
        %v3079 = vunpack.c.l.s4 1966171168
        %v3080 = vunpack.c.0.s8 %v3079
        %v3081 = vlaneseq
        %v3082 = vshrl.u32 %v3081, 7
        %v3083 = vsub.s32 %v3080, %v3082
        %v3084 = vrot.slane %v3068, %v3083
        %v3086 = vunpack.c.l.s4 1966171168
        %v3087 = vunpack.c.0.s8 %v3086
        %v3088 = vlaneseq
        %v3089 = vshrl.u32 %v3088, 7
        %v3090 = vsub.s32 %v3087, %v3089
        %v3091 = vrot.slane %v3069, %v3090
        %v3093 = vunpack.c.l.s4 1966171168
        %v3094 = vunpack.c.0.s8 %v3093
        %v3095 = vlaneseq
        %v3096 = vshrl.u32 %v3095, 7
        %v3097 = vsub.s32 %v3094, %v3096
        %v3098 = vrot.slane %v3070, %v3097
        %v3099 = vcombine.low %v3077, %v3084
        %v3100 = vcombine.low %v3091, %v3098
        %v3102 = vunpack.c.l.s4 1966171168
        %v3103 = vunpack.c.0.s8 %v3102
        %v3104 = vlaneseq
        %v3105 = vshrl.u32 %v3104, 7
        %v3106 = vsub.s32 %v3103, %v3105
        %v3107 = vrot.slane %v3099, %v3106
        %v3109 = vunpack.c.l.s4 1966171168
        %v3110 = vunpack.c.0.s8 %v3109
        %v3111 = vlaneseq
        %v3112 = vshrl.u32 %v3111, 7
        %v3113 = vsub.s32 %v3110, %v3112
        %v3114 = vrot.slane %v3100, %v3113
        %v3115 = vcombine.low %v3107, %v3114
        %v3117 = vmax.f32 %v3058, %v3115
        %3118 = vst [vmem:[%s3057] ss:$2 sm:$0xff] %v3117
        %p3119 = scmp.eq.s32.totalorder %s29, 1
        // Predicated region
        $region69: #{tpu_custom_call.1} parent=47 // pred_check
          %p3120 = pneg %p3119
        $region70: #{tpu_custom_call.1} parent=47 // pred_check_branch
          %3122 = sbr.rel (%p3120) target = $region72
        $region71: #{tpu_custom_call.1} parent=47 // pred_region
          %v3123 = vld [vmem:[#allocation2] sm:$0xff]
          %v3124 = vld [vmem:[#allocation2 + $0x8] sm:$0xff]
          %3125 = vst [vmem:[#allocation11] sm:$0xff] %v3123
          %3126 = vst [vmem:[#allocation11 + $0x8] sm:$0xff] %v3124
        $region72: #{tpu_custom_call.1} parent=47 // pred_fallthru
          _
        // Predicated region
        $region73: #{tpu_custom_call.1} parent=47 // pred_check
          %p3127 = pneg %p208
        $region74: #{tpu_custom_call.1} parent=47 // pred_check_branch
          %3129 = sbr.rel (%p3127) target = $region76
        $region75: #{tpu_custom_call.1} parent=47 // pred_region
          %s3131 = ssub.s32 256, 256
          %3132 = vsyncadd [#allocation5], %s3131
          %s3133 = smul.addr %s28, 8
          %s3134 = smul.addr %s3133, 32
          %s3135 = scalar_lea.hbm %s7, %s3134
          %s3137 = sshll.u32 [#allocation11], 4
          %s3138 = int_to_ptr.vmem [resolvable:$true] %s3137
          %3140 = dma.vmem_to_hbm [thread:$0]  %s3138, 256, %s3135, [#allocation5]
        $region76: #{tpu_custom_call.1} parent=47 // pred_fallthru
          _
        // Predicated region
        $region77: #{tpu_custom_call.1} parent=47 // pred_check
          %p3141 = pneg %p208
        $region78: #{tpu_custom_call.1} parent=47 // pred_check_branch
          %3143 = sbr.rel (%p3141) target = $region80
        $region79: #{tpu_custom_call.1} parent=47 // pred_region
          %3144 = dma.done [#allocation5], 256
        $region80: #{tpu_custom_call.1} parent=47 // pred_fallthru
          _
      $region48: #{tpu_custom_call.1} parent=5 // pred_fallthru
        _
      %p3145 = scmp.le.s32.totalorder 2, %s19
      // Predicated region
      $region81: #{tpu_custom_call.1} parent=5 // pred_check
        %p3146 = pneg %p3145
      $region82: #{tpu_custom_call.1} parent=5 // pred_check_branch
        %3148 = sbr.rel (%p3146) target = $region84
      $region83: #{tpu_custom_call.1} parent=5 // pred_region
        %s3149 = ssub.s32 %s19, 2
      $region84: #{tpu_custom_call.1} parent=5 // pred_fallthru
        _
    $region6: #{tpu_custom_call.1} parent=1 // loop_footer
      %s23 = sadd.s32 1, %s19
    $region7: #{tpu_custom_call.1} parent=1 // loop_footer_branch
      %18 = sbr.rel target = $region3
    $region8: #{tpu_custom_call.1} parent=1 // loop_exit
      _
    %3150 = vsyncpa [#allocation4], 1
    %s3151 = scalar_lea.sflag [#allocation4], 1
    %3152 = vsyncpa %s3151, 1
    %3153 = vsyncpa [#allocation7], 1
    %3154 = vsyncpa [#allocation10], 1
    %3155 = vsyncpa [#allocation5], 1
    %s3156 = scalar_lea.sflag [#allocation5], 1
    %3157 = vsyncpa %s3156, 1

</llo_original>
